<compile_context>
chip_gen: v5e
topology: v5e:2x2
jax: 0.10.0
libtpu: 0.0.40
codegen_flags: <defaults>
</compile_context>

<pallas_src>
import math
import functools

import jax
import jax.numpy as jnp
from jax import lax
from jax.experimental import pallas as pl
from jax.experimental.pallas import tpu as pltpu

# ---------------- config (small, synthetic) ----------------
B = 2            # batch
S = 8            # decoder sequence length
SE = 8           # encoder sequence length
D = 32           # d_model
H = 4            # num_att_heads
DH = D // H      # d_head
FF = 64          # feed_forward_dim
L = 2            # num decoder layers
V = 128          # vocab_size (lane-dense output)
NUM_BUCKETS = 32
PAD_ID = 0
EPS = 1e-6
DTYPE = jnp.float32
FP16_MIN = float(jnp.finfo(jnp.float16).min)   # -65504.0, matches the PyTorch helper


# ---------------- fused decoder kernel ----------------
def _decoder_kernel(
    # inputs
    x_ref,            # (B, S, D)     decoder input embeddings (read at layer 0)
    enc_ref,          # (B, SE, D)    encoder outputs
    smask_ref,        # (B, 1, S, S)  causal+padding additive mask
    cmask_ref,        # (B, 1, 1, SE) encoder padding additive mask
    sbias_ref,        # (1, H, S, S)  per-layer relative-position bias
    ln1_ref, ln2_ref, ln3_ref,        # (1, 1, D) T5LayerNorm weights
    wqs_ref, wks_ref, wvs_ref,        # (1, H, D, DH) self-attn projections
    wos_ref,                          # (1, H, DH, D) self-attn output proj
    wqc_ref, wkc_ref, wvc_ref,        # (1, H, D, DH) cross-attn projections
    woc_ref,                          # (1, H, DH, D) cross-attn output proj
    w1_ref,           # (1, D, FF)
    w2_ref,           # (1, FF, D)
    fln_ref,          # (1, D)  final T5LayerNorm weight
    fcw_ref,          # (D, V)  vocab projection weight (pre-transposed)
    fcb_ref,          # (1, V)  vocab projection bias
    # outputs
    logits_ref,       # (B, S, V)
    sprob_ref,        # (B, H, S, S)
    cprob_ref,        # (B, H, S, SE)
    # scratch
    x_sc,             # VMEM (B, S, D) f32 — residual stream carried across layers
):
    l = pl.program_id(0)
    n_layers = pl.num_programs(0)

    @pl.when(l == 0)
    def _():
        x_sc[...] = x_ref[...].astype(jnp.float32)

    def rms_norm(x, w):
        # T5LayerNorm: no mean subtraction, f32 variance, scale by weight.
        var = jnp.mean(x * x, axis=-1, keepdims=True)
        return x * lax.rsqrt(var + EPS) * w

    def mha(xq, xkv, wq3, wk3, wv3, wo3, bias):
        # xq: (Sq, D), xkv: (Sk, D); wq3/wk3/wv3: (H, D, DH); wo3: (H, DH, D)
        # bias: additive, broadcastable to (H, Sq, Sk).
        hq = jnp.broadcast_to(xq[None], (H,) + xq.shape)
        hkv = hq if xkv is xq else jnp.broadcast_to(xkv[None], (H,) + xkv.shape)
        q = jnp.einsum("hsd,hde->hse", hq, wq3, preferred_element_type=jnp.float32)
        k = jnp.einsum("hsd,hde->hse", hkv, wk3, preferred_element_type=jnp.float32)
        v = jnp.einsum("hsd,hde->hse", hkv, wv3, preferred_element_type=jnp.float32)
        # NOTE: reference T5Attention applies NO 1/sqrt(d_head) scaling.
        s = jnp.einsum("hqe,hke->hqk", q, k, preferred_element_type=jnp.float32)
        s = s + bias
        s = s - jnp.max(s, axis=-1, keepdims=True)
        e = jnp.exp(s)
        p = e / jnp.sum(e, axis=-1, keepdims=True)      # softmax over keys (exact)
        ctx = jnp.einsum("hqk,hke->hqe", p, v, preferred_element_type=jnp.float32)
        # output projection, accumulated over heads (no concat / relayout)
        out = jnp.einsum("hqe,heo->hqo", ctx, wo3,
                         preferred_element_type=jnp.float32).sum(axis=0)
        return out, p

    # Hoist per-layer tiles out of the batch loop (loaded once per grid step).
    ln1 = ln1_ref[0]
    ln2 = ln2_ref[0]
    ln3 = ln3_ref[0]
    wqs, wks, wvs, wos = wqs_ref[0], wks_ref[0], wvs_ref[0], wos_ref[0]
    wqc, wkc, wvc, woc = wqc_ref[0], wkc_ref[0], wvc_ref[0], woc_ref[0]
    w1, w2 = w1_ref[0], w2_ref[0]
    sbias = sbias_ref[0]                                 # (H, S, S), shared across batch

    # Static unroll over batch (B=2): only MAJOR-dim ref indexing, no lane slicing.
    for b in range(B):
        x = x_sc[b]                                      # (S, D) f32 residual stream

        # ---- self-attention (pre-norm, causal + pad mask, relative bias) ----
        xn = rms_norm(x, ln1)
        self_bias = sbias + smask_ref[b, 0][None]        # (H, S, S)
        attn, p_self = mha(xn, xn, wqs, wks, wvs, wos, self_bias)
        sprob_ref[b] = p_self.astype(sprob_ref.dtype)
        x = x + attn

        # ---- cross-attention (pre-norm on query; raw encoder K/V; mask only) ----
        xn = rms_norm(x, ln2)
        enc = enc_ref[b].astype(jnp.float32)             # (SE, D)
        cross_bias = cmask_ref[b, 0][None]               # (1, 1, SE)
        cross, p_cross = mha(xn, enc, wqc, wkc, wvc, woc, cross_bias)
        cprob_ref[b] = p_cross.astype(cprob_ref.dtype)
        x = x + cross

        # ---- feed-forward (ReLU) ----
        xn = rms_norm(x, ln3)
        hid = jnp.maximum(jnp.dot(xn, w1, preferred_element_type=jnp.float32), 0.0)
        x = x + jnp.dot(hid, w2, preferred_element_type=jnp.float32)

        x_sc[b] = x

    # ---- final T5LayerNorm + vocab projection (only after the last layer) ----
    @pl.when(l == n_layers - 1)
    def _():
        fln = fln_ref[...]
        fcw = fcw_ref[...]
        fcb = fcb_ref[...]
        for b in range(B):
            xf = rms_norm(x_sc[b], fln)
            logits_ref[b] = (
                jnp.dot(xf, fcw, preferred_element_type=jnp.float32)
                + fcb).astype(logits_ref.dtype)


# ---------------- mask / relative-bias glue (plain JAX, matches PyTorch) ----------------
def get_extended_attention_mask(attention_mask, autoregressive=False):
    # attention_mask: (B, n) int, 1 = attend, 0 = pad.  Values are 0 / -65504.0
    # exactly like the torch float16 helper (computed in f32 here).
    ext = attention_mask[:, None, None, :]                          # (B,1,1,n)
    if autoregressive:
        n = attention_mask.shape[1]
        lower = (jnp.triu(jnp.ones((n, n), jnp.int32), k=1) < 1).astype(jnp.int32)
        ext = ((ext + lower[None, None]) > 1).astype(jnp.int32)     # (B,1,n,n)
    ext = ext.astype(jnp.float32)
    return (1.0 - ext) * FP16_MIN


def _relative_position_bucket(relative_position, bidirectional=True,
                              num_buckets=32, max_distance=128):
    relative_buckets = jnp.zeros_like(relative_position)
    if bidirectional:
        num_buckets //= 2
        relative_buckets += (relative_position > 0).astype(jnp.int32) * num_buckets
        relative_position = jnp.abs(relative_position)
    else:
        relative_position = -jnp.minimum(relative_position,
                                         jnp.zeros_like(relative_position))
    max_exact = num_buckets // 2
    is_small = relative_position < max_exact
    rel_f = relative_position.astype(jnp.float32)
    rel_if_large = max_exact + (
        jnp.log(rel_f / max_exact) / math.log(max_distance / max_exact)
        * (num_buckets - max_exact)).astype(jnp.int32)
    rel_if_large = jnp.minimum(rel_if_large, num_buckets - 1)
    return relative_buckets + jnp.where(is_small, relative_position, rel_if_large)


def compute_position_bias(rel_emb, q_len, k_len, bidirectional):
    # rel_emb: (NUM_BUCKETS, H) -> (1, H, q_len, k_len)
    ctx = jnp.arange(q_len, dtype=jnp.int32)[:, None]
    mem = jnp.arange(k_len, dtype=jnp.int32)[None, :]
    buckets = _relative_position_bucket(mem - ctx, bidirectional=bidirectional,
                                        num_buckets=NUM_BUCKETS)
    values = rel_emb[buckets]                           # (q, k, H)
    return jnp.transpose(values, (2, 0, 1))[None]


# ---------------- full decoder forward (Pallas) ----------------
def t5_decoder_forward(params, input_ids, enc_outputs, enc_attention_mask):
    attn_mask = (input_ids != PAD_ID).astype(jnp.int32)
    smask = get_extended_attention_mask(attn_mask, autoregressive=True)       # (B,1,S,S)
    # The PyTorch decoder forwards enc_attention_mask straight into cross-attention;
    # the intended usage (and the only broadcast-valid one) is the extended form.
    cmask = get_extended_attention_mask(enc_attention_mask, autoregressive=False)  # (B,1,1,SE)

    # TODO(synk): embedding gather + bucket math kept as plain-JAX setup glue.
    x = params["emb"][input_ids].astype(DTYPE)                                # (B,S,D)

    sbias = jnp.stack([
        compute_position_bias(params["rel_emb"][l], S, S, bidirectional=False)[0]
        for l in range(L)]).astype(jnp.float32)                               # (L,H,S,S)

    def qkv3(w):   # (L, D, D) stored as (in, out) -> (L, H, D, DH)
        return w.reshape(L, D, H, DH).transpose(0, 2, 1, 3)

    def out3(w):   # (L, D, D) stored as (in, out), rows grouped by head -> (L, H, DH, D)
        return w.reshape(L, H, DH, D)

    args = (
        x, enc_outputs.astype(DTYPE), smask, cmask, sbias,
        params["ln1"].reshape(L, 1, D), params["ln2"].reshape(L, 1, D),
        params["ln3"].reshape(L, 1, D),
        qkv3(params["wq_s"]), qkv3(params["wk_s"]), qkv3(params["wv_s"]),
        out3(params["wo_s"]),
        qkv3(params["wq_c"]), qkv3(params["wk_c"]), qkv3(params["wv_c"]),
        out3(params["wo_c"]),
        params["w1"], params["w2"],
        params["fln"].reshape(1, D), params["fc_w"], params["fc_b"].reshape(1, V),
    )

    in_specs = [
        pl.BlockSpec((B, S, D), lambda l: (0, 0, 0)),                # x (fetched once)
        pl.BlockSpec((B, SE, D), lambda l: (0, 0, 0)),               # enc_outputs
        pl.BlockSpec((B, 1, S, S), lambda l: (0, 0, 0, 0)),          # self mask
        pl.BlockSpec((B, 1, 1, SE), lambda l: (0, 0, 0, 0)),         # cross mask
        pl.BlockSpec((1, H, S, S), lambda l: (l, 0, 0, 0)),          # self rel bias
        pl.BlockSpec((1, 1, D), lambda l: (l, 0, 0)),                # ln1
        pl.BlockSpec((1, 1, D), lambda l: (l, 0, 0)),                # ln2
        pl.BlockSpec((1, 1, D), lambda l: (l, 0, 0)),                # ln3
        pl.BlockSpec((1, H, D, DH), lambda l: (l, 0, 0, 0)),         # wq self
        pl.BlockSpec((1, H, D, DH), lambda l: (l, 0, 0, 0)),         # wk self
        pl.BlockSpec((1, H, D, DH), lambda l: (l, 0, 0, 0)),         # wv self
        pl.BlockSpec((1, H, DH, D), lambda l: (l, 0, 0, 0)),         # wo self
        pl.BlockSpec((1, H, D, DH), lambda l: (l, 0, 0, 0)),         # wq cross
        pl.BlockSpec((1, H, D, DH), lambda l: (l, 0, 0, 0)),         # wk cross
        pl.BlockSpec((1, H, D, DH), lambda l: (l, 0, 0, 0)),         # wv cross
        pl.BlockSpec((1, H, DH, D), lambda l: (l, 0, 0, 0)),         # wo cross
        pl.BlockSpec((1, D, FF), lambda l: (l, 0, 0)),               # w1
        pl.BlockSpec((1, FF, D), lambda l: (l, 0, 0)),               # w2
        pl.BlockSpec((1, D), lambda l: (0, 0)),                      # final LN weight
        pl.BlockSpec((D, V), lambda l: (0, 0)),                      # fc weight
        pl.BlockSpec((1, V), lambda l: (0, 0)),                      # fc bias
    ]
    out_specs = [
        pl.BlockSpec((B, S, V), lambda l: (0, 0, 0)),                # logits (resident)
        pl.BlockSpec((B, H, S, S), lambda l: (l, 0, 0, 0)),          # self probs
        pl.BlockSpec((B, H, S, SE), lambda l: (l, 0, 0, 0)),         # cross probs
    ]
    out_shape = (
        jax.ShapeDtypeStruct((B, S, V), DTYPE),
        jax.ShapeDtypeStruct((L * B, H, S, S), jnp.float32),
        jax.ShapeDtypeStruct((L * B, H, S, SE), jnp.float32),
    )

    logits, sprob, cprob = pl.pallas_call(
        _decoder_kernel,
        out_shape=out_shape,
        grid_spec=pltpu.PrefetchScalarGridSpec(
            num_scalar_prefetch=0,
            grid=(L,),
            in_specs=in_specs,
            out_specs=out_specs,
            scratch_shapes=[pltpu.VMEM((B, S, D), jnp.float32)],
        ),
        compiler_params=pltpu.CompilerParams(
            dimension_semantics=("arbitrary",)),
    )(*args)

    sprob = sprob.reshape(L, B, H, S, S)
    cprob = cprob.reshape(L, B, H, S, SE)
    return logits, [sprob[l] for l in range(L)], [cprob[l] for l in range(L)]


# ---------------- pure-JAX reference (mirrors the PyTorch module) ----------------
def reference(params, input_ids, enc_outputs, enc_attention_mask):
    attn_mask = (input_ids != PAD_ID).astype(jnp.int32)
    smask = get_extended_attention_mask(attn_mask, autoregressive=True)
    cmask = get_extended_attention_mask(enc_attention_mask, autoregressive=False)

    def rms(x, w):
        var = jnp.mean(x.astype(jnp.float32) ** 2, -1, keepdims=True)
        return w * (x * lax.rsqrt(var + EPS))

    def attn(xq, xkv, wq, wk, wv, wo, bias):
        bsz, qlen, klen = xq.shape[0], xq.shape[1], xkv.shape[1]
        q = (xq @ wq).reshape(bsz, qlen, H, DH).transpose(0, 2, 1, 3)
        k = (xkv @ wk).reshape(bsz, klen, H, DH).transpose(0, 2, 1, 3)
        v = (xkv @ wv).reshape(bsz, klen, H, DH).transpose(0, 2, 1, 3)
        scores = jnp.einsum("bhqd,bhkd->bhqk", q, k) + bias
        p = jax.nn.softmax(scores, axis=-1)
        ctx = jnp.einsum("bhqk,bhkd->bhqd", p, v)
        ctx = ctx.transpose(0, 2, 1, 3).reshape(bsz, qlen, D)
        return ctx @ wo, p

    x = params["emb"][input_ids].astype(DTYPE)
    sprobs, cprobs = [], []
    enc = enc_outputs.astype(DTYPE)
    for l in range(L):
        pos_bias = compute_position_bias(params["rel_emb"][l], S, S,
                                         bidirectional=False)
        xn = rms(x, params["ln1"][l])
        y, p = attn(xn, xn, params["wq_s"][l], params["wk_s"][l],
                    params["wv_s"][l], params["wo_s"][l], pos_bias + smask)
        sprobs.append(p)
        x = x + y
        xn = rms(x, params["ln2"][l])
        y, p = attn(xn, enc, params["wq_c"][l], params["wk_c"][l],
                    params["wv_c"][l], params["wo_c"][l], cmask)
        cprobs.append(p)
        x = x + y
        xn = rms(x, params["ln3"][l])
        x = x + jnp.maximum(xn @ params["w1"][l], 0.0) @ params["w2"][l]
    x = rms(x, params["fln"])
    logits = x @ params["fc_w"] + params["fc_b"]
    return logits, sprobs, cprobs


# ---------------- main ----------------
if __name__ == "__main__":
    key = jax.random.PRNGKey(0)
    ks = jax.random.split(key, 20)

    # Linear weights are stored pre-transposed as (in, out), so x @ W_t == x @ W.T.
    params = {
        "emb": jax.random.normal(ks[0], (V, D), DTYPE),
        "ln1": 1.0 + 0.1 * jax.random.normal(ks[1], (L, D), DTYPE),
        "ln2": 1.0 + 0.1 * jax.random.normal(ks[2], (L, D), DTYPE),
        "ln3": 1.0 + 0.1 * jax.random.normal(ks[3], (L, D), DTYPE),
        "wq_s": 0.05 * jax.random.normal(ks[4], (L, D, D), DTYPE),
        "wk_s": 0.05 * jax.random.normal(ks[5], (L, D, D), DTYPE),
        "wv_s": 0.05 * jax.random.normal(ks[6], (L, D, D), DTYPE),
        "wo_s": 0.05 * jax.random.normal(ks[7], (L, D, D), DTYPE),
        "wq_c": 0.05 * jax.random.normal(ks[8], (L, D, D), DTYPE),
        "wk_c": 0.05 * jax.random.normal(ks[9], (L, D, D), DTYPE),
        "wv_c": 0.05 * jax.random.normal(ks[10], (L, D, D), DTYPE),
        "wo_c": 0.05 * jax.random.normal(ks[11], (L, D, D), DTYPE),
        "w1": 0.05 * jax.random.normal(ks[12], (L, D, FF), DTYPE),
        "w2": 0.05 * jax.random.normal(ks[13], (L, FF, D), DTYPE),
        "rel_emb": 0.1 * jax.random.normal(ks[14], (L, NUM_BUCKETS, H), DTYPE),
        "fln": 1.0 + 0.1 * jax.random.normal(ks[15], (D,), DTYPE),
        "fc_w": 0.05 * jax.random.normal(ks[16], (D, V), DTYPE),
        "fc_b": 0.05 * jax.random.normal(ks[17], (V,), DTYPE),
    }

    input_ids = jax.random.randint(ks[18], (B, S), 1, V)
    input_ids = input_ids.at[1, -2:].set(PAD_ID)              # pad tail of sequence 1
    enc_outputs = jax.random.normal(ks[19], (B, SE, D), DTYPE)
    enc_attention_mask = jnp.ones((B, SE), jnp.int32).at[1, -2:].set(0)

    run = jax.jit(functools.partial(t5_decoder_forward, params))
    logits, sprobs, cprobs = run(input_ids, enc_outputs, enc_attention_mask)
    jax.block_until_ready((logits, sprobs, cprobs))

    ref_logits, ref_sprobs, ref_cprobs = reference(params, input_ids, enc_outputs,
                                                   enc_attention_mask)
    assert jnp.allclose(logits, ref_logits, atol=1e-3, rtol=1e-3), (
        "logits mismatch", float(jnp.max(jnp.abs(logits - ref_logits))))
    for l in range(L):
        assert jnp.allclose(sprobs[l], ref_sprobs[l], atol=1e-4, rtol=1e-3), (
            "self prob mismatch", l)
        assert jnp.allclose(cprobs[l], ref_cprobs[l], atol=1e-4, rtol=1e-3), (
            "cross prob mismatch", l)

    print("KERNEL_OK")
</pallas_src>

<mosaic_0001>
module attributes {stable_mosaic.version = 11 : i64} {
  func.func @_decoder_kernel(%arg0: i32, %arg1: memref<2x8x32xf32, #tpu.memory_space<vmem>>, %arg2: memref<2x8x32xf32, #tpu.memory_space<vmem>>, %arg3: memref<2x1x8x8xf32, #tpu.memory_space<vmem>>, %arg4: memref<2x1x1x8xf32, #tpu.memory_space<vmem>>, %arg5: memref<1x4x8x8xf32, #tpu.memory_space<vmem>>, %arg6: memref<1x1x32xf32, #tpu.memory_space<vmem>>, %arg7: memref<1x1x32xf32, #tpu.memory_space<vmem>>, %arg8: memref<1x1x32xf32, #tpu.memory_space<vmem>>, %arg9: memref<1x4x32x8xf32, #tpu.memory_space<vmem>>, %arg10: memref<1x4x32x8xf32, #tpu.memory_space<vmem>>, %arg11: memref<1x4x32x8xf32, #tpu.memory_space<vmem>>, %arg12: memref<1x4x8x32xf32, #tpu.memory_space<vmem>>, %arg13: memref<1x4x32x8xf32, #tpu.memory_space<vmem>>, %arg14: memref<1x4x32x8xf32, #tpu.memory_space<vmem>>, %arg15: memref<1x4x32x8xf32, #tpu.memory_space<vmem>>, %arg16: memref<1x4x8x32xf32, #tpu.memory_space<vmem>>, %arg17: memref<1x32x64xf32, #tpu.memory_space<vmem>>, %arg18: memref<1x64x32xf32, #tpu.memory_space<vmem>>, %arg19: memref<1x32xf32, #tpu.memory_space<vmem>>, %arg20: memref<32x128xf32, #tpu.memory_space<vmem>>, %arg21: memref<1x128xf32, #tpu.memory_space<vmem>>, %arg22: memref<2x8x128xf32, #tpu.memory_space<vmem>>, %arg23: memref<2x4x8x8xf32, #tpu.memory_space<vmem>>, %arg24: memref<2x4x8x8xf32, #tpu.memory_space<vmem>>, %arg25: memref<2x8x32xf32, #tpu.memory_space<vmem>>) attributes {dimension_semantics = [#tpu.dimension_semantics<arbitrary>], iteration_bounds = array<i64: 2>, scalar_prefetch = 0 : i64, scratch_operands = 1 : i64, tpu.core_type = #tpu.core_type<tc>, window_params = [{pipeline_mode = #tpu.pipeline_mode<synchronous>, transform_indices = @transform_0, window_bounds = array<i64: 2, 8, 32>}, {pipeline_mode = #tpu.pipeline_mode<synchronous>, transform_indices = @transform_1, window_bounds = array<i64: 2, 8, 32>}, {pipeline_mode = #tpu.pipeline_mode<synchronous>, transform_indices = @transform_2, window_bounds = array<i64: 2, 1, 8, 8>}, {pipeline_mode = #tpu.pipeline_mode<synchronous>, transform_indices = @transform_3, window_bounds = array<i64: 2, 1, 1, 8>}, {transform_indices = @transform_4, window_bounds = array<i64: 1, 4, 8, 8>}, {transform_indices = @transform_5, window_bounds = array<i64: 1, 1, 32>}, {transform_indices = @transform_6, window_bounds = array<i64: 1, 1, 32>}, {transform_indices = @transform_7, window_bounds = array<i64: 1, 1, 32>}, {transform_indices = @transform_8, window_bounds = array<i64: 1, 4, 32, 8>}, {transform_indices = @transform_9, window_bounds = array<i64: 1, 4, 32, 8>}, {transform_indices = @transform_10, window_bounds = array<i64: 1, 4, 32, 8>}, {transform_indices = @transform_11, window_bounds = array<i64: 1, 4, 8, 32>}, {transform_indices = @transform_12, window_bounds = array<i64: 1, 4, 32, 8>}, {transform_indices = @transform_13, window_bounds = array<i64: 1, 4, 32, 8>}, {transform_indices = @transform_14, window_bounds = array<i64: 1, 4, 32, 8>}, {transform_indices = @transform_15, window_bounds = array<i64: 1, 4, 8, 32>}, {transform_indices = @transform_16, window_bounds = array<i64: 1, 32, 64>}, {transform_indices = @transform_17, window_bounds = array<i64: 1, 64, 32>}, {pipeline_mode = #tpu.pipeline_mode<synchronous>, transform_indices = @transform_18, window_bounds = array<i64: 1, 32>}, {pipeline_mode = #tpu.pipeline_mode<synchronous>, transform_indices = @transform_19, window_bounds = array<i64: 32, 128>}, {pipeline_mode = #tpu.pipeline_mode<synchronous>, transform_indices = @transform_20, window_bounds = array<i64: 1, 128>}, {pipeline_mode = #tpu.pipeline_mode<synchronous>, transform_indices = @transform_21, window_bounds = array<i64: 2, 8, 128>}, {transform_indices = @transform_22, window_bounds = array<i64: 2, 4, 8, 8>}, {transform_indices = @transform_23, window_bounds = array<i64: 2, 4, 8, 8>}]} {
    %c0_i32 = arith.constant 0 : i32
    %0 = arith.cmpi eq, %arg0, %c0_i32 : i32
    %1 = arith.extui %0 : i1 to i32
    %c0_i32_0 = arith.constant 0 : i32
    %2 = arith.cmpi ne, %1, %c0_i32_0 : i32
    scf.if %2 {
      %c0_160 = arith.constant 0 : index
      %c0_161 = arith.constant 0 : index
      %c0_162 = arith.constant 0 : index
      %250 = vector.load %arg1[%c0_160, %c0_161, %c0_162] : memref<2x8x32xf32, #tpu.memory_space<vmem>>, vector<2x8x32xf32>
      %c0_163 = arith.constant 0 : index
      %c0_164 = arith.constant 0 : index
      %c0_165 = arith.constant 0 : index
      %251 = vector.load %arg25[%c0_163, %c0_164, %c0_165] : memref<2x8x32xf32, #tpu.memory_space<vmem>>, vector<2x8x32xf32>
      tpu.vector_store %arg25[%c0_163, %c0_164, %c0_165], %250 {strides = array<i32>} : memref<2x8x32xf32, #tpu.memory_space<vmem>>, vector<2x8x32xf32>,
    } else {
    }
    %c0 = arith.constant 0 : index
    %c0_1 = arith.constant 0 : index
    %c0_2 = arith.constant 0 : index
    %3 = vector.load %arg6[%c0, %c0_1, %c0_2] : memref<1x1x32xf32, #tpu.memory_space<vmem>>, vector<1x1x32xf32>
    %4 = vector.shape_cast %3 : vector<1x1x32xf32> to vector<1x32xf32>
    %c0_3 = arith.constant 0 : index
    %c0_4 = arith.constant 0 : index
    %c0_5 = arith.constant 0 : index
    %5 = vector.load %arg7[%c0_3, %c0_4, %c0_5] : memref<1x1x32xf32, #tpu.memory_space<vmem>>, vector<1x1x32xf32>
    %6 = vector.shape_cast %5 : vector<1x1x32xf32> to vector<1x32xf32>
    %c0_6 = arith.constant 0 : index
    %c0_7 = arith.constant 0 : index
    %c0_8 = arith.constant 0 : index
    %7 = vector.load %arg8[%c0_6, %c0_7, %c0_8] : memref<1x1x32xf32, #tpu.memory_space<vmem>>, vector<1x1x32xf32>
    %8 = vector.shape_cast %7 : vector<1x1x32xf32> to vector<1x32xf32>
    %c0_9 = arith.constant 0 : index
    %c0_10 = arith.constant 0 : index
    %c0_11 = arith.constant 0 : index
    %c0_12 = arith.constant 0 : index
    %9 = vector.load %arg9[%c0_9, %c0_10, %c0_11, %c0_12] : memref<1x4x32x8xf32, #tpu.memory_space<vmem>>, vector<1x4x32x8xf32>
    %10 = vector.shape_cast %9 : vector<1x4x32x8xf32> to vector<4x32x8xf32>
    %c0_13 = arith.constant 0 : index
    %c0_14 = arith.constant 0 : index
    %c0_15 = arith.constant 0 : index
    %c0_16 = arith.constant 0 : index
    %11 = vector.load %arg10[%c0_13, %c0_14, %c0_15, %c0_16] : memref<1x4x32x8xf32, #tpu.memory_space<vmem>>, vector<1x4x32x8xf32>
    %12 = vector.shape_cast %11 : vector<1x4x32x8xf32> to vector<4x32x8xf32>
    %c0_17 = arith.constant 0 : index
    %c0_18 = arith.constant 0 : index
    %c0_19 = arith.constant 0 : index
    %c0_20 = arith.constant 0 : index
    %13 = vector.load %arg11[%c0_17, %c0_18, %c0_19, %c0_20] : memref<1x4x32x8xf32, #tpu.memory_space<vmem>>, vector<1x4x32x8xf32>
    %14 = vector.shape_cast %13 : vector<1x4x32x8xf32> to vector<4x32x8xf32>
    %c0_21 = arith.constant 0 : index
    %c0_22 = arith.constant 0 : index
    %c0_23 = arith.constant 0 : index
    %c0_24 = arith.constant 0 : index
    %15 = vector.load %arg12[%c0_21, %c0_22, %c0_23, %c0_24] : memref<1x4x8x32xf32, #tpu.memory_space<vmem>>, vector<1x4x8x32xf32>
    %16 = vector.shape_cast %15 : vector<1x4x8x32xf32> to vector<4x8x32xf32>
    %c0_25 = arith.constant 0 : index
    %c0_26 = arith.constant 0 : index
    %c0_27 = arith.constant 0 : index
    %c0_28 = arith.constant 0 : index
    %17 = vector.load %arg13[%c0_25, %c0_26, %c0_27, %c0_28] : memref<1x4x32x8xf32, #tpu.memory_space<vmem>>, vector<1x4x32x8xf32>
    %18 = vector.shape_cast %17 : vector<1x4x32x8xf32> to vector<4x32x8xf32>
    %c0_29 = arith.constant 0 : index
    %c0_30 = arith.constant 0 : index
    %c0_31 = arith.constant 0 : index
    %c0_32 = arith.constant 0 : index
    %19 = vector.load %arg14[%c0_29, %c0_30, %c0_31, %c0_32] : memref<1x4x32x8xf32, #tpu.memory_space<vmem>>, vector<1x4x32x8xf32>
    %20 = vector.shape_cast %19 : vector<1x4x32x8xf32> to vector<4x32x8xf32>
    %c0_33 = arith.constant 0 : index
    %c0_34 = arith.constant 0 : index
    %c0_35 = arith.constant 0 : index
    %c0_36 = arith.constant 0 : index
    %21 = vector.load %arg15[%c0_33, %c0_34, %c0_35, %c0_36] : memref<1x4x32x8xf32, #tpu.memory_space<vmem>>, vector<1x4x32x8xf32>
    %22 = vector.shape_cast %21 : vector<1x4x32x8xf32> to vector<4x32x8xf32>
    %c0_37 = arith.constant 0 : index
    %c0_38 = arith.constant 0 : index
    %c0_39 = arith.constant 0 : index
    %c0_40 = arith.constant 0 : index
    %23 = vector.load %arg16[%c0_37, %c0_38, %c0_39, %c0_40] : memref<1x4x8x32xf32, #tpu.memory_space<vmem>>, vector<1x4x8x32xf32>
    %24 = vector.shape_cast %23 : vector<1x4x8x32xf32> to vector<4x8x32xf32>
    %c0_41 = arith.constant 0 : index
    %c0_42 = arith.constant 0 : index
    %c0_43 = arith.constant 0 : index
    %25 = vector.load %arg17[%c0_41, %c0_42, %c0_43] : memref<1x32x64xf32, #tpu.memory_space<vmem>>, vector<1x32x64xf32>
    %26 = vector.shape_cast %25 : vector<1x32x64xf32> to vector<32x64xf32>
    %c0_44 = arith.constant 0 : index
    %c0_45 = arith.constant 0 : index
    %c0_46 = arith.constant 0 : index
    %27 = vector.load %arg18[%c0_44, %c0_45, %c0_46] : memref<1x64x32xf32, #tpu.memory_space<vmem>>, vector<1x64x32xf32>
    %28 = vector.shape_cast %27 : vector<1x64x32xf32> to vector<64x32xf32>
    %c0_47 = arith.constant 0 : index
    %c0_48 = arith.constant 0 : index
    %c0_49 = arith.constant 0 : index
    %c0_50 = arith.constant 0 : index
    %29 = vector.load %arg5[%c0_47, %c0_48, %c0_49, %c0_50] : memref<1x4x8x8xf32, #tpu.memory_space<vmem>>, vector<1x4x8x8xf32>
    %30 = vector.shape_cast %29 : vector<1x4x8x8xf32> to vector<4x8x8xf32>
    %c0_51 = arith.constant 0 : index
    %c0_52 = arith.constant 0 : index
    %c0_53 = arith.constant 0 : index
    %31 = vector.load %arg25[%c0_51, %c0_52, %c0_53] : memref<2x8x32xf32, #tpu.memory_space<vmem>>, vector<1x8x32xf32>
    %32 = vector.shape_cast %31 : vector<1x8x32xf32> to vector<8x32xf32>
    %33 = arith.mulf %32, %32 : vector<8x32xf32>
    %cst = arith.constant dense<0.000000e+00> : vector<8xf32>
    %34 = vector.multi_reduction <add>, %33, %cst [1] : vector<8x32xf32> to vector<8xf32>
    %35 = vector.shape_cast %34 : vector<8xf32> to vector<8x1xf32>
    %cst_54 = arith.constant 3.200000e+01 : f32
    %36 = vector.broadcast %cst_54 : f32 to vector<8x1xf32>
    %37 = arith.divf %35, %36 : vector<8x1xf32>
    %cst_55 = arith.constant 9.99999997E-7 : f32
    %38 = vector.broadcast %cst_55 : f32 to vector<8x1xf32>
    %39 = arith.addf %37, %38 : vector<8x1xf32>
    %40 = math.rsqrt %39 : vector<8x1xf32>
    %41 = vector.broadcast %40 : vector<8x1xf32> to vector<8x32xf32>
    %42 = arith.mulf %32, %41 : vector<8x32xf32>
    %43 = vector.broadcast %4 : vector<1x32xf32> to vector<8x32xf32>
    %44 = arith.mulf %42, %43 : vector<8x32xf32>
    %c0_56 = arith.constant 0 : index
    %c0_57 = arith.constant 0 : index
    %c0_58 = arith.constant 0 : index
    %c0_59 = arith.constant 0 : index
    %45 = vector.load %arg3[%c0_56, %c0_57, %c0_58, %c0_59] : memref<2x1x8x8xf32, #tpu.memory_space<vmem>>, vector<1x1x8x8xf32>
    %46 = vector.shape_cast %45 : vector<1x1x8x8xf32> to vector<8x8xf32>
    %47 = vector.shape_cast %46 : vector<8x8xf32> to vector<1x8x8xf32>
    %48 = vector.broadcast %47 : vector<1x8x8xf32> to vector<4x8x8xf32>
    %49 = arith.addf %30, %48 : vector<4x8x8xf32>
    %50 = vector.shape_cast %44 : vector<8x32xf32> to vector<1x8x32xf32>
    %51 = vector.shape_cast %50 : vector<1x8x32xf32> to vector<1x8x32xf32>
    %52 = vector.broadcast %51 : vector<1x8x32xf32> to vector<4x8x32xf32>
    "tpu.trace_start"() <{level = 10 : i32, message = "hsd,hde->hse"}> : () -> ()
    %cst_60 = arith.constant dense<0.000000e+00> : vector<4x8x8xf32>
    %53 = tpu.matmul %52, %10, %cst_60 {dimension_numbers = #tpu.dot_dimension_numbers<[2], [1], [1], [2], [0, 0, 0, 1, 1, 2], [0], [0]>} : vector<4x8x32xf32>, vector<4x32x8xf32>, vector<4x8x8xf32> -> vector<4x8x8xf32>
    %cst_61 = arith.constant dense<0.000000e+00> : vector<4x8x8xf32>
    %54 = tpu.matmul %52, %12, %cst_61 {dimension_numbers = #tpu.dot_dimension_numbers<[2], [1], [1], [2], [0, 0, 0, 1, 1, 2], [0], [0]>} : vector<4x8x32xf32>, vector<4x32x8xf32>, vector<4x8x8xf32> -> vector<4x8x8xf32>
    %cst_62 = arith.constant dense<0.000000e+00> : vector<4x8x8xf32>
    %55 = tpu.matmul %52, %14, %cst_62 {dimension_numbers = #tpu.dot_dimension_numbers<[2], [1], [1], [2], [0, 0, 0, 1, 1, 2], [0], [0]>} : vector<4x8x32xf32>, vector<4x32x8xf32>, vector<4x8x8xf32> -> vector<4x8x8xf32>
    "tpu.trace_stop"() : () -> ()
    "tpu.trace_start"() <{level = 10 : i32, message = "hqe,hke->hqk"}> : () -> ()
    %cst_63 = arith.constant dense<0.000000e+00> : vector<4x8x8xf32>
    %56 = tpu.matmul %53, %54, %cst_63 {dimension_numbers = #tpu.dot_dimension_numbers<[2], [2], [1], [1], [0, 0, 0, 1, 1, 1], [0], [0]>} : vector<4x8x8xf32>, vector<4x8x8xf32>, vector<4x8x8xf32> -> vector<4x8x8xf32>
    "tpu.trace_stop"() : () -> ()
    %57 = arith.addf %56, %49 : vector<4x8x8xf32>
    %cst_64 = arith.constant dense<0xFF800000> : vector<4x8xf32>
    %58 = vector.multi_reduction <maximumf>, %57, %cst_64 [2] : vector<4x8x8xf32> to vector<4x8xf32>
    %59 = vector.shape_cast %58 : vector<4x8xf32> to vector<4x8x1xf32>
    %60 = vector.broadcast %59 : vector<4x8x1xf32> to vector<4x8x8xf32>
    %61 = arith.subf %57, %60 : vector<4x8x8xf32>
    %62 = math.exp %61 : vector<4x8x8xf32>
    %cst_65 = arith.constant dense<0.000000e+00> : vector<4x8xf32>
    %63 = vector.multi_reduction <add>, %62, %cst_65 [2] : vector<4x8x8xf32> to vector<4x8xf32>
    %64 = vector.shape_cast %63 : vector<4x8xf32> to vector<4x8x1xf32>
    %65 = vector.broadcast %64 : vector<4x8x1xf32> to vector<4x8x8xf32>
    %66 = arith.divf %62, %65 : vector<4x8x8xf32>
    "tpu.trace_start"() <{level = 10 : i32, message = "hqk,hke->hqe"}> : () -> ()
    %cst_66 = arith.constant dense<0.000000e+00> : vector<4x8x8xf32>
    %67 = tpu.matmul %66, %55, %cst_66 {dimension_numbers = #tpu.dot_dimension_numbers<[2], [1], [1], [2], [0, 0, 0, 1, 1, 2], [0], [0]>} : vector<4x8x8xf32>, vector<4x8x8xf32>, vector<4x8x8xf32> -> vector<4x8x8xf32>
    "tpu.trace_stop"() : () -> ()
    "tpu.trace_start"() <{level = 10 : i32, message = "hqe,heo->hqo"}> : () -> ()
    %cst_67 = arith.constant dense<0.000000e+00> : vector<4x8x32xf32>
    %68 = tpu.matmul %67, %16, %cst_67 {dimension_numbers = #tpu.dot_dimension_numbers<[2], [1], [1], [2], [0, 0, 0, 1, 1, 2], [0], [0]>} : vector<4x8x8xf32>, vector<4x8x32xf32>, vector<4x8x32xf32> -> vector<4x8x32xf32>
    "tpu.trace_stop"() : () -> ()
    %cst_68 = arith.constant dense<0.000000e+00> : vector<8x32xf32>
    %69 = vector.multi_reduction <add>, %68, %cst_68 [0] : vector<4x8x32xf32> to vector<8x32xf32>
    %c0_69 = arith.constant 0 : index
    %c0_70 = arith.constant 0 : index
    %c0_71 = arith.constant 0 : index
    %c0_72 = arith.constant 0 : index
    %70 = vector.load %arg23[%c0_69, %c0_70, %c0_71, %c0_72] : memref<2x4x8x8xf32, #tpu.memory_space<vmem>>, vector<1x4x8x8xf32>
    %71 = vector.shape_cast %70 : vector<1x4x8x8xf32> to vector<4x8x8xf32>
    %72 = vector.shape_cast %66 : vector<4x8x8xf32> to vector<1x4x8x8xf32>
    tpu.vector_store %arg23[%c0_69, %c0_70, %c0_71, %c0_72], %72 {strides = array<i32>} : memref<2x4x8x8xf32, #tpu.memory_space<vmem>>, vector<1x4x8x8xf32>,
    %73 = arith.addf %32, %69 : vector<8x32xf32>
    %74 = arith.mulf %73, %73 : vector<8x32xf32>
    %cst_73 = arith.constant dense<0.000000e+00> : vector<8xf32>
    %75 = vector.multi_reduction <add>, %74, %cst_73 [1] : vector<8x32xf32> to vector<8xf32>
    %76 = vector.shape_cast %75 : vector<8xf32> to vector<8x1xf32>
    %cst_74 = arith.constant 3.200000e+01 : f32
    %77 = vector.broadcast %cst_74 : f32 to vector<8x1xf32>
    %78 = arith.divf %76, %77 : vector<8x1xf32>
    %cst_75 = arith.constant 9.99999997E-7 : f32
    %79 = vector.broadcast %cst_75 : f32 to vector<8x1xf32>
    %80 = arith.addf %78, %79 : vector<8x1xf32>
    %81 = math.rsqrt %80 : vector<8x1xf32>
    %82 = vector.broadcast %81 : vector<8x1xf32> to vector<8x32xf32>
    %83 = arith.mulf %73, %82 : vector<8x32xf32>
    %84 = vector.broadcast %6 : vector<1x32xf32> to vector<8x32xf32>
    %85 = arith.mulf %83, %84 : vector<8x32xf32>
    %c0_76 = arith.constant 0 : index
    %c0_77 = arith.constant 0 : index
    %c0_78 = arith.constant 0 : index
    %86 = vector.load %arg2[%c0_76, %c0_77, %c0_78] : memref<2x8x32xf32, #tpu.memory_space<vmem>>, vector<1x8x32xf32>
    %87 = vector.shape_cast %86 : vector<1x8x32xf32> to vector<8x32xf32>
    %c0_79 = arith.constant 0 : index
    %c0_80 = arith.constant 0 : index
    %c0_81 = arith.constant 0 : index
    %c0_82 = arith.constant 0 : index
    %88 = vector.load %arg4[%c0_79, %c0_80, %c0_81, %c0_82] : memref<2x1x1x8xf32, #tpu.memory_space<vmem>>, vector<1x1x1x8xf32>
    %89 = vector.shape_cast %88 : vector<1x1x1x8xf32> to vector<1x8xf32>
    %90 = vector.shape_cast %89 : vector<1x8xf32> to vector<1x1x8xf32>
    %91 = vector.shape_cast %85 : vector<8x32xf32> to vector<1x8x32xf32>
    %92 = vector.shape_cast %91 : vector<1x8x32xf32> to vector<1x8x32xf32>
    %93 = vector.broadcast %92 : vector<1x8x32xf32> to vector<4x8x32xf32>
    %94 = vector.shape_cast %87 : vector<8x32xf32> to vector<1x8x32xf32>
    %95 = vector.shape_cast %94 : vector<1x8x32xf32> to vector<1x8x32xf32>
    %96 = vector.broadcast %95 : vector<1x8x32xf32> to vector<4x8x32xf32>
    "tpu.trace_start"() <{level = 10 : i32, message = "hsd,hde->hse"}> : () -> ()
    %cst_83 = arith.constant dense<0.000000e+00> : vector<4x8x8xf32>
    %97 = tpu.matmul %93, %18, %cst_83 {dimension_numbers = #tpu.dot_dimension_numbers<[2], [1], [1], [2], [0, 0, 0, 1, 1, 2], [0], [0]>} : vector<4x8x32xf32>, vector<4x32x8xf32>, vector<4x8x8xf32> -> vector<4x8x8xf32>
    %cst_84 = arith.constant dense<0.000000e+00> : vector<4x8x8xf32>
    %98 = tpu.matmul %96, %20, %cst_84 {dimension_numbers = #tpu.dot_dimension_numbers<[2], [1], [1], [2], [0, 0, 0, 1, 1, 2], [0], [0]>} : vector<4x8x32xf32>, vector<4x32x8xf32>, vector<4x8x8xf32> -> vector<4x8x8xf32>
    %cst_85 = arith.constant dense<0.000000e+00> : vector<4x8x8xf32>
    %99 = tpu.matmul %96, %22, %cst_85 {dimension_numbers = #tpu.dot_dimension_numbers<[2], [1], [1], [2], [0, 0, 0, 1, 1, 2], [0], [0]>} : vector<4x8x32xf32>, vector<4x32x8xf32>, vector<4x8x8xf32> -> vector<4x8x8xf32>
    "tpu.trace_stop"() : () -> ()
    "tpu.trace_start"() <{level = 10 : i32, message = "hqe,hke->hqk"}> : () -> ()
    %cst_86 = arith.constant dense<0.000000e+00> : vector<4x8x8xf32>
    %100 = tpu.matmul %97, %98, %cst_86 {dimension_numbers = #tpu.dot_dimension_numbers<[2], [2], [1], [1], [0, 0, 0, 1, 1, 1], [0], [0]>} : vector<4x8x8xf32>, vector<4x8x8xf32>, vector<4x8x8xf32> -> vector<4x8x8xf32>
    "tpu.trace_stop"() : () -> ()
    %101 = vector.broadcast %90 : vector<1x1x8xf32> to vector<4x8x8xf32>
    %102 = arith.addf %100, %101 : vector<4x8x8xf32>
    %cst_87 = arith.constant dense<0xFF800000> : vector<4x8xf32>
    %103 = vector.multi_reduction <maximumf>, %102, %cst_87 [2] : vector<4x8x8xf32> to vector<4x8xf32>
    %104 = vector.shape_cast %103 : vector<4x8xf32> to vector<4x8x1xf32>
    %105 = vector.broadcast %104 : vector<4x8x1xf32> to vector<4x8x8xf32>
    %106 = arith.subf %102, %105 : vector<4x8x8xf32>
    %107 = math.exp %106 : vector<4x8x8xf32>
    %cst_88 = arith.constant dense<0.000000e+00> : vector<4x8xf32>
    %108 = vector.multi_reduction <add>, %107, %cst_88 [2] : vector<4x8x8xf32> to vector<4x8xf32>
    %109 = vector.shape_cast %108 : vector<4x8xf32> to vector<4x8x1xf32>
    %110 = vector.broadcast %109 : vector<4x8x1xf32> to vector<4x8x8xf32>
    %111 = arith.divf %107, %110 : vector<4x8x8xf32>
    "tpu.trace_start"() <{level = 10 : i32, message = "hqk,hke->hqe"}> : () -> ()
    %cst_89 = arith.constant dense<0.000000e+00> : vector<4x8x8xf32>
    %112 = tpu.matmul %111, %99, %cst_89 {dimension_numbers = #tpu.dot_dimension_numbers<[2], [1], [1], [2], [0, 0, 0, 1, 1, 2], [0], [0]>} : vector<4x8x8xf32>, vector<4x8x8xf32>, vector<4x8x8xf32> -> vector<4x8x8xf32>
    "tpu.trace_stop"() : () -> ()
    "tpu.trace_start"() <{level = 10 : i32, message = "hqe,heo->hqo"}> : () -> ()
    %cst_90 = arith.constant dense<0.000000e+00> : vector<4x8x32xf32>
    %113 = tpu.matmul %112, %24, %cst_90 {dimension_numbers = #tpu.dot_dimension_numbers<[2], [1], [1], [2], [0, 0, 0, 1, 1, 2], [0], [0]>} : vector<4x8x8xf32>, vector<4x8x32xf32>, vector<4x8x32xf32> -> vector<4x8x32xf32>
    "tpu.trace_stop"() : () -> ()
    %cst_91 = arith.constant dense<0.000000e+00> : vector<8x32xf32>
    %114 = vector.multi_reduction <add>, %113, %cst_91 [0] : vector<4x8x32xf32> to vector<8x32xf32>
    %c0_92 = arith.constant 0 : index
    %c0_93 = arith.constant 0 : index
    %c0_94 = arith.constant 0 : index
    %c0_95 = arith.constant 0 : index
    %115 = vector.load %arg24[%c0_92, %c0_93, %c0_94, %c0_95] : memref<2x4x8x8xf32, #tpu.memory_space<vmem>>, vector<1x4x8x8xf32>
    %116 = vector.shape_cast %115 : vector<1x4x8x8xf32> to vector<4x8x8xf32>
    %117 = vector.shape_cast %111 : vector<4x8x8xf32> to vector<1x4x8x8xf32>
    tpu.vector_store %arg24[%c0_92, %c0_93, %c0_94, %c0_95], %117 {strides = array<i32>} : memref<2x4x8x8xf32, #tpu.memory_space<vmem>>, vector<1x4x8x8xf32>,
    %118 = arith.addf %73, %114 : vector<8x32xf32>
    %119 = arith.mulf %118, %118 : vector<8x32xf32>
    %cst_96 = arith.constant dense<0.000000e+00> : vector<8xf32>
    %120 = vector.multi_reduction <add>, %119, %cst_96 [1] : vector<8x32xf32> to vector<8xf32>
    %121 = vector.shape_cast %120 : vector<8xf32> to vector<8x1xf32>
    %cst_97 = arith.constant 3.200000e+01 : f32
    %122 = vector.broadcast %cst_97 : f32 to vector<8x1xf32>
    %123 = arith.divf %121, %122 : vector<8x1xf32>
    %cst_98 = arith.constant 9.99999997E-7 : f32
    %124 = vector.broadcast %cst_98 : f32 to vector<8x1xf32>
    %125 = arith.addf %123, %124 : vector<8x1xf32>
    %126 = math.rsqrt %125 : vector<8x1xf32>
    %127 = vector.broadcast %126 : vector<8x1xf32> to vector<8x32xf32>
    %128 = arith.mulf %118, %127 : vector<8x32xf32>
    %129 = vector.broadcast %8 : vector<1x32xf32> to vector<8x32xf32>
    %130 = arith.mulf %128, %129 : vector<8x32xf32>
    %cst_99 = arith.constant dense<0.000000e+00> : vector<8x64xf32>
    %131 = tpu.matmul %130, %26, %cst_99 {dimension_numbers = #tpu.dot_dimension_numbers<[1], [0], [0], [1], [0, 0, 1, 1], [], []>} : vector<8x32xf32>, vector<32x64xf32>, vector<8x64xf32> -> vector<8x64xf32>
    %cst_100 = arith.constant 0.000000e+00 : f32
    %132 = vector.broadcast %cst_100 : f32 to vector<8x64xf32>
    %133 = arith.maximumf %131, %132 : vector<8x64xf32>
    %cst_101 = arith.constant dense<0.000000e+00> : vector<8x32xf32>
    %134 = tpu.matmul %133, %28, %cst_101 {dimension_numbers = #tpu.dot_dimension_numbers<[1], [0], [0], [1], [0, 0, 1, 1], [], []>} : vector<8x64xf32>, vector<64x32xf32>, vector<8x32xf32> -> vector<8x32xf32>
    %135 = arith.addf %118, %134 : vector<8x32xf32>
    %c0_102 = arith.constant 0 : index
    %c0_103 = arith.constant 0 : index
    %c0_104 = arith.constant 0 : index
    %136 = vector.load %arg25[%c0_102, %c0_103, %c0_104] : memref<2x8x32xf32, #tpu.memory_space<vmem>>, vector<1x8x32xf32>
    %137 = vector.shape_cast %136 : vector<1x8x32xf32> to vector<8x32xf32>
    %138 = vector.shape_cast %135 : vector<8x32xf32> to vector<1x8x32xf32>
    tpu.vector_store %arg25[%c0_102, %c0_103, %c0_104], %138 {strides = array<i32>} : memref<2x8x32xf32, #tpu.memory_space<vmem>>, vector<1x8x32xf32>,
    %c1 = arith.constant 1 : index
    %c0_105 = arith.constant 0 : index
    %c0_106 = arith.constant 0 : index
    %139 = vector.load %arg25[%c1, %c0_105, %c0_106] : memref<2x8x32xf32, #tpu.memory_space<vmem>>, vector<1x8x32xf32>
    %140 = vector.shape_cast %139 : vector<1x8x32xf32> to vector<8x32xf32>
    %141 = arith.mulf %140, %140 : vector<8x32xf32>
    %cst_107 = arith.constant dense<0.000000e+00> : vector<8xf32>
    %142 = vector.multi_reduction <add>, %141, %cst_107 [1] : vector<8x32xf32> to vector<8xf32>
    %143 = vector.shape_cast %142 : vector<8xf32> to vector<8x1xf32>
    %cst_108 = arith.constant 3.200000e+01 : f32
    %144 = vector.broadcast %cst_108 : f32 to vector<8x1xf32>
    %145 = arith.divf %143, %144 : vector<8x1xf32>
    %cst_109 = arith.constant 9.99999997E-7 : f32
    %146 = vector.broadcast %cst_109 : f32 to vector<8x1xf32>
    %147 = arith.addf %145, %146 : vector<8x1xf32>
    %148 = math.rsqrt %147 : vector<8x1xf32>
    %149 = vector.broadcast %148 : vector<8x1xf32> to vector<8x32xf32>
    %150 = arith.mulf %140, %149 : vector<8x32xf32>
    %151 = vector.broadcast %4 : vector<1x32xf32> to vector<8x32xf32>
    %152 = arith.mulf %150, %151 : vector<8x32xf32>
    %c1_110 = arith.constant 1 : index
    %c0_111 = arith.constant 0 : index
    %c0_112 = arith.constant 0 : index
    %c0_113 = arith.constant 0 : index
    %153 = vector.load %arg3[%c1_110, %c0_111, %c0_112, %c0_113] : memref<2x1x8x8xf32, #tpu.memory_space<vmem>>, vector<1x1x8x8xf32>
    %154 = vector.shape_cast %153 : vector<1x1x8x8xf32> to vector<8x8xf32>
    %155 = vector.shape_cast %154 : vector<8x8xf32> to vector<1x8x8xf32>
    %156 = vector.broadcast %155 : vector<1x8x8xf32> to vector<4x8x8xf32>
    %157 = arith.addf %30, %156 : vector<4x8x8xf32>
    %158 = vector.shape_cast %152 : vector<8x32xf32> to vector<1x8x32xf32>
    %159 = vector.shape_cast %158 : vector<1x8x32xf32> to vector<1x8x32xf32>
    %160 = vector.broadcast %159 : vector<1x8x32xf32> to vector<4x8x32xf32>
    "tpu.trace_start"() <{level = 10 : i32, message = "hsd,hde->hse"}> : () -> ()
    %cst_114 = arith.constant dense<0.000000e+00> : vector<4x8x8xf32>
    %161 = tpu.matmul %160, %10, %cst_114 {dimension_numbers = #tpu.dot_dimension_numbers<[2], [1], [1], [2], [0, 0, 0, 1, 1, 2], [0], [0]>} : vector<4x8x32xf32>, vector<4x32x8xf32>, vector<4x8x8xf32> -> vector<4x8x8xf32>
    %cst_115 = arith.constant dense<0.000000e+00> : vector<4x8x8xf32>
    %162 = tpu.matmul %160, %12, %cst_115 {dimension_numbers = #tpu.dot_dimension_numbers<[2], [1], [1], [2], [0, 0, 0, 1, 1, 2], [0], [0]>} : vector<4x8x32xf32>, vector<4x32x8xf32>, vector<4x8x8xf32> -> vector<4x8x8xf32>
    %cst_116 = arith.constant dense<0.000000e+00> : vector<4x8x8xf32>
    %163 = tpu.matmul %160, %14, %cst_116 {dimension_numbers = #tpu.dot_dimension_numbers<[2], [1], [1], [2], [0, 0, 0, 1, 1, 2], [0], [0]>} : vector<4x8x32xf32>, vector<4x32x8xf32>, vector<4x8x8xf32> -> vector<4x8x8xf32>
    "tpu.trace_stop"() : () -> ()
    "tpu.trace_start"() <{level = 10 : i32, message = "hqe,hke->hqk"}> : () -> ()
    %cst_117 = arith.constant dense<0.000000e+00> : vector<4x8x8xf32>
    %164 = tpu.matmul %161, %162, %cst_117 {dimension_numbers = #tpu.dot_dimension_numbers<[2], [2], [1], [1], [0, 0, 0, 1, 1, 1], [0], [0]>} : vector<4x8x8xf32>, vector<4x8x8xf32>, vector<4x8x8xf32> -> vector<4x8x8xf32>
    "tpu.trace_stop"() : () -> ()
    %165 = arith.addf %164, %157 : vector<4x8x8xf32>
    %cst_118 = arith.constant dense<0xFF800000> : vector<4x8xf32>
    %166 = vector.multi_reduction <maximumf>, %165, %cst_118 [2] : vector<4x8x8xf32> to vector<4x8xf32>
    %167 = vector.shape_cast %166 : vector<4x8xf32> to vector<4x8x1xf32>
    %168 = vector.broadcast %167 : vector<4x8x1xf32> to vector<4x8x8xf32>
    %169 = arith.subf %165, %168 : vector<4x8x8xf32>
    %170 = math.exp %169 : vector<4x8x8xf32>
    %cst_119 = arith.constant dense<0.000000e+00> : vector<4x8xf32>
    %171 = vector.multi_reduction <add>, %170, %cst_119 [2] : vector<4x8x8xf32> to vector<4x8xf32>
    %172 = vector.shape_cast %171 : vector<4x8xf32> to vector<4x8x1xf32>
    %173 = vector.broadcast %172 : vector<4x8x1xf32> to vector<4x8x8xf32>
    %174 = arith.divf %170, %173 : vector<4x8x8xf32>
    "tpu.trace_start"() <{level = 10 : i32, message = "hqk,hke->hqe"}> : () -> ()
    %cst_120 = arith.constant dense<0.000000e+00> : vector<4x8x8xf32>
    %175 = tpu.matmul %174, %163, %cst_120 {dimension_numbers = #tpu.dot_dimension_numbers<[2], [1], [1], [2], [0, 0, 0, 1, 1, 2], [0], [0]>} : vector<4x8x8xf32>, vector<4x8x8xf32>, vector<4x8x8xf32> -> vector<4x8x8xf32>
    "tpu.trace_stop"() : () -> ()
    "tpu.trace_start"() <{level = 10 : i32, message = "hqe,heo->hqo"}> : () -> ()
    %cst_121 = arith.constant dense<0.000000e+00> : vector<4x8x32xf32>
    %176 = tpu.matmul %175, %16, %cst_121 {dimension_numbers = #tpu.dot_dimension_numbers<[2], [1], [1], [2], [0, 0, 0, 1, 1, 2], [0], [0]>} : vector<4x8x8xf32>, vector<4x8x32xf32>, vector<4x8x32xf32> -> vector<4x8x32xf32>
    "tpu.trace_stop"() : () -> ()
    %cst_122 = arith.constant dense<0.000000e+00> : vector<8x32xf32>
    %177 = vector.multi_reduction <add>, %176, %cst_122 [0] : vector<4x8x32xf32> to vector<8x32xf32>
    %c1_123 = arith.constant 1 : index
    %c0_124 = arith.constant 0 : index
    %c0_125 = arith.constant 0 : index
    %c0_126 = arith.constant 0 : index
    %178 = vector.load %arg23[%c1_123, %c0_124, %c0_125, %c0_126] : memref<2x4x8x8xf32, #tpu.memory_space<vmem>>, vector<1x4x8x8xf32>
    %179 = vector.shape_cast %178 : vector<1x4x8x8xf32> to vector<4x8x8xf32>
    %180 = vector.shape_cast %174 : vector<4x8x8xf32> to vector<1x4x8x8xf32>
    tpu.vector_store %arg23[%c1_123, %c0_124, %c0_125, %c0_126], %180 {strides = array<i32>} : memref<2x4x8x8xf32, #tpu.memory_space<vmem>>, vector<1x4x8x8xf32>,
    %181 = arith.addf %140, %177 : vector<8x32xf32>
    %182 = arith.mulf %181, %181 : vector<8x32xf32>
    %cst_127 = arith.constant dense<0.000000e+00> : vector<8xf32>
    %183 = vector.multi_reduction <add>, %182, %cst_127 [1] : vector<8x32xf32> to vector<8xf32>
    %184 = vector.shape_cast %183 : vector<8xf32> to vector<8x1xf32>
    %cst_128 = arith.constant 3.200000e+01 : f32
    %185 = vector.broadcast %cst_128 : f32 to vector<8x1xf32>
    %186 = arith.divf %184, %185 : vector<8x1xf32>
    %cst_129 = arith.constant 9.99999997E-7 : f32
    %187 = vector.broadcast %cst_129 : f32 to vector<8x1xf32>
    %188 = arith.addf %186, %187 : vector<8x1xf32>
    %189 = math.rsqrt %188 : vector<8x1xf32>
    %190 = vector.broadcast %189 : vector<8x1xf32> to vector<8x32xf32>
    %191 = arith.mulf %181, %190 : vector<8x32xf32>
    %192 = vector.broadcast %6 : vector<1x32xf32> to vector<8x32xf32>
    %193 = arith.mulf %191, %192 : vector<8x32xf32>
    %c1_130 = arith.constant 1 : index
    %c0_131 = arith.constant 0 : index
    %c0_132 = arith.constant 0 : index
    %194 = vector.load %arg2[%c1_130, %c0_131, %c0_132] : memref<2x8x32xf32, #tpu.memory_space<vmem>>, vector<1x8x32xf32>
    %195 = vector.shape_cast %194 : vector<1x8x32xf32> to vector<8x32xf32>
    %c1_133 = arith.constant 1 : index
    %c0_134 = arith.constant 0 : index
    %c0_135 = arith.constant 0 : index
    %c0_136 = arith.constant 0 : index
    %196 = vector.load %arg4[%c1_133, %c0_134, %c0_135, %c0_136] : memref<2x1x1x8xf32, #tpu.memory_space<vmem>>, vector<1x1x1x8xf32>
    %197 = vector.shape_cast %196 : vector<1x1x1x8xf32> to vector<1x8xf32>
    %198 = vector.shape_cast %197 : vector<1x8xf32> to vector<1x1x8xf32>
    %199 = vector.shape_cast %193 : vector<8x32xf32> to vector<1x8x32xf32>
    %200 = vector.shape_cast %199 : vector<1x8x32xf32> to vector<1x8x32xf32>
    %201 = vector.broadcast %200 : vector<1x8x32xf32> to vector<4x8x32xf32>
    %202 = vector.shape_cast %195 : vector<8x32xf32> to vector<1x8x32xf32>
    %203 = vector.shape_cast %202 : vector<1x8x32xf32> to vector<1x8x32xf32>
    %204 = vector.broadcast %203 : vector<1x8x32xf32> to vector<4x8x32xf32>
    "tpu.trace_start"() <{level = 10 : i32, message = "hsd,hde->hse"}> : () -> ()
    %cst_137 = arith.constant dense<0.000000e+00> : vector<4x8x8xf32>
    %205 = tpu.matmul %201, %18, %cst_137 {dimension_numbers = #tpu.dot_dimension_numbers<[2], [1], [1], [2], [0, 0, 0, 1, 1, 2], [0], [0]>} : vector<4x8x32xf32>, vector<4x32x8xf32>, vector<4x8x8xf32> -> vector<4x8x8xf32>
    %cst_138 = arith.constant dense<0.000000e+00> : vector<4x8x8xf32>
    %206 = tpu.matmul %204, %20, %cst_138 {dimension_numbers = #tpu.dot_dimension_numbers<[2], [1], [1], [2], [0, 0, 0, 1, 1, 2], [0], [0]>} : vector<4x8x32xf32>, vector<4x32x8xf32>, vector<4x8x8xf32> -> vector<4x8x8xf32>
    %cst_139 = arith.constant dense<0.000000e+00> : vector<4x8x8xf32>
    %207 = tpu.matmul %204, %22, %cst_139 {dimension_numbers = #tpu.dot_dimension_numbers<[2], [1], [1], [2], [0, 0, 0, 1, 1, 2], [0], [0]>} : vector<4x8x32xf32>, vector<4x32x8xf32>, vector<4x8x8xf32> -> vector<4x8x8xf32>
    "tpu.trace_stop"() : () -> ()
    "tpu.trace_start"() <{level = 10 : i32, message = "hqe,hke->hqk"}> : () -> ()
    %cst_140 = arith.constant dense<0.000000e+00> : vector<4x8x8xf32>
    %208 = tpu.matmul %205, %206, %cst_140 {dimension_numbers = #tpu.dot_dimension_numbers<[2], [2], [1], [1], [0, 0, 0, 1, 1, 1], [0], [0]>} : vector<4x8x8xf32>, vector<4x8x8xf32>, vector<4x8x8xf32> -> vector<4x8x8xf32>
    "tpu.trace_stop"() : () -> ()
    %209 = vector.broadcast %198 : vector<1x1x8xf32> to vector<4x8x8xf32>
    %210 = arith.addf %208, %209 : vector<4x8x8xf32>
    %cst_141 = arith.constant dense<0xFF800000> : vector<4x8xf32>
    %211 = vector.multi_reduction <maximumf>, %210, %cst_141 [2] : vector<4x8x8xf32> to vector<4x8xf32>
    %212 = vector.shape_cast %211 : vector<4x8xf32> to vector<4x8x1xf32>
    %213 = vector.broadcast %212 : vector<4x8x1xf32> to vector<4x8x8xf32>
    %214 = arith.subf %210, %213 : vector<4x8x8xf32>
    %215 = math.exp %214 : vector<4x8x8xf32>
    %cst_142 = arith.constant dense<0.000000e+00> : vector<4x8xf32>
    %216 = vector.multi_reduction <add>, %215, %cst_142 [2] : vector<4x8x8xf32> to vector<4x8xf32>
    %217 = vector.shape_cast %216 : vector<4x8xf32> to vector<4x8x1xf32>
    %218 = vector.broadcast %217 : vector<4x8x1xf32> to vector<4x8x8xf32>
    %219 = arith.divf %215, %218 : vector<4x8x8xf32>
    "tpu.trace_start"() <{level = 10 : i32, message = "hqk,hke->hqe"}> : () -> ()
    %cst_143 = arith.constant dense<0.000000e+00> : vector<4x8x8xf32>
    %220 = tpu.matmul %219, %207, %cst_143 {dimension_numbers = #tpu.dot_dimension_numbers<[2], [1], [1], [2], [0, 0, 0, 1, 1, 2], [0], [0]>} : vector<4x8x8xf32>, vector<4x8x8xf32>, vector<4x8x8xf32> -> vector<4x8x8xf32>
    "tpu.trace_stop"() : () -> ()
    "tpu.trace_start"() <{level = 10 : i32, message = "hqe,heo->hqo"}> : () -> ()
    %cst_144 = arith.constant dense<0.000000e+00> : vector<4x8x32xf32>
    %221 = tpu.matmul %220, %24, %cst_144 {dimension_numbers = #tpu.dot_dimension_numbers<[2], [1], [1], [2], [0, 0, 0, 1, 1, 2], [0], [0]>} : vector<4x8x8xf32>, vector<4x8x32xf32>, vector<4x8x32xf32> -> vector<4x8x32xf32>
    "tpu.trace_stop"() : () -> ()
    %cst_145 = arith.constant dense<0.000000e+00> : vector<8x32xf32>
    %222 = vector.multi_reduction <add>, %221, %cst_145 [0] : vector<4x8x32xf32> to vector<8x32xf32>
    %c1_146 = arith.constant 1 : index
    %c0_147 = arith.constant 0 : index
    %c0_148 = arith.constant 0 : index
    %c0_149 = arith.constant 0 : index
    %223 = vector.load %arg24[%c1_146, %c0_147, %c0_148, %c0_149] : memref<2x4x8x8xf32, #tpu.memory_space<vmem>>, vector<1x4x8x8xf32>
    %224 = vector.shape_cast %223 : vector<1x4x8x8xf32> to vector<4x8x8xf32>
    %225 = vector.shape_cast %219 : vector<4x8x8xf32> to vector<1x4x8x8xf32>
    tpu.vector_store %arg24[%c1_146, %c0_147, %c0_148, %c0_149], %225 {strides = array<i32>} : memref<2x4x8x8xf32, #tpu.memory_space<vmem>>, vector<1x4x8x8xf32>,
    %226 = arith.addf %181, %222 : vector<8x32xf32>
    %227 = arith.mulf %226, %226 : vector<8x32xf32>
    %cst_150 = arith.constant dense<0.000000e+00> : vector<8xf32>
    %228 = vector.multi_reduction <add>, %227, %cst_150 [1] : vector<8x32xf32> to vector<8xf32>
    %229 = vector.shape_cast %228 : vector<8xf32> to vector<8x1xf32>
    %cst_151 = arith.constant 3.200000e+01 : f32
    %230 = vector.broadcast %cst_151 : f32 to vector<8x1xf32>
    %231 = arith.divf %229, %230 : vector<8x1xf32>
    %cst_152 = arith.constant 9.99999997E-7 : f32
    %232 = vector.broadcast %cst_152 : f32 to vector<8x1xf32>
    %233 = arith.addf %231, %232 : vector<8x1xf32>
    %234 = math.rsqrt %233 : vector<8x1xf32>
    %235 = vector.broadcast %234 : vector<8x1xf32> to vector<8x32xf32>
    %236 = arith.mulf %226, %235 : vector<8x32xf32>
    %237 = vector.broadcast %8 : vector<1x32xf32> to vector<8x32xf32>
    %238 = arith.mulf %236, %237 : vector<8x32xf32>
    %cst_153 = arith.constant dense<0.000000e+00> : vector<8x64xf32>
    %239 = tpu.matmul %238, %26, %cst_153 {dimension_numbers = #tpu.dot_dimension_numbers<[1], [0], [0], [1], [0, 0, 1, 1], [], []>} : vector<8x32xf32>, vector<32x64xf32>, vector<8x64xf32> -> vector<8x64xf32>
    %cst_154 = arith.constant 0.000000e+00 : f32
    %240 = vector.broadcast %cst_154 : f32 to vector<8x64xf32>
    %241 = arith.maximumf %239, %240 : vector<8x64xf32>
    %cst_155 = arith.constant dense<0.000000e+00> : vector<8x32xf32>
    %242 = tpu.matmul %241, %28, %cst_155 {dimension_numbers = #tpu.dot_dimension_numbers<[1], [0], [0], [1], [0, 0, 1, 1], [], []>} : vector<8x64xf32>, vector<64x32xf32>, vector<8x32xf32> -> vector<8x32xf32>
    %243 = arith.addf %226, %242 : vector<8x32xf32>
    %c1_156 = arith.constant 1 : index
    %c0_157 = arith.constant 0 : index
    %c0_158 = arith.constant 0 : index
    %244 = vector.load %arg25[%c1_156, %c0_157, %c0_158] : memref<2x8x32xf32, #tpu.memory_space<vmem>>, vector<1x8x32xf32>
    %245 = vector.shape_cast %244 : vector<1x8x32xf32> to vector<8x32xf32>
    %246 = vector.shape_cast %243 : vector<8x32xf32> to vector<1x8x32xf32>
    tpu.vector_store %arg25[%c1_156, %c0_157, %c0_158], %246 {strides = array<i32>} : memref<2x8x32xf32, #tpu.memory_space<vmem>>, vector<1x8x32xf32>,
    %c1_i32 = arith.constant 1 : i32
    %247 = arith.cmpi eq, %arg0, %c1_i32 : i32
    %248 = arith.extui %247 : i1 to i32
    %c0_i32_159 = arith.constant 0 : i32
    %249 = arith.cmpi ne, %248, %c0_i32_159 : i32
    scf.if %249 {
      %c0_160 = arith.constant 0 : index
      %c0_161 = arith.constant 0 : index
      %250 = vector.load %arg19[%c0_160, %c0_161] : memref<1x32xf32, #tpu.memory_space<vmem>>, vector<1x32xf32>
      %c0_162 = arith.constant 0 : index
      %c0_163 = arith.constant 0 : index
      %251 = vector.load %arg20[%c0_162, %c0_163] : memref<32x128xf32, #tpu.memory_space<vmem>>, vector<32x128xf32>
      %c0_164 = arith.constant 0 : index
      %c0_165 = arith.constant 0 : index
      %252 = vector.load %arg21[%c0_164, %c0_165] : memref<1x128xf32, #tpu.memory_space<vmem>>, vector<1x128xf32>
      %c0_166 = arith.constant 0 : index
      %c0_167 = arith.constant 0 : index
      %c0_168 = arith.constant 0 : index
      %253 = vector.load %arg25[%c0_166, %c0_167, %c0_168] : memref<2x8x32xf32, #tpu.memory_space<vmem>>, vector<1x8x32xf32>
      %254 = vector.shape_cast %253 : vector<1x8x32xf32> to vector<8x32xf32>
      %255 = arith.mulf %254, %254 : vector<8x32xf32>
      %cst_169 = arith.constant dense<0.000000e+00> : vector<8xf32>
      %256 = vector.multi_reduction <add>, %255, %cst_169 [1] : vector<8x32xf32> to vector<8xf32>
      %257 = vector.shape_cast %256 : vector<8xf32> to vector<8x1xf32>
      %cst_170 = arith.constant 3.200000e+01 : f32
      %258 = vector.broadcast %cst_170 : f32 to vector<8x1xf32>
      %259 = arith.divf %257, %258 : vector<8x1xf32>
      %cst_171 = arith.constant 9.99999997E-7 : f32
      %260 = vector.broadcast %cst_171 : f32 to vector<8x1xf32>
      %261 = arith.addf %259, %260 : vector<8x1xf32>
      %262 = math.rsqrt %261 : vector<8x1xf32>
      %263 = vector.broadcast %262 : vector<8x1xf32> to vector<8x32xf32>
      %264 = arith.mulf %254, %263 : vector<8x32xf32>
      %265 = vector.broadcast %250 : vector<1x32xf32> to vector<8x32xf32>
      %266 = arith.mulf %264, %265 : vector<8x32xf32>
      %cst_172 = arith.constant dense<0.000000e+00> : vector<8x128xf32>
      %267 = tpu.matmul %266, %251, %cst_172 {dimension_numbers = #tpu.dot_dimension_numbers<[1], [0], [0], [1], [0, 0, 1, 1], [], []>} : vector<8x32xf32>, vector<32x128xf32>, vector<8x128xf32> -> vector<8x128xf32>
      %268 = vector.broadcast %252 : vector<1x128xf32> to vector<8x128xf32>
      %269 = arith.addf %267, %268 : vector<8x128xf32>
      %c0_173 = arith.constant 0 : index
      %c0_174 = arith.constant 0 : index
      %c0_175 = arith.constant 0 : index
      %270 = vector.load %arg22[%c0_173, %c0_174, %c0_175] : memref<2x8x128xf32, #tpu.memory_space<vmem>>, vector<1x8x128xf32>
      %271 = vector.shape_cast %270 : vector<1x8x128xf32> to vector<8x128xf32>
      %272 = vector.shape_cast %269 : vector<8x128xf32> to vector<1x8x128xf32>
      tpu.vector_store %arg22[%c0_173, %c0_174, %c0_175], %272 {strides = array<i32>} : memref<2x8x128xf32, #tpu.memory_space<vmem>>, vector<1x8x128xf32>,
      %c1_176 = arith.constant 1 : index
      %c0_177 = arith.constant 0 : index
      %c0_178 = arith.constant 0 : index
      %273 = vector.load %arg25[%c1_176, %c0_177, %c0_178] : memref<2x8x32xf32, #tpu.memory_space<vmem>>, vector<1x8x32xf32>
      %274 = vector.shape_cast %273 : vector<1x8x32xf32> to vector<8x32xf32>
      %275 = arith.mulf %274, %274 : vector<8x32xf32>
      %cst_179 = arith.constant dense<0.000000e+00> : vector<8xf32>
      %276 = vector.multi_reduction <add>, %275, %cst_179 [1] : vector<8x32xf32> to vector<8xf32>
      %277 = vector.shape_cast %276 : vector<8xf32> to vector<8x1xf32>
      %cst_180 = arith.constant 3.200000e+01 : f32
      %278 = vector.broadcast %cst_180 : f32 to vector<8x1xf32>
      %279 = arith.divf %277, %278 : vector<8x1xf32>
      %cst_181 = arith.constant 9.99999997E-7 : f32
      %280 = vector.broadcast %cst_181 : f32 to vector<8x1xf32>
      %281 = arith.addf %279, %280 : vector<8x1xf32>
      %282 = math.rsqrt %281 : vector<8x1xf32>
      %283 = vector.broadcast %282 : vector<8x1xf32> to vector<8x32xf32>
      %284 = arith.mulf %274, %283 : vector<8x32xf32>
      %285 = vector.broadcast %250 : vector<1x32xf32> to vector<8x32xf32>
      %286 = arith.mulf %284, %285 : vector<8x32xf32>
      %cst_182 = arith.constant dense<0.000000e+00> : vector<8x128xf32>
      %287 = tpu.matmul %286, %251, %cst_182 {dimension_numbers = #tpu.dot_dimension_numbers<[1], [0], [0], [1], [0, 0, 1, 1], [], []>} : vector<8x32xf32>, vector<32x128xf32>, vector<8x128xf32> -> vector<8x128xf32>
      %288 = vector.broadcast %252 : vector<1x128xf32> to vector<8x128xf32>
      %289 = arith.addf %287, %288 : vector<8x128xf32>
      %c1_183 = arith.constant 1 : index
      %c0_184 = arith.constant 0 : index
      %c0_185 = arith.constant 0 : index
      %290 = vector.load %arg22[%c1_183, %c0_184, %c0_185] : memref<2x8x128xf32, #tpu.memory_space<vmem>>, vector<1x8x128xf32>
      %291 = vector.shape_cast %290 : vector<1x8x128xf32> to vector<8x128xf32>
      %292 = vector.shape_cast %289 : vector<8x128xf32> to vector<1x8x128xf32>
      tpu.vector_store %arg22[%c1_183, %c0_184, %c0_185], %292 {strides = array<i32>} : memref<2x8x128xf32, #tpu.memory_space<vmem>>, vector<1x8x128xf32>,
    } else {
    }
    return
  }
  func.func @transform_0(%arg0: i32) -> (i32, i32, i32) {
    %c0_i32 = arith.constant 0 : i32
    %c0_i32_0 = arith.constant 0 : i32
    %c0_i32_1 = arith.constant 0 : i32
    %c0_i32_2 = arith.constant 0 : i32
    return %c0_i32, %c0_i32_0, %c0_i32_1 : i32, i32, i32
  }
  func.func @transform_1(%arg0: i32) -> (i32, i32, i32) {
    %c0_i32 = arith.constant 0 : i32
    %c0_i32_0 = arith.constant 0 : i32
    %c0_i32_1 = arith.constant 0 : i32
    %c0_i32_2 = arith.constant 0 : i32
    return %c0_i32, %c0_i32_0, %c0_i32_1 : i32, i32, i32
  }
  func.func @transform_2(%arg0: i32) -> (i32, i32, i32, i32) {
    %c0_i32 = arith.constant 0 : i32
    %c0_i32_0 = arith.constant 0 : i32
    %c0_i32_1 = arith.constant 0 : i32
    %c0_i32_2 = arith.constant 0 : i32
    %c0_i32_3 = arith.constant 0 : i32
    return %c0_i32, %c0_i32_0, %c0_i32_1, %c0_i32_2 : i32, i32, i32, i32
  }
  func.func @transform_3(%arg0: i32) -> (i32, i32, i32, i32) {
    %c0_i32 = arith.constant 0 : i32
    %c0_i32_0 = arith.constant 0 : i32
    %c0_i32_1 = arith.constant 0 : i32
    %c0_i32_2 = arith.constant 0 : i32
    %c0_i32_3 = arith.constant 0 : i32
    return %c0_i32, %c0_i32_0, %c0_i32_1, %c0_i32_2 : i32, i32, i32, i32
  }
  func.func @transform_4(%arg0: i32) -> (i32, i32, i32, i32) {
    %c0_i32 = arith.constant 0 : i32
    %c0_i32_0 = arith.constant 0 : i32
    %c0_i32_1 = arith.constant 0 : i32
    %c0_i32_2 = arith.constant 0 : i32
    return %arg0, %c0_i32, %c0_i32_0, %c0_i32_1 : i32, i32, i32, i32
  }
  func.func @transform_5(%arg0: i32) -> (i32, i32, i32) {
    %c0_i32 = arith.constant 0 : i32
    %c0_i32_0 = arith.constant 0 : i32
    %c0_i32_1 = arith.constant 0 : i32
    return %arg0, %c0_i32, %c0_i32_0 : i32, i32, i32
  }
  func.func @transform_6(%arg0: i32) -> (i32, i32, i32) {
    %c0_i32 = arith.constant 0 : i32
    %c0_i32_0 = arith.constant 0 : i32
    %c0_i32_1 = arith.constant 0 : i32
    return %arg0, %c0_i32, %c0_i32_0 : i32, i32, i32
  }
  func.func @transform_7(%arg0: i32) -> (i32, i32, i32) {
    %c0_i32 = arith.constant 0 : i32
    %c0_i32_0 = arith.constant 0 : i32
    %c0_i32_1 = arith.constant 0 : i32
    return %arg0, %c0_i32, %c0_i32_0 : i32, i32, i32
  }
  func.func @transform_8(%arg0: i32) -> (i32, i32, i32, i32) {
    %c0_i32 = arith.constant 0 : i32
    %c0_i32_0 = arith.constant 0 : i32
    %c0_i32_1 = arith.constant 0 : i32
    %c0_i32_2 = arith.constant 0 : i32
    return %arg0, %c0_i32, %c0_i32_0, %c0_i32_1 : i32, i32, i32, i32
  }
  func.func @transform_9(%arg0: i32) -> (i32, i32, i32, i32) {
    %c0_i32 = arith.constant 0 : i32
    %c0_i32_0 = arith.constant 0 : i32
    %c0_i32_1 = arith.constant 0 : i32
    %c0_i32_2 = arith.constant 0 : i32
    return %arg0, %c0_i32, %c0_i32_0, %c0_i32_1 : i32, i32, i32, i32
  }
  func.func @transform_10(%arg0: i32) -> (i32, i32, i32, i32) {
    %c0_i32 = arith.constant 0 : i32
    %c0_i32_0 = arith.constant 0 : i32
    %c0_i32_1 = arith.constant 0 : i32
    %c0_i32_2 = arith.constant 0 : i32
    return %arg0, %c0_i32, %c0_i32_0, %c0_i32_1 : i32, i32, i32, i32
  }
  func.func @transform_11(%arg0: i32) -> (i32, i32, i32, i32) {
    %c0_i32 = arith.constant 0 : i32
    %c0_i32_0 = arith.constant 0 : i32
    %c0_i32_1 = arith.constant 0 : i32
    %c0_i32_2 = arith.constant 0 : i32
    return %arg0, %c0_i32, %c0_i32_0, %c0_i32_1 : i32, i32, i32, i32
  }
  func.func @transform_12(%arg0: i32) -> (i32, i32, i32, i32) {
    %c0_i32 = arith.constant 0 : i32
    %c0_i32_0 = arith.constant 0 : i32
    %c0_i32_1 = arith.constant 0 : i32
    %c0_i32_2 = arith.constant 0 : i32
    return %arg0, %c0_i32, %c0_i32_0, %c0_i32_1 : i32, i32, i32, i32
  }
  func.func @transform_13(%arg0: i32) -> (i32, i32, i32, i32) {
    %c0_i32 = arith.constant 0 : i32
    %c0_i32_0 = arith.constant 0 : i32
    %c0_i32_1 = arith.constant 0 : i32
    %c0_i32_2 = arith.constant 0 : i32
    return %arg0, %c0_i32, %c0_i32_0, %c0_i32_1 : i32, i32, i32, i32
  }
  func.func @transform_14(%arg0: i32) -> (i32, i32, i32, i32) {
    %c0_i32 = arith.constant 0 : i32
    %c0_i32_0 = arith.constant 0 : i32
    %c0_i32_1 = arith.constant 0 : i32
    %c0_i32_2 = arith.constant 0 : i32
    return %arg0, %c0_i32, %c0_i32_0, %c0_i32_1 : i32, i32, i32, i32
  }
  func.func @transform_15(%arg0: i32) -> (i32, i32, i32, i32) {
    %c0_i32 = arith.constant 0 : i32
    %c0_i32_0 = arith.constant 0 : i32
    %c0_i32_1 = arith.constant 0 : i32
    %c0_i32_2 = arith.constant 0 : i32
    return %arg0, %c0_i32, %c0_i32_0, %c0_i32_1 : i32, i32, i32, i32
  }
  func.func @transform_16(%arg0: i32) -> (i32, i32, i32) {
    %c0_i32 = arith.constant 0 : i32
    %c0_i32_0 = arith.constant 0 : i32
    %c0_i32_1 = arith.constant 0 : i32
    return %arg0, %c0_i32, %c0_i32_0 : i32, i32, i32
  }
  func.func @transform_17(%arg0: i32) -> (i32, i32, i32) {
    %c0_i32 = arith.constant 0 : i32
    %c0_i32_0 = arith.constant 0 : i32
    %c0_i32_1 = arith.constant 0 : i32
    return %arg0, %c0_i32, %c0_i32_0 : i32, i32, i32
  }
  func.func @transform_18(%arg0: i32) -> (i32, i32) {
    %c0_i32 = arith.constant 0 : i32
    %c0_i32_0 = arith.constant 0 : i32
    %c0_i32_1 = arith.constant 0 : i32
    return %c0_i32, %c0_i32_0 : i32, i32
  }
  func.func @transform_19(%arg0: i32) -> (i32, i32) {
    %c0_i32 = arith.constant 0 : i32
    %c0_i32_0 = arith.constant 0 : i32
    %c0_i32_1 = arith.constant 0 : i32
    return %c0_i32, %c0_i32_0 : i32, i32
  }
  func.func @transform_20(%arg0: i32) -> (i32, i32) {
    %c0_i32 = arith.constant 0 : i32
    %c0_i32_0 = arith.constant 0 : i32
    %c0_i32_1 = arith.constant 0 : i32
    return %c0_i32, %c0_i32_0 : i32, i32
  }
  func.func @transform_21(%arg0: i32) -> (i32, i32, i32) {
    %c0_i32 = arith.constant 0 : i32
    %c0_i32_0 = arith.constant 0 : i32
    %c0_i32_1 = arith.constant 0 : i32
    %c0_i32_2 = arith.constant 0 : i32
    return %c0_i32, %c0_i32_0, %c0_i32_1 : i32, i32, i32
  }
  func.func @transform_22(%arg0: i32) -> (i32, i32, i32, i32) {
    %c0_i32 = arith.constant 0 : i32
    %c0_i32_0 = arith.constant 0 : i32
    %c0_i32_1 = arith.constant 0 : i32
    %c0_i32_2 = arith.constant 0 : i32
    return %arg0, %c0_i32, %c0_i32_0, %c0_i32_1 : i32, i32, i32, i32
  }
  func.func @transform_23(%arg0: i32) -> (i32, i32, i32, i32) {
    %c0_i32 = arith.constant 0 : i32
    %c0_i32_0 = arith.constant 0 : i32
    %c0_i32_1 = arith.constant 0 : i32
    %c0_i32_2 = arith.constant 0 : i32
    return %arg0, %c0_i32, %c0_i32_0, %c0_i32_1 : i32, i32, i32, i32
  }
}

</mosaic_0001>

<llo_original>
// kernel: t5_decoder_forward.1
$region0: #{t5_decoder_forward.1}
  #allocation0 [shape = 'u32[]', space=smem, size = 0x4, offset = 0x4, fixed_abs, tag = 'smem constant byte address 0x4 - core index']
  #allocation1 [shape = 'u32[72,128]{1,0:T(1,128)}', space=vmem, size = 0x9000, scoped, tag = 'internal scratch']
  #allocation2 [shape = 'f32[2,8,32]{2,1,0:T(8,128)}', space=vmem, size = 0x2000, scoped, tag = 'scratch operand']
  %s0 = inlined_call_operand.vmem [shape: f32[2,8,32], index: 0, kind: input, shape index: {}]
  %s1 = inlined_call_operand.vmem [shape: f32[2,8,32], index: 1, kind: input, shape index: {}]
  %s2 = inlined_call_operand.vmem [shape: f32[2,1,8,8], index: 2, kind: input, shape index: {}]
  %s3 = inlined_call_operand.vmem [shape: f32[2,1,1,8], index: 3, kind: input, shape index: {}]
  %s4 = inlined_call_operand.vmem [shape: f32[2,4,8,8], index: 4, kind: input, shape index: {}]
  %s5 = inlined_call_operand.vmem [shape: f32[2,1,32], index: 5, kind: input, shape index: {}]
  %s6 = inlined_call_operand.vmem [shape: f32[2,1,32], index: 6, kind: input, shape index: {}]
  %s7 = inlined_call_operand.vmem [shape: f32[2,1,32], index: 7, kind: input, shape index: {}]
  %s8 = inlined_call_operand.vmem [shape: f32[2,4,32,8], index: 8, kind: input, shape index: {}]
  %s9 = inlined_call_operand.vmem [shape: f32[2,4,32,8], index: 9, kind: input, shape index: {}]
  %s10 = inlined_call_operand.vmem [shape: f32[2,4,32,8], index: 10, kind: input, shape index: {}]
  %s11 = inlined_call_operand.vmem [shape: f32[2,4,8,32], index: 11, kind: input, shape index: {}]
  %s12 = inlined_call_operand.vmem [shape: f32[2,4,32,8], index: 12, kind: input, shape index: {}]
  %s13 = inlined_call_operand.vmem [shape: f32[2,4,32,8], index: 13, kind: input, shape index: {}]
  %s14 = inlined_call_operand.hbm [shape: f32[2,4,32,8], index: 14, kind: input, shape index: {}]
  %s15 = inlined_call_operand.vmem [shape: f32[2,4,8,32], index: 15, kind: input, shape index: {}]
  %s16 = inlined_call_operand.hbm [shape: f32[2,32,64], index: 16, kind: input, shape index: {}]
  %s17 = inlined_call_operand.vmem [shape: f32[2,64,32], index: 17, kind: input, shape index: {}]
  %s18 = inlined_call_operand.vmem [shape: f32[1,32], index: 18, kind: input, shape index: {}]
  %s19 = inlined_call_operand.vmem [shape: f32[32,128], index: 19, kind: input, shape index: {}]
  %s20 = inlined_call_operand.vmem [shape: f32[1,128], index: 20, kind: input, shape index: {}]
  %s21 = inlined_call_operand.hbm [shape: f32[2,8,128], index: 21, kind: output, shape index: {0}]
  %s22 = inlined_call_operand.vmem [shape: f32[4,4,8,8], index: 22, kind: output, shape index: {1}]
  %s23 = inlined_call_operand.vmem [shape: f32[4,4,8,8], index: 23, kind: output, shape index: {2}]
  %24 = xla_tuple %s21, %s22, %s23
  %s25 = sld [smem:[#allocation0]]
  $region149: #{t5_decoder_forward.1} parent=0
    _
  %s27 = ssub.s32 1, %s25
  %s28 = scalar_select 0, %s27, %s25
  $region1: #{t5_decoder_forward.1} parent=0
    #allocation3 [shape = 'u8[131072]{0}', space=vmem, size = 0x20000, scoped, tag = 'input window, operand 14']
    #allocation4 [shape = 's32[2]{0}', space=sflag, size = 0x8, scoped, tag = 'scoped memory for t5_decoder_forward.1']
    #allocation5 [shape = 's32[2]{0}', space=sflag, size = 0x8, scoped, tag = 'scoped memory for t5_decoder_forward.1']
    #allocation6 [shape = 'u8[32768]{0}', space=vmem, size = 0x8000, scoped, tag = 'input window, operand 16']
    #allocation7 [shape = 's32[2]{0}', space=sflag, size = 0x8, scoped, tag = 'scoped memory for t5_decoder_forward.1']
    #allocation8 [shape = 'u8[8192]{0}', space=vmem, size = 0x2000, scoped, tag = 'output window, operand 0, single buffered']
    %29 = vsyncpa [#allocation4], 0
    %s30 = scalar_lea.sflag [#allocation4], 1
    %31 = vsyncpa %s30, 0
    %32 = vsyncpa [#allocation7], 0
    %s33 = scalar_lea.sflag [#allocation7], 1
    %34 = vsyncpa %s33, 0
    %35 = vsyncpa [#allocation5], 0
    loop: start=0, step=1, limit=4
    $region2: #{t5_decoder_forward.1} parent=1 // loop_pre_header
      _
    $region3: #{t5_decoder_forward.1} parent=1 // loop_header
      %s37 = sphi 0, %s41
      %p38 = scmp.ge.s32.totalorder %s37, 4
      %s45 = sphi 0, %s45
      %s47 = sphi 0, %s45
      %s48 = sphi 0, %s47
      %s62 = sphi 0, %s48
      %s66 = sphi 0, %s66
      %s68 = sphi 0, %s66
      %s69 = sphi 0, %s68
      %s83 = sphi 0, %s69
      %s87 = sphi 0, %s87
      %s89 = sphi 0, %s87
      %s90 = sphi 0, %s89
      %s104 = sphi 0, %s90
      %s108 = sphi 0, %s108
      %s110 = sphi 0, %s108
      %s111 = sphi 0, %s110
      %s125 = sphi 0, %s111
      %s131 = sphi 0, %s133
      %s134 = sphi 0, %s131
      %s135 = sphi 0, %s134
      %s151 = sphi 0, %s135
      %s157 = sphi 0, %s159
      %s160 = sphi 0, %s157
      %s161 = sphi 0, %s160
      %s177 = sphi 0, %s161
      %s183 = sphi 0, %s185
      %s186 = sphi 0, %s183
      %s187 = sphi 0, %s186
      %s203 = sphi 0, %s187
      %s209 = sphi 0, %s211
      %s212 = sphi 0, %s209
      %s213 = sphi 0, %s212
      %s229 = sphi 0, %s213
      %s235 = sphi 0, %s237
      %s238 = sphi 0, %s235
      %s239 = sphi 0, %s238
      %s255 = sphi 0, %s239
      %s261 = sphi 0, %s263
      %s264 = sphi 0, %s261
      %s265 = sphi 0, %s264
      %s281 = sphi 0, %s265
      %s287 = sphi 0, %s289
      %s290 = sphi 0, %s287
      %s291 = sphi 0, %s290
      %s307 = sphi 0, %s291
      %s313 = sphi 0, %s315
      %s316 = sphi 0, %s313
      %s317 = sphi 0, %s316
      %s333 = sphi 0, %s317
      %s339 = sphi 0, %s341
      %s342 = sphi 0, %s339
      %s343 = sphi 0, %s342
      %s359 = sphi 0, %s343
      %s365 = sphi 0, %s367
      %s368 = sphi 0, %s365
      %s369 = sphi 0, %s368
      %s385 = sphi 0, %s369
      %s391 = sphi 0, %s393
      %s394 = sphi 0, %s391
      %s395 = sphi 0, %s394
      %s411 = sphi 0, %s395
      %s417 = sphi 0, %s419
      %s420 = sphi 0, %s417
      %s421 = sphi 0, %s420
      %s437 = sphi 0, %s421
      %s443 = sphi 0, %s445
      %s446 = sphi 0, %s443
      %s447 = sphi 0, %s446
      %s463 = sphi 0, %s447
      %s469 = sphi 0, %s471
      %s472 = sphi 0, %s469
      %s473 = sphi 0, %s472
      %s489 = sphi 0, %s473
      %s493 = sphi 0, %s493
      %s495 = sphi 0, %s493
      %s496 = sphi 0, %s495
      %s510 = sphi 0, %s496
      %s514 = sphi 0, %s514
      %s516 = sphi 0, %s514
      %s517 = sphi 0, %s516
      %s531 = sphi 0, %s517
      %s535 = sphi 0, %s535
      %s537 = sphi 0, %s535
      %s538 = sphi 0, %s537
      %s552 = sphi 0, %s538
      %s556 = sphi 0, %s556
      %s558 = sphi 0, %s556
      %s559 = sphi 0, %s558
      %s573 = sphi 0, %s559
      %s579 = sphi 0, %s581
      %s582 = sphi 0, %s579
      %s583 = sphi 0, %s582
      %s599 = sphi 0, %s583
      %s605 = sphi 0, %s607
      %s608 = sphi 0, %s605
      %s609 = sphi 0, %s608
      %s625 = sphi 0, %s609
    $region4: #{t5_decoder_forward.1} parent=1 // loop_header_branch
      %40 = sbr.rel (%p38) target = $region8
    $region5: #{t5_decoder_forward.1} parent=1 // loop_body
      %s42 = ssub.s32 %s37, 1
      %s43 = ssub.s32 %s37, 2
      %s44 = sadd.s32 %s37, 1
      %s46 = sadd.s32 %s45, 1
      %p49 = scmp.eq.s32.totalorder %s37, 1
      %p50 = scmp.ne.s32.totalorder %s45, %s47
      %p51 = scmp.eq.s32.totalorder %s37, 0
      %p52 = por %p50, %p51
      %p53 = scmp.ne.s32.totalorder %s45, %s47
      %p54 = scmp.eq.s32.totalorder %s42, 1
      %p55 = por %p53, %p54
      %p56 = scmp.ne.s32.totalorder %s47, %s48
      %p57 = scmp.eq.s32.totalorder %s42, 0
      %p58 = por %p56, %p57
      %p59 = scmp.ne.s32.totalorder %s47, %s48
      %p60 = scmp.eq.s32.totalorder %s43, 1
      %p61 = por %p59, %p60
      %p63 = scmp.ne.s32.totalorder %s48, %s62
      %p64 = scmp.eq.s32.totalorder %s43, 0
      %p65 = por %p63, %p64
      %s67 = sadd.s32 %s66, 1
      %p70 = scmp.eq.s32.totalorder %s37, 1
      %p71 = scmp.ne.s32.totalorder %s66, %s68
      %p72 = scmp.eq.s32.totalorder %s37, 0
      %p73 = por %p71, %p72
      %p74 = scmp.ne.s32.totalorder %s66, %s68
      %p75 = scmp.eq.s32.totalorder %s42, 1
      %p76 = por %p74, %p75
      %p77 = scmp.ne.s32.totalorder %s68, %s69
      %p78 = scmp.eq.s32.totalorder %s42, 0
      %p79 = por %p77, %p78
      %p80 = scmp.ne.s32.totalorder %s68, %s69
      %p81 = scmp.eq.s32.totalorder %s43, 1
      %p82 = por %p80, %p81
      %p84 = scmp.ne.s32.totalorder %s69, %s83
      %p85 = scmp.eq.s32.totalorder %s43, 0
      %p86 = por %p84, %p85
      %s88 = sadd.s32 %s87, 1
      %p91 = scmp.eq.s32.totalorder %s37, 1
      %p92 = scmp.ne.s32.totalorder %s87, %s89
      %p93 = scmp.eq.s32.totalorder %s37, 0
      %p94 = por %p92, %p93
      %p95 = scmp.ne.s32.totalorder %s87, %s89
      %p96 = scmp.eq.s32.totalorder %s42, 1
      %p97 = por %p95, %p96
      %p98 = scmp.ne.s32.totalorder %s89, %s90
      %p99 = scmp.eq.s32.totalorder %s42, 0
      %p100 = por %p98, %p99
      %p101 = scmp.ne.s32.totalorder %s89, %s90
      %p102 = scmp.eq.s32.totalorder %s43, 1
      %p103 = por %p101, %p102
      %p105 = scmp.ne.s32.totalorder %s90, %s104
      %p106 = scmp.eq.s32.totalorder %s43, 0
      %p107 = por %p105, %p106
      %s109 = sadd.s32 %s108, 1
      %p112 = scmp.eq.s32.totalorder %s37, 1
      %p113 = scmp.ne.s32.totalorder %s108, %s110
      %p114 = scmp.eq.s32.totalorder %s37, 0
      %p115 = por %p113, %p114
      %p116 = scmp.ne.s32.totalorder %s108, %s110
      %p117 = scmp.eq.s32.totalorder %s42, 1
      %p118 = por %p116, %p117
      %p119 = scmp.ne.s32.totalorder %s110, %s111
      %p120 = scmp.eq.s32.totalorder %s42, 0
      %p121 = por %p119, %p120
      %p122 = scmp.ne.s32.totalorder %s110, %s111
      %p123 = scmp.eq.s32.totalorder %s43, 1
      %p124 = por %p122, %p123
      %p126 = scmp.ne.s32.totalorder %s111, %s125
      %p127 = scmp.eq.s32.totalorder %s43, 0
      %p128 = por %p126, %p127
      %s129 = ssub.s32 %s37, %s44
      %p130 = scmp.eq.s32.totalorder %s129, 0
      %s132 = sadd.s32 %s131, 1
      %s133 = scalar_select %p130, %s131, %s132
      %p136 = pneg %p130
      %p137 = scmp.eq.s32.totalorder %s37, 1
      %p138 = por %p136, %p137
      %p139 = scmp.ne.s32.totalorder %s131, %s134
      %p140 = scmp.eq.s32.totalorder %s37, 0
      %p141 = por %p139, %p140
      %p142 = scmp.ne.s32.totalorder %s131, %s134
      %p143 = scmp.eq.s32.totalorder %s42, 1
      %p144 = por %p142, %p143
      %p145 = scmp.ne.s32.totalorder %s134, %s135
      %p146 = scmp.eq.s32.totalorder %s42, 0
      %p147 = por %p145, %p146
      %p148 = scmp.ne.s32.totalorder %s134, %s135
      %p149 = scmp.eq.s32.totalorder %s43, 1
      %p150 = por %p148, %p149
      %p152 = scmp.ne.s32.totalorder %s135, %s151
      %p153 = scmp.eq.s32.totalorder %s43, 0
      %p154 = por %p152, %p153
      %s155 = ssub.s32 %s37, %s44
      %p156 = scmp.eq.s32.totalorder %s155, 0
      %s158 = sadd.s32 %s157, 1
      %s159 = scalar_select %p156, %s157, %s158
      %p162 = pneg %p156
      %p163 = scmp.eq.s32.totalorder %s37, 1
      %p164 = por %p162, %p163
      %p165 = scmp.ne.s32.totalorder %s157, %s160
      %p166 = scmp.eq.s32.totalorder %s37, 0
      %p167 = por %p165, %p166
      %p168 = scmp.ne.s32.totalorder %s157, %s160
      %p169 = scmp.eq.s32.totalorder %s42, 1
      %p170 = por %p168, %p169
      %p171 = scmp.ne.s32.totalorder %s160, %s161
      %p172 = scmp.eq.s32.totalorder %s42, 0
      %p173 = por %p171, %p172
      %p174 = scmp.ne.s32.totalorder %s160, %s161
      %p175 = scmp.eq.s32.totalorder %s43, 1
      %p176 = por %p174, %p175
      %p178 = scmp.ne.s32.totalorder %s161, %s177
      %p179 = scmp.eq.s32.totalorder %s43, 0
      %p180 = por %p178, %p179
      %s181 = ssub.s32 %s37, %s44
      %p182 = scmp.eq.s32.totalorder %s181, 0
      %s184 = sadd.s32 %s183, 1
      %s185 = scalar_select %p182, %s183, %s184
      %p188 = pneg %p182
      %p189 = scmp.eq.s32.totalorder %s37, 1
      %p190 = por %p188, %p189
      %p191 = scmp.ne.s32.totalorder %s183, %s186
      %p192 = scmp.eq.s32.totalorder %s37, 0
      %p193 = por %p191, %p192
      %p194 = scmp.ne.s32.totalorder %s183, %s186
      %p195 = scmp.eq.s32.totalorder %s42, 1
      %p196 = por %p194, %p195
      %p197 = scmp.ne.s32.totalorder %s186, %s187
      %p198 = scmp.eq.s32.totalorder %s42, 0
      %p199 = por %p197, %p198
      %p200 = scmp.ne.s32.totalorder %s186, %s187
      %p201 = scmp.eq.s32.totalorder %s43, 1
      %p202 = por %p200, %p201
      %p204 = scmp.ne.s32.totalorder %s187, %s203
      %p205 = scmp.eq.s32.totalorder %s43, 0
      %p206 = por %p204, %p205
      %s207 = ssub.s32 %s37, %s44
      %p208 = scmp.eq.s32.totalorder %s207, 0
      %s210 = sadd.s32 %s209, 1
      %s211 = scalar_select %p208, %s209, %s210
      %p214 = pneg %p208
      %p215 = scmp.eq.s32.totalorder %s37, 1
      %p216 = por %p214, %p215
      %p217 = scmp.ne.s32.totalorder %s209, %s212
      %p218 = scmp.eq.s32.totalorder %s37, 0
      %p219 = por %p217, %p218
      %p220 = scmp.ne.s32.totalorder %s209, %s212
      %p221 = scmp.eq.s32.totalorder %s42, 1
      %p222 = por %p220, %p221
      %p223 = scmp.ne.s32.totalorder %s212, %s213
      %p224 = scmp.eq.s32.totalorder %s42, 0
      %p225 = por %p223, %p224
      %p226 = scmp.ne.s32.totalorder %s212, %s213
      %p227 = scmp.eq.s32.totalorder %s43, 1
      %p228 = por %p226, %p227
      %p230 = scmp.ne.s32.totalorder %s213, %s229
      %p231 = scmp.eq.s32.totalorder %s43, 0
      %p232 = por %p230, %p231
      %s233 = ssub.s32 %s37, %s44
      %p234 = scmp.eq.s32.totalorder %s233, 0
      %s236 = sadd.s32 %s235, 1
      %s237 = scalar_select %p234, %s235, %s236
      %p240 = pneg %p234
      %p241 = scmp.eq.s32.totalorder %s37, 1
      %p242 = por %p240, %p241
      %p243 = scmp.ne.s32.totalorder %s235, %s238
      %p244 = scmp.eq.s32.totalorder %s37, 0
      %p245 = por %p243, %p244
      %p246 = scmp.ne.s32.totalorder %s235, %s238
      %p247 = scmp.eq.s32.totalorder %s42, 1
      %p248 = por %p246, %p247
      %p249 = scmp.ne.s32.totalorder %s238, %s239
      %p250 = scmp.eq.s32.totalorder %s42, 0
      %p251 = por %p249, %p250
      %p252 = scmp.ne.s32.totalorder %s238, %s239
      %p253 = scmp.eq.s32.totalorder %s43, 1
      %p254 = por %p252, %p253
      %p256 = scmp.ne.s32.totalorder %s239, %s255
      %p257 = scmp.eq.s32.totalorder %s43, 0
      %p258 = por %p256, %p257
      %s259 = ssub.s32 %s37, %s44
      %p260 = scmp.eq.s32.totalorder %s259, 0
      %s262 = sadd.s32 %s261, 1
      %s263 = scalar_select %p260, %s261, %s262
      %p266 = pneg %p260
      %p267 = scmp.eq.s32.totalorder %s37, 1
      %p268 = por %p266, %p267
      %p269 = scmp.ne.s32.totalorder %s261, %s264
      %p270 = scmp.eq.s32.totalorder %s37, 0
      %p271 = por %p269, %p270
      %p272 = scmp.ne.s32.totalorder %s261, %s264
      %p273 = scmp.eq.s32.totalorder %s42, 1
      %p274 = por %p272, %p273
      %p275 = scmp.ne.s32.totalorder %s264, %s265
      %p276 = scmp.eq.s32.totalorder %s42, 0
      %p277 = por %p275, %p276
      %p278 = scmp.ne.s32.totalorder %s264, %s265
      %p279 = scmp.eq.s32.totalorder %s43, 1
      %p280 = por %p278, %p279
      %p282 = scmp.ne.s32.totalorder %s265, %s281
      %p283 = scmp.eq.s32.totalorder %s43, 0
      %p284 = por %p282, %p283
      %s285 = ssub.s32 %s37, %s44
      %p286 = scmp.eq.s32.totalorder %s285, 0
      %s288 = sadd.s32 %s287, 1
      %s289 = scalar_select %p286, %s287, %s288
      %p292 = pneg %p286
      %p293 = scmp.eq.s32.totalorder %s37, 1
      %p294 = por %p292, %p293
      %p295 = scmp.ne.s32.totalorder %s287, %s290
      %p296 = scmp.eq.s32.totalorder %s37, 0
      %p297 = por %p295, %p296
      %p298 = scmp.ne.s32.totalorder %s287, %s290
      %p299 = scmp.eq.s32.totalorder %s42, 1
      %p300 = por %p298, %p299
      %p301 = scmp.ne.s32.totalorder %s290, %s291
      %p302 = scmp.eq.s32.totalorder %s42, 0
      %p303 = por %p301, %p302
      %p304 = scmp.ne.s32.totalorder %s290, %s291
      %p305 = scmp.eq.s32.totalorder %s43, 1
      %p306 = por %p304, %p305
      %p308 = scmp.ne.s32.totalorder %s291, %s307
      %p309 = scmp.eq.s32.totalorder %s43, 0
      %p310 = por %p308, %p309
      %s311 = ssub.s32 %s37, %s44
      %p312 = scmp.eq.s32.totalorder %s311, 0
      %s314 = sadd.s32 %s313, 1
      %s315 = scalar_select %p312, %s313, %s314
      %p318 = pneg %p312
      %p319 = scmp.eq.s32.totalorder %s37, 1
      %p320 = por %p318, %p319
      %p321 = scmp.ne.s32.totalorder %s313, %s316
      %p322 = scmp.eq.s32.totalorder %s37, 0
      %p323 = por %p321, %p322
      %p324 = scmp.ne.s32.totalorder %s313, %s316
      %p325 = scmp.eq.s32.totalorder %s42, 1
      %p326 = por %p324, %p325
      %p327 = scmp.ne.s32.totalorder %s316, %s317
      %p328 = scmp.eq.s32.totalorder %s42, 0
      %p329 = por %p327, %p328
      %p330 = scmp.ne.s32.totalorder %s316, %s317
      %p331 = scmp.eq.s32.totalorder %s43, 1
      %p332 = por %p330, %p331
      %p334 = scmp.ne.s32.totalorder %s317, %s333
      %p335 = scmp.eq.s32.totalorder %s43, 0
      %p336 = por %p334, %p335
      %s337 = ssub.s32 %s37, %s44
      %p338 = scmp.eq.s32.totalorder %s337, 0
      %s340 = sadd.s32 %s339, 1
      %s341 = scalar_select %p338, %s339, %s340
      %p344 = pneg %p338
      %p345 = scmp.eq.s32.totalorder %s37, 1
      %p346 = por %p344, %p345
      %p347 = scmp.ne.s32.totalorder %s339, %s342
      %p348 = scmp.eq.s32.totalorder %s37, 0
      %p349 = por %p347, %p348
      %p350 = scmp.ne.s32.totalorder %s339, %s342
      %p351 = scmp.eq.s32.totalorder %s42, 1
      %p352 = por %p350, %p351
      %p353 = scmp.ne.s32.totalorder %s342, %s343
      %p354 = scmp.eq.s32.totalorder %s42, 0
      %p355 = por %p353, %p354
      %p356 = scmp.ne.s32.totalorder %s342, %s343
      %p357 = scmp.eq.s32.totalorder %s43, 1
      %p358 = por %p356, %p357
      %p360 = scmp.ne.s32.totalorder %s343, %s359
      %p361 = scmp.eq.s32.totalorder %s43, 0
      %p362 = por %p360, %p361
      %s363 = ssub.s32 %s37, %s44
      %p364 = scmp.eq.s32.totalorder %s363, 0
      %s366 = sadd.s32 %s365, 1
      %s367 = scalar_select %p364, %s365, %s366
      %p370 = pneg %p364
      %p371 = scmp.eq.s32.totalorder %s37, 1
      %p372 = por %p370, %p371
      %p373 = scmp.ne.s32.totalorder %s365, %s368
      %p374 = scmp.eq.s32.totalorder %s37, 0
      %p375 = por %p373, %p374
      %p376 = scmp.ne.s32.totalorder %s365, %s368
      %p377 = scmp.eq.s32.totalorder %s42, 1
      %p378 = por %p376, %p377
      %p379 = scmp.ne.s32.totalorder %s368, %s369
      %p380 = scmp.eq.s32.totalorder %s42, 0
      %p381 = por %p379, %p380
      %p382 = scmp.ne.s32.totalorder %s368, %s369
      %p383 = scmp.eq.s32.totalorder %s43, 1
      %p384 = por %p382, %p383
      %p386 = scmp.ne.s32.totalorder %s369, %s385
      %p387 = scmp.eq.s32.totalorder %s43, 0
      %p388 = por %p386, %p387
      %s389 = ssub.s32 %s37, %s44
      %p390 = scmp.eq.s32.totalorder %s389, 0
      %s392 = sadd.s32 %s391, 1
      %s393 = scalar_select %p390, %s391, %s392
      %p396 = pneg %p390
      %p397 = scmp.eq.s32.totalorder %s37, 1
      %p398 = por %p396, %p397
      %p399 = scmp.ne.s32.totalorder %s391, %s394
      %p400 = scmp.eq.s32.totalorder %s37, 0
      %p401 = por %p399, %p400
      %p402 = scmp.ne.s32.totalorder %s391, %s394
      %p403 = scmp.eq.s32.totalorder %s42, 1
      %p404 = por %p402, %p403
      %p405 = scmp.ne.s32.totalorder %s394, %s395
      %p406 = scmp.eq.s32.totalorder %s42, 0
      %p407 = por %p405, %p406
      %p408 = scmp.ne.s32.totalorder %s394, %s395
      %p409 = scmp.eq.s32.totalorder %s43, 1
      %p410 = por %p408, %p409
      %p412 = scmp.ne.s32.totalorder %s395, %s411
      %p413 = scmp.eq.s32.totalorder %s43, 0
      %p414 = por %p412, %p413
      %s415 = ssub.s32 %s37, %s44
      %p416 = scmp.eq.s32.totalorder %s415, 0
      %s418 = sadd.s32 %s417, 1
      %s419 = scalar_select %p416, %s417, %s418
      %p422 = pneg %p416
      %p423 = scmp.eq.s32.totalorder %s37, 1
      %p424 = por %p422, %p423
      %p425 = scmp.ne.s32.totalorder %s417, %s420
      %p426 = scmp.eq.s32.totalorder %s37, 0
      %p427 = por %p425, %p426
      %p428 = scmp.ne.s32.totalorder %s417, %s420
      %p429 = scmp.eq.s32.totalorder %s42, 1
      %p430 = por %p428, %p429
      %p431 = scmp.ne.s32.totalorder %s420, %s421
      %p432 = scmp.eq.s32.totalorder %s42, 0
      %p433 = por %p431, %p432
      %p434 = scmp.ne.s32.totalorder %s420, %s421
      %p435 = scmp.eq.s32.totalorder %s43, 1
      %p436 = por %p434, %p435
      %p438 = scmp.ne.s32.totalorder %s421, %s437
      %p439 = scmp.eq.s32.totalorder %s43, 0
      %p440 = por %p438, %p439
      %s441 = ssub.s32 %s37, %s44
      %p442 = scmp.eq.s32.totalorder %s441, 0
      %s444 = sadd.s32 %s443, 1
      %s445 = scalar_select %p442, %s443, %s444
      %p448 = pneg %p442
      %p449 = scmp.eq.s32.totalorder %s37, 1
      %p450 = por %p448, %p449
      %p451 = scmp.ne.s32.totalorder %s443, %s446
      %p452 = scmp.eq.s32.totalorder %s37, 0
      %p453 = por %p451, %p452
      %p454 = scmp.ne.s32.totalorder %s443, %s446
      %p455 = scmp.eq.s32.totalorder %s42, 1
      %p456 = por %p454, %p455
      %p457 = scmp.ne.s32.totalorder %s446, %s447
      %p458 = scmp.eq.s32.totalorder %s42, 0
      %p459 = por %p457, %p458
      %p460 = scmp.ne.s32.totalorder %s446, %s447
      %p461 = scmp.eq.s32.totalorder %s43, 1
      %p462 = por %p460, %p461
      %p464 = scmp.ne.s32.totalorder %s447, %s463
      %p465 = scmp.eq.s32.totalorder %s43, 0
      %p466 = por %p464, %p465
      %s467 = ssub.s32 %s37, %s44
      %p468 = scmp.eq.s32.totalorder %s467, 0
      %s470 = sadd.s32 %s469, 1
      %s471 = scalar_select %p468, %s469, %s470
      %p474 = pneg %p468
      %p475 = scmp.eq.s32.totalorder %s37, 1
      %p476 = por %p474, %p475
      %p477 = scmp.ne.s32.totalorder %s469, %s472
      %p478 = scmp.eq.s32.totalorder %s37, 0
      %p479 = por %p477, %p478
      %p480 = scmp.ne.s32.totalorder %s469, %s472
      %p481 = scmp.eq.s32.totalorder %s42, 1
      %p482 = por %p480, %p481
      %p483 = scmp.ne.s32.totalorder %s472, %s473
      %p484 = scmp.eq.s32.totalorder %s42, 0
      %p485 = por %p483, %p484
      %p486 = scmp.ne.s32.totalorder %s472, %s473
      %p487 = scmp.eq.s32.totalorder %s43, 1
      %p488 = por %p486, %p487
      %p490 = scmp.ne.s32.totalorder %s473, %s489
      %p491 = scmp.eq.s32.totalorder %s43, 0
      %p492 = por %p490, %p491
      %s494 = sadd.s32 %s493, 1
      %p497 = scmp.eq.s32.totalorder %s37, 1
      %p498 = scmp.ne.s32.totalorder %s493, %s495
      %p499 = scmp.eq.s32.totalorder %s37, 0
      %p500 = por %p498, %p499
      %p501 = scmp.ne.s32.totalorder %s493, %s495
      %p502 = scmp.eq.s32.totalorder %s42, 1
      %p503 = por %p501, %p502
      %p504 = scmp.ne.s32.totalorder %s495, %s496
      %p505 = scmp.eq.s32.totalorder %s42, 0
      %p506 = por %p504, %p505
      %p507 = scmp.ne.s32.totalorder %s495, %s496
      %p508 = scmp.eq.s32.totalorder %s43, 1
      %p509 = por %p507, %p508
      %p511 = scmp.ne.s32.totalorder %s496, %s510
      %p512 = scmp.eq.s32.totalorder %s43, 0
      %p513 = por %p511, %p512
      %s515 = sadd.s32 %s514, 1
      %p518 = scmp.eq.s32.totalorder %s37, 1
      %p519 = scmp.ne.s32.totalorder %s514, %s516
      %p520 = scmp.eq.s32.totalorder %s37, 0
      %p521 = por %p519, %p520
      %p522 = scmp.ne.s32.totalorder %s514, %s516
      %p523 = scmp.eq.s32.totalorder %s42, 1
      %p524 = por %p522, %p523
      %p525 = scmp.ne.s32.totalorder %s516, %s517
      %p526 = scmp.eq.s32.totalorder %s42, 0
      %p527 = por %p525, %p526
      %p528 = scmp.ne.s32.totalorder %s516, %s517
      %p529 = scmp.eq.s32.totalorder %s43, 1
      %p530 = por %p528, %p529
      %p532 = scmp.ne.s32.totalorder %s517, %s531
      %p533 = scmp.eq.s32.totalorder %s43, 0
      %p534 = por %p532, %p533
      %s536 = sadd.s32 %s535, 1
      %p539 = scmp.eq.s32.totalorder %s37, 1
      %p540 = scmp.ne.s32.totalorder %s535, %s537
      %p541 = scmp.eq.s32.totalorder %s37, 0
      %p542 = por %p540, %p541
      %p543 = scmp.ne.s32.totalorder %s535, %s537
      %p544 = scmp.eq.s32.totalorder %s42, 1
      %p545 = por %p543, %p544
      %p546 = scmp.ne.s32.totalorder %s537, %s538
      %p547 = scmp.eq.s32.totalorder %s42, 0
      %p548 = por %p546, %p547
      %p549 = scmp.ne.s32.totalorder %s537, %s538
      %p550 = scmp.eq.s32.totalorder %s43, 1
      %p551 = por %p549, %p550
      %p553 = scmp.ne.s32.totalorder %s538, %s552
      %p554 = scmp.eq.s32.totalorder %s43, 0
      %p555 = por %p553, %p554
      %s557 = sadd.s32 %s556, 1
      %p560 = scmp.eq.s32.totalorder %s37, 1
      %p561 = scmp.ne.s32.totalorder %s556, %s558
      %p562 = scmp.eq.s32.totalorder %s37, 0
      %p563 = por %p561, %p562
      %p564 = scmp.ne.s32.totalorder %s556, %s558
      %p565 = scmp.eq.s32.totalorder %s42, 1
      %p566 = por %p564, %p565
      %p567 = scmp.ne.s32.totalorder %s558, %s559
      %p568 = scmp.eq.s32.totalorder %s42, 0
      %p569 = por %p567, %p568
      %p570 = scmp.ne.s32.totalorder %s558, %s559
      %p571 = scmp.eq.s32.totalorder %s43, 1
      %p572 = por %p570, %p571
      %p574 = scmp.ne.s32.totalorder %s559, %s573
      %p575 = scmp.eq.s32.totalorder %s43, 0
      %p576 = por %p574, %p575
      %s577 = ssub.s32 %s37, %s44
      %p578 = scmp.eq.s32.totalorder %s577, 0
      %s580 = sadd.s32 %s579, 1
      %s581 = scalar_select %p578, %s579, %s580
      %p584 = pneg %p578
      %p585 = scmp.eq.s32.totalorder %s37, 1
      %p586 = por %p584, %p585
      %p587 = scmp.ne.s32.totalorder %s579, %s582
      %p588 = scmp.eq.s32.totalorder %s37, 0
      %p589 = por %p587, %p588
      %p590 = scmp.ne.s32.totalorder %s579, %s582
      %p591 = scmp.eq.s32.totalorder %s42, 1
      %p592 = por %p590, %p591
      %p593 = scmp.ne.s32.totalorder %s582, %s583
      %p594 = scmp.eq.s32.totalorder %s42, 0
      %p595 = por %p593, %p594
      %p596 = scmp.ne.s32.totalorder %s582, %s583
      %p597 = scmp.eq.s32.totalorder %s43, 1
      %p598 = por %p596, %p597
      %p600 = scmp.ne.s32.totalorder %s583, %s599
      %p601 = scmp.eq.s32.totalorder %s43, 0
      %p602 = por %p600, %p601
      %s603 = ssub.s32 %s37, %s44
      %p604 = scmp.eq.s32.totalorder %s603, 0
      %s606 = sadd.s32 %s605, 1
      %s607 = scalar_select %p604, %s605, %s606
      %p610 = pneg %p604
      %p611 = scmp.eq.s32.totalorder %s37, 1
      %p612 = por %p610, %p611
      %p613 = scmp.ne.s32.totalorder %s605, %s608
      %p614 = scmp.eq.s32.totalorder %s37, 0
      %p615 = por %p613, %p614
      %p616 = scmp.ne.s32.totalorder %s605, %s608
      %p617 = scmp.eq.s32.totalorder %s42, 1
      %p618 = por %p616, %p617
      %p619 = scmp.ne.s32.totalorder %s608, %s609
      %p620 = scmp.eq.s32.totalorder %s42, 0
      %p621 = por %p619, %p620
      %p622 = scmp.ne.s32.totalorder %s608, %s609
      %p623 = scmp.eq.s32.totalorder %s43, 1
      %p624 = por %p622, %p623
      %p626 = scmp.ne.s32.totalorder %s609, %s625
      %p627 = scmp.eq.s32.totalorder %s43, 0
      %p628 = por %p626, %p627
      %p629 = scmp.le.s32.totalorder 1, %s37
      %p630 = scmp.lt.s32.totalorder %s37, 3
      %p631 = pnand %p629, %p630
      %p632 = pneg %p631
      // Predicated region
      $region9: #{t5_decoder_forward.1} parent=5 // pred_check
        _
      $region10: #{t5_decoder_forward.1} parent=5 // pred_check_branch
        %634 = sbr.rel (%p631) target = $region12
      $region11: #{t5_decoder_forward.1} parent=5 // pred_region
        %s635 = ssub.s32 %s37, 1
        // Predicated region
        $region13: #{t5_decoder_forward.1} parent=11 // pred_check
          %p636 = pneg %p58
        $region14: #{t5_decoder_forward.1} parent=11 // pred_check_branch
          %638 = sbr.rel (%p636) target = $region16
        $region15: #{t5_decoder_forward.1} parent=11 // pred_region
          _
        $region16: #{t5_decoder_forward.1} parent=11 // pred_fallthru
          _
        // Predicated region
        $region17: #{t5_decoder_forward.1} parent=11 // pred_check
          %p639 = pneg %p79
        $region18: #{t5_decoder_forward.1} parent=11 // pred_check_branch
          %641 = sbr.rel (%p639) target = $region20
        $region19: #{t5_decoder_forward.1} parent=11 // pred_region
          _
        $region20: #{t5_decoder_forward.1} parent=11 // pred_fallthru
          _
        // Predicated region
        $region21: #{t5_decoder_forward.1} parent=11 // pred_check
          %p642 = pneg %p100
        $region22: #{t5_decoder_forward.1} parent=11 // pred_check_branch
          %644 = sbr.rel (%p642) target = $region24
        $region23: #{t5_decoder_forward.1} parent=11 // pred_region
          _
        $region24: #{t5_decoder_forward.1} parent=11 // pred_fallthru
          _
        // Predicated region
        $region25: #{t5_decoder_forward.1} parent=11 // pred_check
          %p645 = pneg %p121
        $region26: #{t5_decoder_forward.1} parent=11 // pred_check_branch
          %647 = sbr.rel (%p645) target = $region28
        $region27: #{t5_decoder_forward.1} parent=11 // pred_region
          _
        $region28: #{t5_decoder_forward.1} parent=11 // pred_fallthru
          _
        // Predicated region
        $region29: #{t5_decoder_forward.1} parent=11 // pred_check
          %p648 = pneg %p506
        $region30: #{t5_decoder_forward.1} parent=11 // pred_check_branch
          %650 = sbr.rel (%p648) target = $region32
        $region31: #{t5_decoder_forward.1} parent=11 // pred_region
          _
        $region32: #{t5_decoder_forward.1} parent=11 // pred_fallthru
          _
        // Predicated region
        $region33: #{t5_decoder_forward.1} parent=11 // pred_check
          %p651 = pneg %p527
        $region34: #{t5_decoder_forward.1} parent=11 // pred_check_branch
          %653 = sbr.rel (%p651) target = $region36
        $region35: #{t5_decoder_forward.1} parent=11 // pred_region
          _
        $region36: #{t5_decoder_forward.1} parent=11 // pred_fallthru
          _
        // Predicated region
        $region37: #{t5_decoder_forward.1} parent=11 // pred_check
          %p654 = pneg %p548
        $region38: #{t5_decoder_forward.1} parent=11 // pred_check_branch
          %656 = sbr.rel (%p654) target = $region40
        $region39: #{t5_decoder_forward.1} parent=11 // pred_region
          _
        $region40: #{t5_decoder_forward.1} parent=11 // pred_fallthru
          _
      $region12: #{t5_decoder_forward.1} parent=5 // pred_fallthru
        _
      %p657 = scmp.lt.s32.totalorder %s37, 2
      // Predicated region
      $region41: #{t5_decoder_forward.1} parent=5 // pred_check
        %p658 = pneg %p657
      $region42: #{t5_decoder_forward.1} parent=5 // pred_check_branch
        %660 = sbr.rel (%p658) target = $region44
      $region43: #{t5_decoder_forward.1} parent=5 // pred_region
        // Predicated region
        $region45: #{t5_decoder_forward.1} parent=43 // pred_check
          %p661 = pneg %p141
        $region46: #{t5_decoder_forward.1} parent=43 // pred_check_branch
          %663 = sbr.rel (%p661) target = $region48
        $region47: #{t5_decoder_forward.1} parent=43 // pred_region
          %p664 = scmp.lt.s32.totalorder %s37, 1
          %s665 = scalar_select %p664, %s37, 1
          %s666 = smul.addr %s665, 4
          %s667 = smul.addr %s666, 8
          %s668 = scalar_lea.vmem %s4, %s667
        $region48: #{t5_decoder_forward.1} parent=43 // pred_fallthru
          _
        // Predicated region
        $region49: #{t5_decoder_forward.1} parent=43 // pred_check
          %p669 = pneg %p167
        $region50: #{t5_decoder_forward.1} parent=43 // pred_check_branch
          %671 = sbr.rel (%p669) target = $region52
        $region51: #{t5_decoder_forward.1} parent=43 // pred_region
          %p672 = scmp.lt.s32.totalorder %s37, 1
          %s673 = scalar_select %p672, %s37, 1
          %s674 = scalar_lea.vmem %s5, %s673
        $region52: #{t5_decoder_forward.1} parent=43 // pred_fallthru
          _
        // Predicated region
        $region53: #{t5_decoder_forward.1} parent=43 // pred_check
          %p675 = pneg %p193
        $region54: #{t5_decoder_forward.1} parent=43 // pred_check_branch
          %677 = sbr.rel (%p675) target = $region56
        $region55: #{t5_decoder_forward.1} parent=43 // pred_region
          %p678 = scmp.lt.s32.totalorder %s37, 1
          %s679 = scalar_select %p678, %s37, 1
          %s680 = scalar_lea.vmem %s6, %s679
        $region56: #{t5_decoder_forward.1} parent=43 // pred_fallthru
          _
        // Predicated region
        $region57: #{t5_decoder_forward.1} parent=43 // pred_check
          %p681 = pneg %p219
        $region58: #{t5_decoder_forward.1} parent=43 // pred_check_branch
          %683 = sbr.rel (%p681) target = $region60
        $region59: #{t5_decoder_forward.1} parent=43 // pred_region
          %p684 = scmp.lt.s32.totalorder %s37, 1
          %s685 = scalar_select %p684, %s37, 1
          %s686 = scalar_lea.vmem %s7, %s685
        $region60: #{t5_decoder_forward.1} parent=43 // pred_fallthru
          _
        // Predicated region
        $region61: #{t5_decoder_forward.1} parent=43 // pred_check
          %p687 = pneg %p245
        $region62: #{t5_decoder_forward.1} parent=43 // pred_check_branch
          %689 = sbr.rel (%p687) target = $region64
        $region63: #{t5_decoder_forward.1} parent=43 // pred_region
          %p690 = scmp.lt.s32.totalorder %s37, 1
          %s691 = scalar_select %p690, %s37, 1
          %s692 = smul.addr %s691, 16
          %s693 = smul.addr %s692, 8
          %s694 = scalar_lea.vmem %s8, %s693
        $region64: #{t5_decoder_forward.1} parent=43 // pred_fallthru
          _
        // Predicated region
        $region65: #{t5_decoder_forward.1} parent=43 // pred_check
          %p695 = pneg %p271
        $region66: #{t5_decoder_forward.1} parent=43 // pred_check_branch
          %697 = sbr.rel (%p695) target = $region68
        $region67: #{t5_decoder_forward.1} parent=43 // pred_region
          %p698 = scmp.lt.s32.totalorder %s37, 1
          %s699 = scalar_select %p698, %s37, 1
          %s700 = smul.addr %s699, 16
          %s701 = smul.addr %s700, 8
          %s702 = scalar_lea.vmem %s9, %s701
        $region68: #{t5_decoder_forward.1} parent=43 // pred_fallthru
          _
        // Predicated region
        $region69: #{t5_decoder_forward.1} parent=43 // pred_check
          %p703 = pneg %p297
        $region70: #{t5_decoder_forward.1} parent=43 // pred_check_branch
          %705 = sbr.rel (%p703) target = $region72
        $region71: #{t5_decoder_forward.1} parent=43 // pred_region
          %p706 = scmp.lt.s32.totalorder %s37, 1
          %s707 = scalar_select %p706, %s37, 1
          %s708 = smul.addr %s707, 16
          %s709 = smul.addr %s708, 8
          %s710 = scalar_lea.vmem %s10, %s709
        $region72: #{t5_decoder_forward.1} parent=43 // pred_fallthru
          _
        // Predicated region
        $region73: #{t5_decoder_forward.1} parent=43 // pred_check
          %p711 = pneg %p323
        $region74: #{t5_decoder_forward.1} parent=43 // pred_check_branch
          %713 = sbr.rel (%p711) target = $region76
        $region75: #{t5_decoder_forward.1} parent=43 // pred_region
          %p714 = scmp.lt.s32.totalorder %s37, 1
          %s715 = scalar_select %p714, %s37, 1
          %s716 = smul.addr %s715, 4
          %s717 = smul.addr %s716, 8
          %s718 = scalar_lea.vmem %s11, %s717
        $region76: #{t5_decoder_forward.1} parent=43 // pred_fallthru
          _
        // Predicated region
        $region77: #{t5_decoder_forward.1} parent=43 // pred_check
          %p719 = pneg %p349
        $region78: #{t5_decoder_forward.1} parent=43 // pred_check_branch
          %721 = sbr.rel (%p719) target = $region80
        $region79: #{t5_decoder_forward.1} parent=43 // pred_region
          %p722 = scmp.lt.s32.totalorder %s37, 1
          %s723 = scalar_select %p722, %s37, 1
          %s724 = smul.addr %s723, 16
          %s725 = smul.addr %s724, 8
          %s726 = scalar_lea.vmem %s12, %s725
        $region80: #{t5_decoder_forward.1} parent=43 // pred_fallthru
          _
        // Predicated region
        $region81: #{t5_decoder_forward.1} parent=43 // pred_check
          %p727 = pneg %p375
        $region82: #{t5_decoder_forward.1} parent=43 // pred_check_branch
          %729 = sbr.rel (%p727) target = $region84
        $region83: #{t5_decoder_forward.1} parent=43 // pred_region
          %p730 = scmp.lt.s32.totalorder %s37, 1
          %s731 = scalar_select %p730, %s37, 1
          %s732 = smul.addr %s731, 16
          %s733 = smul.addr %s732, 8
          %s734 = scalar_lea.vmem %s13, %s733
        $region84: #{t5_decoder_forward.1} parent=43 // pred_fallthru
          _
        // Predicated region
        $region85: #{t5_decoder_forward.1} parent=43 // pred_check
          %p735 = pneg %p401
        $region86: #{t5_decoder_forward.1} parent=43 // pred_check_branch
          %737 = sbr.rel (%p735) target = $region88
        $region87: #{t5_decoder_forward.1} parent=43 // pred_region
          %s738 = sand.u32 %s391, 1
          %s739 = scalar_lea.sflag [#allocation4], %s738
          %s740 = sand.u32 %s391, 1
          %s741 = smul.addr %s740, 128
          %s742 = scalar_lea.vmem [#allocation3], %s741
          %744 = vsyncadd %s739, 0
          %s745 = smul.addr %s37, 16
          %s746 = smul.addr %s745, 8
          %s747 = scalar_lea.hbm %s14, %s746
          %s748 = sshll.u32 %s747, 4
          %s749 = int_to_ptr.hbm [resolvable:$true] %s748
          %s750 = sshll.u32 %s742, 4
          %s751 = int_to_ptr.vmem [resolvable:$true] %s750
          %756 = dma.hbm_to_vmem [thread:$0]  %s749, 2048, %s751, %s739, 128, 128, 8
        $region88: #{t5_decoder_forward.1} parent=43 // pred_fallthru
          _
        // Predicated region
        $region89: #{t5_decoder_forward.1} parent=43 // pred_check
          %p757 = pneg %p427
        $region90: #{t5_decoder_forward.1} parent=43 // pred_check_branch
          %759 = sbr.rel (%p757) target = $region92
        $region91: #{t5_decoder_forward.1} parent=43 // pred_region
          %p760 = scmp.lt.s32.totalorder %s37, 1
          %s761 = scalar_select %p760, %s37, 1
          %s762 = smul.addr %s761, 4
          %s763 = smul.addr %s762, 8
          %s764 = scalar_lea.vmem %s15, %s763
        $region92: #{t5_decoder_forward.1} parent=43 // pred_fallthru
          _
        // Predicated region
        $region93: #{t5_decoder_forward.1} parent=43 // pred_check
          %p765 = pneg %p453
        $region94: #{t5_decoder_forward.1} parent=43 // pred_check_branch
          %767 = sbr.rel (%p765) target = $region96
        $region95: #{t5_decoder_forward.1} parent=43 // pred_region
          %s768 = sand.u32 %s443, 1
          %s769 = scalar_lea.sflag [#allocation7], %s768
          %s770 = sand.u32 %s443, 1
          %s771 = smul.addr %s770, 32
          %s772 = scalar_lea.vmem [#allocation6], %s771
          %774 = vsyncadd %s769, 0
          %s775 = smul.addr %s37, 4
          %s776 = smul.addr %s775, 8
          %s777 = scalar_lea.hbm %s16, %s776
          %s778 = sshll.u32 %s777, 4
          %s779 = int_to_ptr.hbm [resolvable:$true] %s778
          %s780 = sshll.u32 %s772, 4
          %s781 = int_to_ptr.vmem [resolvable:$true] %s780
          %786 = dma.hbm_to_vmem [thread:$0]  %s779, 512, %s781, %s769, 128, 128, 8
        $region96: #{t5_decoder_forward.1} parent=43 // pred_fallthru
          _
        // Predicated region
        $region97: #{t5_decoder_forward.1} parent=43 // pred_check
          %p787 = pneg %p479
        $region98: #{t5_decoder_forward.1} parent=43 // pred_check_branch
          %789 = sbr.rel (%p787) target = $region100
        $region99: #{t5_decoder_forward.1} parent=43 // pred_region
          %p790 = scmp.lt.s32.totalorder %s37, 1
          %s791 = scalar_select %p790, %s37, 1
          %s792 = smul.addr %s791, 8
          %s793 = smul.addr %s792, 8
          %s794 = scalar_lea.vmem %s17, %s793
        $region100: #{t5_decoder_forward.1} parent=43 // pred_fallthru
          _
      $region44: #{t5_decoder_forward.1} parent=5 // pred_fallthru
        _
      %p795 = scmp.le.s32.totalorder 1, %s37
      %p796 = scmp.lt.s32.totalorder %s37, 3
      %p797 = pnand %p795, %p796
      %p798 = pneg %p797
      // Predicated region
      $region101: #{t5_decoder_forward.1} parent=5 // pred_check
        _
      $region102: #{t5_decoder_forward.1} parent=5 // pred_check_branch
        %800 = sbr.rel (%p797) target = $region104
      $region103: #{t5_decoder_forward.1} parent=5 // pred_region
        %s801 = ssub.s32 %s37, 1
        %s802 = sand.u32 %s394, 1
        %s803 = scalar_lea.sflag [#allocation4], %s802
        %s804 = sand.u32 %s394, 1
        %s805 = smul.addr %s804, 128
        %s806 = scalar_lea.vmem [#allocation3], %s805
        // Predicated region
        $region105: #{t5_decoder_forward.1} parent=103 // pred_check
          %p807 = pneg %p407
        $region106: #{t5_decoder_forward.1} parent=103 // pred_check_branch
          %809 = sbr.rel (%p807) target = $region108
        $region107: #{t5_decoder_forward.1} parent=103 // pred_region
          %811 = dma.done %s803, 2048
        $region108: #{t5_decoder_forward.1} parent=103 // pred_fallthru
          _
        %s812 = sand.u32 %s446, 1
        %s813 = scalar_lea.sflag [#allocation7], %s812
        %s814 = sand.u32 %s446, 1
        %s815 = smul.addr %s814, 32
        %s816 = scalar_lea.vmem [#allocation6], %s815
        // Predicated region
        $region109: #{t5_decoder_forward.1} parent=103 // pred_check
          %p817 = pneg %p459
        $region110: #{t5_decoder_forward.1} parent=103 // pred_check_branch
          %819 = sbr.rel (%p817) target = $region112
        $region111: #{t5_decoder_forward.1} parent=103 // pred_region
          %821 = dma.done %s813, 512
        $region112: #{t5_decoder_forward.1} parent=103 // pred_fallthru
          _
        %p822 = pneg %p58
        %p823 = pneg %p55
        %p824 = pneg %p79
        %p825 = pneg %p76
        %p826 = pneg %p100
        %p827 = pneg %p97
        %p828 = pneg %p121
        %p829 = pneg %p118
        %p830 = scmp.lt.s32.totalorder %s42, 1
        %s831 = scalar_select %p830, %s42, 1
        %s832 = smul.addr %s831, 4
        %s833 = smul.addr %s832, 8
        %s834 = scalar_lea.vmem %s4, %s833
        %p835 = pneg %p147
        %p836 = pneg %p144
        %p837 = scmp.lt.s32.totalorder %s42, 1
        %s838 = scalar_select %p837, %s42, 1
        %s839 = scalar_lea.vmem %s5, %s838
        %p840 = pneg %p173
        %p841 = pneg %p170
        %p842 = scmp.lt.s32.totalorder %s42, 1
        %s843 = scalar_select %p842, %s42, 1
        %s844 = scalar_lea.vmem %s6, %s843
        %p845 = pneg %p199
        %p846 = pneg %p196
        %p847 = scmp.lt.s32.totalorder %s42, 1
        %s848 = scalar_select %p847, %s42, 1
        %s849 = scalar_lea.vmem %s7, %s848
        %p850 = pneg %p225
        %p851 = pneg %p222
        %p852 = scmp.lt.s32.totalorder %s42, 1
        %s853 = scalar_select %p852, %s42, 1
        %s854 = smul.addr %s853, 16
        %s855 = smul.addr %s854, 8
        %s856 = scalar_lea.vmem %s8, %s855
        %p857 = pneg %p251
        %p858 = pneg %p248
        %p859 = scmp.lt.s32.totalorder %s42, 1
        %s860 = scalar_select %p859, %s42, 1
        %s861 = smul.addr %s860, 16
        %s862 = smul.addr %s861, 8
        %s863 = scalar_lea.vmem %s9, %s862
        %p864 = pneg %p277
        %p865 = pneg %p274
        %p866 = scmp.lt.s32.totalorder %s42, 1
        %s867 = scalar_select %p866, %s42, 1
        %s868 = smul.addr %s867, 16
        %s869 = smul.addr %s868, 8
        %s870 = scalar_lea.vmem %s10, %s869
        %p871 = pneg %p303
        %p872 = pneg %p300
        %p873 = scmp.lt.s32.totalorder %s42, 1
        %s874 = scalar_select %p873, %s42, 1
        %s875 = smul.addr %s874, 4
        %s876 = smul.addr %s875, 8
        %s877 = scalar_lea.vmem %s11, %s876
        %p878 = pneg %p329
        %p879 = pneg %p326
        %p880 = scmp.lt.s32.totalorder %s42, 1
        %s881 = scalar_select %p880, %s42, 1
        %s882 = smul.addr %s881, 16
        %s883 = smul.addr %s882, 8
        %s884 = scalar_lea.vmem %s12, %s883
        %p885 = pneg %p355
        %p886 = pneg %p352
        %p887 = scmp.lt.s32.totalorder %s42, 1
        %s888 = scalar_select %p887, %s42, 1
        %s889 = smul.addr %s888, 16
        %s890 = smul.addr %s889, 8
        %s891 = scalar_lea.vmem %s13, %s890
        %p892 = pneg %p381
        %p893 = pneg %p378
        %s894 = sand.u32 %s394, 1
        %s895 = scalar_lea.sflag [#allocation4], %s894
        %s896 = sand.u32 %s394, 1
        %s897 = smul.addr %s896, 128
        %s898 = scalar_lea.vmem [#allocation3], %s897
        %p899 = pneg %p407
        %p900 = pneg %p404
        %p901 = scmp.lt.s32.totalorder %s42, 1
        %s902 = scalar_select %p901, %s42, 1
        %s903 = smul.addr %s902, 4
        %s904 = smul.addr %s903, 8
        %s905 = scalar_lea.vmem %s15, %s904
        %p906 = pneg %p433
        %p907 = pneg %p430
        %s908 = sand.u32 %s446, 1
        %s909 = scalar_lea.sflag [#allocation7], %s908
        %s910 = sand.u32 %s446, 1
        %s911 = smul.addr %s910, 32
        %s912 = scalar_lea.vmem [#allocation6], %s911
        %p913 = pneg %p459
        %p914 = pneg %p456
        %p915 = scmp.lt.s32.totalorder %s42, 1
        %s916 = scalar_select %p915, %s42, 1
        %s917 = smul.addr %s916, 8
        %s918 = smul.addr %s917, 8
        %s919 = scalar_lea.vmem %s17, %s918
        %p920 = pneg %p485
        %p921 = pneg %p482
        %p922 = pneg %p506
        %p923 = pneg %p503
        %p924 = pneg %p527
        %p925 = pneg %p524
        %p926 = pneg %p548
        %p927 = pneg %p545
        %p928 = pneg %p569
        %p929 = pneg %p566
        %p930 = pneg %p595
        %p931 = pneg %p592
        %s932 = smul.u32 2, %s42
        %p933 = scmp.lt.s32.totalorder %s932, 3
        %s934 = scalar_select %p933, %s932, 3
        %s935 = smul.addr %s934, 4
        %s936 = smul.addr %s935, 8
        %s937 = scalar_lea.vmem %s22, %s936
        %p938 = pneg %p621
        %p939 = pneg %p618
        %s940 = smul.u32 2, %s42
        %p941 = scmp.lt.s32.totalorder %s940, 3
        %s942 = scalar_select %p941, %s940, 3
        %s943 = smul.addr %s942, 4
        %s944 = smul.addr %s943, 8
        %s945 = scalar_lea.vmem %s23, %s944
        %p946 = scmp.lt.s32.totalorder %s42, 1
        %s947 = scalar_select %p946, %s42, 1
        %s948 = smul.addr %s947, 4
        %s949 = smul.addr %s948, 8
        %s950 = scalar_lea.vmem %s4, %s949
        %p951 = scmp.lt.s32.totalorder %s42, 1
        %s952 = scalar_select %p951, %s42, 1
        %s953 = scalar_lea.vmem %s5, %s952
        %p954 = scmp.lt.s32.totalorder %s42, 1
        %s955 = scalar_select %p954, %s42, 1
        %s956 = scalar_lea.vmem %s6, %s955
        %p957 = scmp.lt.s32.totalorder %s42, 1
        %s958 = scalar_select %p957, %s42, 1
        %s959 = scalar_lea.vmem %s7, %s958
        %p960 = scmp.lt.s32.totalorder %s42, 1
        %s961 = scalar_select %p960, %s42, 1
        %s962 = smul.addr %s961, 16
        %s963 = smul.addr %s962, 8
        %s964 = scalar_lea.vmem %s8, %s963
        %p965 = scmp.lt.s32.totalorder %s42, 1
        %s966 = scalar_select %p965, %s42, 1
        %s967 = smul.addr %s966, 16
        %s968 = smul.addr %s967, 8
        %s969 = scalar_lea.vmem %s9, %s968
        %p970 = scmp.lt.s32.totalorder %s42, 1
        %s971 = scalar_select %p970, %s42, 1
        %s972 = smul.addr %s971, 16
        %s973 = smul.addr %s972, 8
        %s974 = scalar_lea.vmem %s10, %s973
        %p975 = scmp.lt.s32.totalorder %s42, 1
        %s976 = scalar_select %p975, %s42, 1
        %s977 = smul.addr %s976, 4
        %s978 = smul.addr %s977, 8
        %s979 = scalar_lea.vmem %s11, %s978
        %p980 = scmp.lt.s32.totalorder %s42, 1
        %s981 = scalar_select %p980, %s42, 1
        %s982 = smul.addr %s981, 16
        %s983 = smul.addr %s982, 8
        %s984 = scalar_lea.vmem %s12, %s983
        %p985 = scmp.lt.s32.totalorder %s42, 1
        %s986 = scalar_select %p985, %s42, 1
        %s987 = smul.addr %s986, 16
        %s988 = smul.addr %s987, 8
        %s989 = scalar_lea.vmem %s13, %s988
        %p990 = scmp.lt.s32.totalorder %s42, 1
        %s991 = scalar_select %p990, %s42, 1
        %s992 = smul.addr %s991, 4
        %s993 = smul.addr %s992, 8
        %s994 = scalar_lea.vmem %s15, %s993
        %p995 = scmp.lt.s32.totalorder %s42, 1
        %s996 = scalar_select %p995, %s42, 1
        %s997 = smul.addr %s996, 8
        %s998 = smul.addr %s997, 8
        %s999 = scalar_lea.vmem %s17, %s998
        %s1000 = smul.u32 2, %s42
        %p1001 = scmp.lt.s32.totalorder %s1000, 3
        %s1002 = scalar_select %p1001, %s1000, 3
        %s1003 = smul.addr %s1002, 4
        %s1004 = smul.addr %s1003, 8
        %s1005 = scalar_lea.vmem %s22, %s1004
        %s1006 = smul.u32 2, %s42
        %s1007 = smul.u32 2, %s42
        %p1008 = scmp.lt.s32.totalorder %s1007, 3
        %s1009 = scalar_select %p1008, %s1007, 3
        %s1010 = smul.addr %s1009, 4
        %s1011 = smul.addr %s1010, 8
        %s1012 = scalar_lea.vmem %s23, %s1011
        %s1013 = smul.u32 2, %s42
        %p1014 = scmp.eq.s32.totalorder %s42, 0
        // Predicated region
        $region113: #{t5_decoder_forward.1} parent=103 // pred_check
          %p1015 = pneg %p1014
        $region114: #{t5_decoder_forward.1} parent=103 // pred_check_branch
          %1017 = sbr.rel (%p1015) target = $region116
        $region115: #{t5_decoder_forward.1} parent=103 // pred_region
          %v1018 = vld [vmem:[%s0] sm:$0xff]
          %v1019 = vld [vmem:[%s0 + $0x8] sm:$0xff]
          %vm1020 = vcmask 261120
          %1021 = vst.msk [vmem:[#allocation2] sm:$0xff] %vm1020, %v1018
          %1022 = vst.msk [vmem:[#allocation2 + $0x8] sm:$0xff] %vm1020, %v1019
        $region116: #{t5_decoder_forward.1} parent=103 // pred_fallthru
          _
        %v1023 = vld [vmem:[%s953] sm:$0x1]
        %v1024 = vld [vmem:[%s956] sm:$0x1]
        %v1025 = vld [vmem:[%s959] sm:$0x1]
        %v1026 = vld [vmem:[%s964] sm:$0xff]
        %v1027 = vld [vmem:[%s964 + $0x8] sm:$0xff]
        %v1028 = vld [vmem:[%s964 + $0x10] sm:$0xff]
        %v1029 = vld [vmem:[%s964 + $0x18] sm:$0xff]
        %v1030 = vld [vmem:[%s964 + $0x20] sm:$0xff]
        %v1031 = vld [vmem:[%s964 + $0x28] sm:$0xff]
        %v1032 = vld [vmem:[%s964 + $0x30] sm:$0xff]
        %v1033 = vld [vmem:[%s964 + $0x38] sm:$0xff]
        %v1034 = vld [vmem:[%s964 + $0x40] sm:$0xff]
        %v1035 = vld [vmem:[%s964 + $0x48] sm:$0xff]
        %v1036 = vld [vmem:[%s964 + $0x50] sm:$0xff]
        %v1037 = vld [vmem:[%s964 + $0x58] sm:$0xff]
        %v1038 = vld [vmem:[%s964 + $0x60] sm:$0xff]
        %v1039 = vld [vmem:[%s964 + $0x68] sm:$0xff]
        %v1040 = vld [vmem:[%s964 + $0x70] sm:$0xff]
        %v1041 = vld [vmem:[%s964 + $0x78] sm:$0xff]
        %v1042 = vld [vmem:[%s969] sm:$0xff]
        %v1043 = vld [vmem:[%s969 + $0x8] sm:$0xff]
        %v1044 = vld [vmem:[%s969 + $0x10] sm:$0xff]
        %v1045 = vld [vmem:[%s969 + $0x18] sm:$0xff]
        %v1046 = vld [vmem:[%s969 + $0x20] sm:$0xff]
        %v1047 = vld [vmem:[%s969 + $0x28] sm:$0xff]
        %v1048 = vld [vmem:[%s969 + $0x30] sm:$0xff]
        %v1049 = vld [vmem:[%s969 + $0x38] sm:$0xff]
        %v1050 = vld [vmem:[%s969 + $0x40] sm:$0xff]
        %v1051 = vld [vmem:[%s969 + $0x48] sm:$0xff]
        %v1052 = vld [vmem:[%s969 + $0x50] sm:$0xff]
        %v1053 = vld [vmem:[%s969 + $0x58] sm:$0xff]
        %v1054 = vld [vmem:[%s969 + $0x60] sm:$0xff]
        %v1055 = vld [vmem:[%s969 + $0x68] sm:$0xff]
        %v1056 = vld [vmem:[%s969 + $0x70] sm:$0xff]
        %v1057 = vld [vmem:[%s969 + $0x78] sm:$0xff]
        %v1058 = vld [vmem:[%s974] sm:$0xff]
        %v1059 = vld [vmem:[%s974 + $0x8] sm:$0xff]
        %v1060 = vld [vmem:[%s974 + $0x10] sm:$0xff]
        %v1061 = vld [vmem:[%s974 + $0x18] sm:$0xff]
        %v1062 = vld [vmem:[%s974 + $0x20] sm:$0xff]
        %v1063 = vld [vmem:[%s974 + $0x28] sm:$0xff]
        %v1064 = vld [vmem:[%s974 + $0x30] sm:$0xff]
        %v1065 = vld [vmem:[%s974 + $0x38] sm:$0xff]
        %v1066 = vld [vmem:[%s974 + $0x40] sm:$0xff]
        %v1067 = vld [vmem:[%s974 + $0x48] sm:$0xff]
        %v1068 = vld [vmem:[%s974 + $0x50] sm:$0xff]
        %v1069 = vld [vmem:[%s974 + $0x58] sm:$0xff]
        %v1070 = vld [vmem:[%s974 + $0x60] sm:$0xff]
        %v1071 = vld [vmem:[%s974 + $0x68] sm:$0xff]
        %v1072 = vld [vmem:[%s974 + $0x70] sm:$0xff]
        %v1073 = vld [vmem:[%s974 + $0x78] sm:$0xff]
        %v1074 = vld [vmem:[%s979] sm:$0xff]
        %v1075 = vld [vmem:[%s979 + $0x8] sm:$0xff]
        %v1076 = vld [vmem:[%s979 + $0x10] sm:$0xff]
        %v1077 = vld [vmem:[%s979 + $0x18] sm:$0xff]
        %v1078 = vld [vmem:[%s984] sm:$0xff]
        %v1079 = vld [vmem:[%s984 + $0x8] sm:$0xff]
        %v1080 = vld [vmem:[%s984 + $0x10] sm:$0xff]
        %v1081 = vld [vmem:[%s984 + $0x18] sm:$0xff]
        %v1082 = vld [vmem:[%s984 + $0x20] sm:$0xff]
        %v1083 = vld [vmem:[%s984 + $0x28] sm:$0xff]
        %v1084 = vld [vmem:[%s984 + $0x30] sm:$0xff]
        %v1085 = vld [vmem:[%s984 + $0x38] sm:$0xff]
        %v1086 = vld [vmem:[%s984 + $0x40] sm:$0xff]
        %v1087 = vld [vmem:[%s984 + $0x48] sm:$0xff]
        %v1088 = vld [vmem:[%s984 + $0x50] sm:$0xff]
        %v1089 = vld [vmem:[%s984 + $0x58] sm:$0xff]
        %v1090 = vld [vmem:[%s984 + $0x60] sm:$0xff]
        %v1091 = vld [vmem:[%s984 + $0x68] sm:$0xff]
        %v1092 = vld [vmem:[%s984 + $0x70] sm:$0xff]
        %v1093 = vld [vmem:[%s984 + $0x78] sm:$0xff]
        %v1094 = vld [vmem:[%s989] sm:$0xff]
        %v1095 = vld [vmem:[%s989 + $0x8] sm:$0xff]
        %v1096 = vld [vmem:[%s989 + $0x10] sm:$0xff]
        %v1097 = vld [vmem:[%s989 + $0x18] sm:$0xff]
        %v1098 = vld [vmem:[%s989 + $0x20] sm:$0xff]
        %v1099 = vld [vmem:[%s989 + $0x28] sm:$0xff]
        %v1100 = vld [vmem:[%s989 + $0x30] sm:$0xff]
        %v1101 = vld [vmem:[%s989 + $0x38] sm:$0xff]
        %v1102 = vld [vmem:[%s989 + $0x40] sm:$0xff]
        %v1103 = vld [vmem:[%s989 + $0x48] sm:$0xff]
        %v1104 = vld [vmem:[%s989 + $0x50] sm:$0xff]
        %v1105 = vld [vmem:[%s989 + $0x58] sm:$0xff]
        %v1106 = vld [vmem:[%s989 + $0x60] sm:$0xff]
        %v1107 = vld [vmem:[%s989 + $0x68] sm:$0xff]
        %v1108 = vld [vmem:[%s989 + $0x70] sm:$0xff]
        %v1109 = vld [vmem:[%s989 + $0x78] sm:$0xff]
        %v1110 = vld [vmem:[%s806] sm:$0xff]
        %v1111 = vld [vmem:[%s806 + $0x8] sm:$0xff]
        %v1112 = vld [vmem:[%s806 + $0x10] sm:$0xff]
        %v1113 = vld [vmem:[%s806 + $0x18] sm:$0xff]
        %v1114 = vld [vmem:[%s806 + $0x20] sm:$0xff]
        %v1115 = vld [vmem:[%s806 + $0x28] sm:$0xff]
        %v1116 = vld [vmem:[%s806 + $0x30] sm:$0xff]
        %v1117 = vld [vmem:[%s806 + $0x38] sm:$0xff]
        %v1118 = vld [vmem:[%s806 + $0x40] sm:$0xff]
        %v1119 = vld [vmem:[%s806 + $0x48] sm:$0xff]
        %v1120 = vld [vmem:[%s806 + $0x50] sm:$0xff]
        %v1121 = vld [vmem:[%s806 + $0x58] sm:$0xff]
        %v1122 = vld [vmem:[%s806 + $0x60] sm:$0xff]
        %v1123 = vld [vmem:[%s806 + $0x68] sm:$0xff]
        %v1124 = vld [vmem:[%s806 + $0x70] sm:$0xff]
        %v1125 = vld [vmem:[%s806 + $0x78] sm:$0xff]
        %v1126 = vld [vmem:[%s994] sm:$0xff]
        %v1127 = vld [vmem:[%s994 + $0x8] sm:$0xff]
        %v1128 = vld [vmem:[%s994 + $0x10] sm:$0xff]
        %v1129 = vld [vmem:[%s994 + $0x18] sm:$0xff]
        %v1130 = vld [vmem:[%s816] sm:$0xff]
        %v1131 = vld [vmem:[%s816 + $0x8] sm:$0xff]
        %v1132 = vld [vmem:[%s816 + $0x10] sm:$0xff]
        %v1133 = vld [vmem:[%s816 + $0x18] sm:$0xff]
        %v1134 = vld [vmem:[%s999] sm:$0xff]
        %v1135 = vld [vmem:[%s999 + $0x8] sm:$0xff]
        %v1136 = vld [vmem:[%s999 + $0x10] sm:$0xff]
        %v1137 = vld [vmem:[%s999 + $0x18] sm:$0xff]
        %v1138 = vld [vmem:[%s999 + $0x20] sm:$0xff]
        %v1139 = vld [vmem:[%s999 + $0x28] sm:$0xff]
        %v1140 = vld [vmem:[%s999 + $0x30] sm:$0xff]
        %v1141 = vld [vmem:[%s999 + $0x38] sm:$0xff]
        %v1142 = vld [vmem:[%s950] sm:$0xff]
        %v1143 = vld [vmem:[%s950 + $0x8] sm:$0xff]
        %v1144 = vld [vmem:[%s950 + $0x10] sm:$0xff]
        %v1145 = vld [vmem:[%s950 + $0x18] sm:$0xff]
        %v1146 = vld [vmem:[#allocation2] sm:$0xff]
        %v1147 = vmul.f32 %v1146, %v1146
        %vm1148 = vcmask 261120
        %v1149 = vsel %vm1148, %v1147, 0.0
        %1150 = vadd.xlane.f32.xlu0 %v1149
        %v1151 = vpop.xlane.xlu0 %1150
        %v1152 = vrcp.pop 32.0
        %v1153 = vmul.f32 32.0, %v1152
        %v1154 = vsub.f32 1.0, %v1153
        %v1155 = vmul.f32 %v1152, %v1154
        %v1156 = vadd.f32 %v1152, %v1155
        %vm1157 = vweird.f32 %v1152
        %v1158 = vsel %vm1157, %v1152, %v1156
        %v1159 = vmul.f32 %v1151, %v1158
        %v1160 = vadd.f32 %v1159, 1e-06
        %v1161 = vrsqrt.pop %v1160
        %v1162 = vmul.f32 %v1161, %v1160
        %v1163 = vmul.f32 %v1162, %v1161
        %v1164 = vmul.f32 0.5, %v1163
        %v1165 = vsub.f32 1.5, %v1164
        %v1166 = vmul.f32 %v1161, %v1165
        %vm1167 = vweird.f32 %v1160
        %vm1168 = vweird.f32 %v1161
        %vm1169 = vmor %vm1167, %vm1168
        %v1170 = vsel %vm1169, %v1161, %v1166
        %v1171 = vmul.f32 %v1146, %v1170
        %v1173 = vperm.slane %v1023, 0
        %v1175 = vmul.f32 %v1171, %v1173
        %v1176 = vld [vmem:[%s2] sm:$0xff]
        %v1177 = vadd.f32 %v1142, %v1176
        %v1178 = vadd.f32 %v1143, %v1176
        %v1179 = vadd.f32 %v1144, %v1176
        %v1180 = vadd.f32 %v1145, %v1176
        %v1182 = vsel %vm1148, %v1175, 0
        %1184 = vmatpush.msra.mxu0 0.0
        %1185 = vmatpush.msra.mxu0 0.0
        %1186 = vmatpush.msra.mxu0 0.0
        %1187 = vmatpush.msra.mxu0 0.0
        %1188 = vmatpush.msra.mxu0 0.0
        %1189 = vmatpush.msra.mxu0 0.0
        %1190 = vmatpush.msra.mxu0 0.0
        %1191 = vmatpush.msra.mxu0 0.0
        %1192 = vmatpush.msra.mxu0 0.0
        %1193 = vmatpush.msra.mxu0 0.0
        %1194 = vmatpush.msra.mxu0 0.0
        %1195 = vmatpush.msra.mxu0 0.0
        %1196 = vmatpush.msra.mxu0 %v1029
        %1197 = vmatpush.msra.mxu0 %v1028
        %1198 = vmatpush.msra.mxu0 %v1027
        %1199 = vmatpush.msra.mxu0 %v1026
        %1200 = vmatmul.f32.gmra.mxu0 %v1182
        %v1201 = vpop.f32.mrf.mxu0
        %v1202 = vadd.f32 0.0, %v1201
        %1203 = vdwg.mxu0
        %1204 = vmatpush.msra.mxu0 0.0
        %1205 = vmatpush.msra.mxu0 0.0
        %1206 = vmatpush.msra.mxu0 0.0
        %1207 = vmatpush.msra.mxu0 0.0
        %1208 = vmatpush.msra.mxu0 0.0
        %1209 = vmatpush.msra.mxu0 0.0
        %1210 = vmatpush.msra.mxu0 0.0
        %1211 = vmatpush.msra.mxu0 0.0
        %1212 = vmatpush.msra.mxu0 0.0
        %1213 = vmatpush.msra.mxu0 0.0
        %1214 = vmatpush.msra.mxu0 0.0
        %1215 = vmatpush.msra.mxu0 0.0
        %1216 = vmatpush.msra.mxu0 %v1033
        %1217 = vmatpush.msra.mxu0 %v1032
        %1218 = vmatpush.msra.mxu0 %v1031
        %1219 = vmatpush.msra.mxu0 %v1030
        %1220 = vmatmul.f32.gmra.mxu0 %v1182
        %v1221 = vpop.f32.mrf.mxu0
        %v1222 = vadd.f32 0.0, %v1221
        %1223 = vdwg.mxu0
        %1224 = vmatpush.msra.mxu0 0.0
        %1225 = vmatpush.msra.mxu0 0.0
        %1226 = vmatpush.msra.mxu0 0.0
        %1227 = vmatpush.msra.mxu0 0.0
        %1228 = vmatpush.msra.mxu0 0.0
        %1229 = vmatpush.msra.mxu0 0.0
        %1230 = vmatpush.msra.mxu0 0.0
        %1231 = vmatpush.msra.mxu0 0.0
        %1232 = vmatpush.msra.mxu0 0.0
        %1233 = vmatpush.msra.mxu0 0.0
        %1234 = vmatpush.msra.mxu0 0.0
        %1235 = vmatpush.msra.mxu0 0.0
        %1236 = vmatpush.msra.mxu0 %v1037
        %1237 = vmatpush.msra.mxu0 %v1036
        %1238 = vmatpush.msra.mxu0 %v1035
        %1239 = vmatpush.msra.mxu0 %v1034
        %1240 = vmatmul.f32.gmra.mxu0 %v1182
        %v1241 = vpop.f32.mrf.mxu0
        %v1242 = vadd.f32 0.0, %v1241
        %1243 = vdwg.mxu0
        %1244 = vmatpush.msra.mxu0 0.0
        %1245 = vmatpush.msra.mxu0 0.0
        %1246 = vmatpush.msra.mxu0 0.0
        %1247 = vmatpush.msra.mxu0 0.0
        %1248 = vmatpush.msra.mxu0 0.0
        %1249 = vmatpush.msra.mxu0 0.0
        %1250 = vmatpush.msra.mxu0 0.0
        %1251 = vmatpush.msra.mxu0 0.0
        %1252 = vmatpush.msra.mxu0 0.0
        %1253 = vmatpush.msra.mxu0 0.0
        %1254 = vmatpush.msra.mxu0 0.0
        %1255 = vmatpush.msra.mxu0 0.0
        %1256 = vmatpush.msra.mxu0 %v1041
        %1257 = vmatpush.msra.mxu0 %v1040
        %1258 = vmatpush.msra.mxu0 %v1039
        %1259 = vmatpush.msra.mxu0 %v1038
        %1260 = vmatmul.f32.gmra.mxu0 %v1182
        %v1261 = vpop.f32.mrf.mxu0
        %v1262 = vadd.f32 0.0, %v1261
        %1263 = vdwg.mxu0
        %1264 = vmatpush.msra.mxu0 0.0
        %1265 = vmatpush.msra.mxu0 0.0
        %1266 = vmatpush.msra.mxu0 0.0
        %1267 = vmatpush.msra.mxu0 0.0
        %1268 = vmatpush.msra.mxu0 0.0
        %1269 = vmatpush.msra.mxu0 0.0
        %1270 = vmatpush.msra.mxu0 0.0
        %1271 = vmatpush.msra.mxu0 0.0
        %1272 = vmatpush.msra.mxu0 0.0
        %1273 = vmatpush.msra.mxu0 0.0
        %1274 = vmatpush.msra.mxu0 0.0
        %1275 = vmatpush.msra.mxu0 0.0
        %1276 = vmatpush.msra.mxu0 %v1045
        %1277 = vmatpush.msra.mxu0 %v1044
        %1278 = vmatpush.msra.mxu0 %v1043
        %1279 = vmatpush.msra.mxu0 %v1042
        %1280 = vmatmul.f32.gmra.mxu0 %v1182
        %v1281 = vpop.f32.mrf.mxu0
        %v1282 = vadd.f32 0.0, %v1281
        %1283 = vdwg.mxu0
        %1284 = vmatpush.msra.mxu0 0.0
        %1285 = vmatpush.msra.mxu0 0.0
        %1286 = vmatpush.msra.mxu0 0.0
        %1287 = vmatpush.msra.mxu0 0.0
        %1288 = vmatpush.msra.mxu0 0.0
        %1289 = vmatpush.msra.mxu0 0.0
        %1290 = vmatpush.msra.mxu0 0.0
        %1291 = vmatpush.msra.mxu0 0.0
        %1292 = vmatpush.msra.mxu0 0.0
        %1293 = vmatpush.msra.mxu0 0.0
        %1294 = vmatpush.msra.mxu0 0.0
        %1295 = vmatpush.msra.mxu0 0.0
        %1296 = vmatpush.msra.mxu0 %v1049
        %1297 = vmatpush.msra.mxu0 %v1048
        %1298 = vmatpush.msra.mxu0 %v1047
        %1299 = vmatpush.msra.mxu0 %v1046
        %1300 = vmatmul.f32.gmra.mxu0 %v1182
        %v1301 = vpop.f32.mrf.mxu0
        %v1302 = vadd.f32 0.0, %v1301
        %1303 = vdwg.mxu0
        %1304 = vmatpush.msra.mxu0 0.0
        %1305 = vmatpush.msra.mxu0 0.0
        %1306 = vmatpush.msra.mxu0 0.0
        %1307 = vmatpush.msra.mxu0 0.0
        %1308 = vmatpush.msra.mxu0 0.0
        %1309 = vmatpush.msra.mxu0 0.0
        %1310 = vmatpush.msra.mxu0 0.0
        %1311 = vmatpush.msra.mxu0 0.0
        %1312 = vmatpush.msra.mxu0 0.0
        %1313 = vmatpush.msra.mxu0 0.0
        %1314 = vmatpush.msra.mxu0 0.0
        %1315 = vmatpush.msra.mxu0 0.0
        %1316 = vmatpush.msra.mxu0 %v1053
        %1317 = vmatpush.msra.mxu0 %v1052
        %1318 = vmatpush.msra.mxu0 %v1051
        %1319 = vmatpush.msra.mxu0 %v1050
        %1320 = vmatmul.f32.gmra.mxu0 %v1182
        %v1321 = vpop.f32.mrf.mxu0
        %v1322 = vadd.f32 0.0, %v1321
        %1323 = vdwg.mxu0
        %1324 = vmatpush.msra.mxu0 0.0
        %1325 = vmatpush.msra.mxu0 0.0
        %1326 = vmatpush.msra.mxu0 0.0
        %1327 = vmatpush.msra.mxu0 0.0
        %1328 = vmatpush.msra.mxu0 0.0
        %1329 = vmatpush.msra.mxu0 0.0
        %1330 = vmatpush.msra.mxu0 0.0
        %1331 = vmatpush.msra.mxu0 0.0
        %1332 = vmatpush.msra.mxu0 0.0
        %1333 = vmatpush.msra.mxu0 0.0
        %1334 = vmatpush.msra.mxu0 0.0
        %1335 = vmatpush.msra.mxu0 0.0
        %1336 = vmatpush.msra.mxu0 %v1057
        %1337 = vmatpush.msra.mxu0 %v1056
        %1338 = vmatpush.msra.mxu0 %v1055
        %1339 = vmatpush.msra.mxu0 %v1054
        %1340 = vmatmul.f32.gmra.mxu0 %v1182
        %v1341 = vpop.f32.mrf.mxu0
        %v1342 = vadd.f32 0.0, %v1341
        %1343 = vdwg.mxu0
        %1344 = vmatpush.msra.mxu0 0.0
        %1345 = vmatpush.msra.mxu0 0.0
        %1346 = vmatpush.msra.mxu0 0.0
        %1347 = vmatpush.msra.mxu0 0.0
        %1348 = vmatpush.msra.mxu0 0.0
        %1349 = vmatpush.msra.mxu0 0.0
        %1350 = vmatpush.msra.mxu0 0.0
        %1351 = vmatpush.msra.mxu0 0.0
        %1352 = vmatpush.msra.mxu0 0.0
        %1353 = vmatpush.msra.mxu0 0.0
        %1354 = vmatpush.msra.mxu0 0.0
        %1355 = vmatpush.msra.mxu0 0.0
        %1356 = vmatpush.msra.mxu0 %v1061
        %1357 = vmatpush.msra.mxu0 %v1060
        %1358 = vmatpush.msra.mxu0 %v1059
        %1359 = vmatpush.msra.mxu0 %v1058
        %1360 = vmatmul.f32.gmra.mxu0 %v1182
        %v1361 = vpop.f32.mrf.mxu0
        %v1362 = vadd.f32 0.0, %v1361
        %1363 = vdwg.mxu0
        %1364 = vmatpush.msra.mxu0 0.0
        %1365 = vmatpush.msra.mxu0 0.0
        %1366 = vmatpush.msra.mxu0 0.0
        %1367 = vmatpush.msra.mxu0 0.0
        %1368 = vmatpush.msra.mxu0 0.0
        %1369 = vmatpush.msra.mxu0 0.0
        %1370 = vmatpush.msra.mxu0 0.0
        %1371 = vmatpush.msra.mxu0 0.0
        %1372 = vmatpush.msra.mxu0 0.0
        %1373 = vmatpush.msra.mxu0 0.0
        %1374 = vmatpush.msra.mxu0 0.0
        %1375 = vmatpush.msra.mxu0 0.0
        %1376 = vmatpush.msra.mxu0 %v1065
        %1377 = vmatpush.msra.mxu0 %v1064
        %1378 = vmatpush.msra.mxu0 %v1063
        %1379 = vmatpush.msra.mxu0 %v1062
        %1380 = vmatmul.f32.gmra.mxu0 %v1182
        %v1381 = vpop.f32.mrf.mxu0
        %v1382 = vadd.f32 0.0, %v1381
        %1383 = vdwg.mxu0
        %1384 = vmatpush.msra.mxu0 0.0
        %1385 = vmatpush.msra.mxu0 0.0
        %1386 = vmatpush.msra.mxu0 0.0
        %1387 = vmatpush.msra.mxu0 0.0
        %1388 = vmatpush.msra.mxu0 0.0
        %1389 = vmatpush.msra.mxu0 0.0
        %1390 = vmatpush.msra.mxu0 0.0
        %1391 = vmatpush.msra.mxu0 0.0
        %1392 = vmatpush.msra.mxu0 0.0
        %1393 = vmatpush.msra.mxu0 0.0
        %1394 = vmatpush.msra.mxu0 0.0
        %1395 = vmatpush.msra.mxu0 0.0
        %1396 = vmatpush.msra.mxu0 %v1069
        %1397 = vmatpush.msra.mxu0 %v1068
        %1398 = vmatpush.msra.mxu0 %v1067
        %1399 = vmatpush.msra.mxu0 %v1066
        %1400 = vmatmul.f32.gmra.mxu0 %v1182
        %v1401 = vpop.f32.mrf.mxu0
        %v1402 = vadd.f32 0.0, %v1401
        %1403 = vdwg.mxu0
        %1404 = vmatpush.msra.mxu0 0.0
        %1405 = vmatpush.msra.mxu0 0.0
        %1406 = vmatpush.msra.mxu0 0.0
        %1407 = vmatpush.msra.mxu0 0.0
        %1408 = vmatpush.msra.mxu0 0.0
        %1409 = vmatpush.msra.mxu0 0.0
        %1410 = vmatpush.msra.mxu0 0.0
        %1411 = vmatpush.msra.mxu0 0.0
        %1412 = vmatpush.msra.mxu0 0.0
        %1413 = vmatpush.msra.mxu0 0.0
        %1414 = vmatpush.msra.mxu0 0.0
        %1415 = vmatpush.msra.mxu0 0.0
        %1416 = vmatpush.msra.mxu0 %v1073
        %1417 = vmatpush.msra.mxu0 %v1072
        %1418 = vmatpush.msra.mxu0 %v1071
        %1419 = vmatpush.msra.mxu0 %v1070
        %1420 = vmatmul.f32.gmra.mxu0 %v1182
        %v1421 = vpop.f32.mrf.mxu0
        %v1422 = vadd.f32 0.0, %v1421
        %1423 = vdwg.mxu0
        %vm1424 = vcmask 64512
        %v1426 = vsel %vm1424, %v1202, 0
        %v1429 = vsel %vm1424, %v1282, 0
        %1431 = vmatpush.xpose.msra.mxu0 0.0
        %1432 = vmatpush.xpose.msra.mxu0 0.0
        %1433 = vmatpush.xpose.msra.mxu0 0.0
        %1434 = vmatpush.xpose.msra.mxu0 0.0
        %1435 = vmatpush.xpose.msra.mxu0 0.0
        %1436 = vmatpush.xpose.msra.mxu0 0.0
        %1437 = vmatpush.xpose.msra.mxu0 0.0
        %1438 = vmatpush.xpose.msra.mxu0 0.0
        %1439 = vmatpush.xpose.msra.mxu0 0.0
        %1440 = vmatpush.xpose.msra.mxu0 0.0
        %1441 = vmatpush.xpose.msra.mxu0 0.0
        %1442 = vmatpush.xpose.msra.mxu0 0.0
        %1443 = vmatpush.xpose.msra.mxu0 0.0
        %1444 = vmatpush.xpose.msra.mxu0 0.0
        %1445 = vmatpush.xpose.msra.mxu0 0.0
        %1446 = vmatpush.xpose.msra.mxu0 %v1429
        %1447 = vmatmul.f32.gmra.mxu0 %v1426
        %v1448 = vpop.f32.mrf.mxu0
        %v1449 = vadd.f32 %v1177, %v1448
        %1450 = vdwg.mxu0
        %v1452 = vsel %vm1424, %v1222, 0
        %v1455 = vsel %vm1424, %v1302, 0
        %1457 = vmatpush.xpose.msra.mxu0 0.0
        %1458 = vmatpush.xpose.msra.mxu0 0.0
        %1459 = vmatpush.xpose.msra.mxu0 0.0
        %1460 = vmatpush.xpose.msra.mxu0 0.0
        %1461 = vmatpush.xpose.msra.mxu0 0.0
        %1462 = vmatpush.xpose.msra.mxu0 0.0
        %1463 = vmatpush.xpose.msra.mxu0 0.0
        %1464 = vmatpush.xpose.msra.mxu0 0.0
        %1465 = vmatpush.xpose.msra.mxu0 0.0
        %1466 = vmatpush.xpose.msra.mxu0 0.0
        %1467 = vmatpush.xpose.msra.mxu0 0.0
        %1468 = vmatpush.xpose.msra.mxu0 0.0
        %1469 = vmatpush.xpose.msra.mxu0 0.0
        %1470 = vmatpush.xpose.msra.mxu0 0.0
        %1471 = vmatpush.xpose.msra.mxu0 0.0
        %1472 = vmatpush.xpose.msra.mxu0 %v1455
        %1473 = vmatmul.f32.gmra.mxu0 %v1452
        %v1474 = vpop.f32.mrf.mxu0
        %v1475 = vadd.f32 %v1178, %v1474
        %1476 = vdwg.mxu0
        %v1478 = vsel %vm1424, %v1242, 0
        %v1481 = vsel %vm1424, %v1322, 0
        %1483 = vmatpush.xpose.msra.mxu0 0.0
        %1484 = vmatpush.xpose.msra.mxu0 0.0
        %1485 = vmatpush.xpose.msra.mxu0 0.0
        %1486 = vmatpush.xpose.msra.mxu0 0.0
        %1487 = vmatpush.xpose.msra.mxu0 0.0
        %1488 = vmatpush.xpose.msra.mxu0 0.0
        %1489 = vmatpush.xpose.msra.mxu0 0.0
        %1490 = vmatpush.xpose.msra.mxu0 0.0
        %1491 = vmatpush.xpose.msra.mxu0 0.0
        %1492 = vmatpush.xpose.msra.mxu0 0.0
        %1493 = vmatpush.xpose.msra.mxu0 0.0
        %1494 = vmatpush.xpose.msra.mxu0 0.0
        %1495 = vmatpush.xpose.msra.mxu0 0.0
        %1496 = vmatpush.xpose.msra.mxu0 0.0
        %1497 = vmatpush.xpose.msra.mxu0 0.0
        %1498 = vmatpush.xpose.msra.mxu0 %v1481
        %1499 = vmatmul.f32.gmra.mxu0 %v1478
        %v1500 = vpop.f32.mrf.mxu0
        %v1501 = vadd.f32 %v1179, %v1500
        %1502 = vdwg.mxu0
        %v1504 = vsel %vm1424, %v1262, 0
        %v1507 = vsel %vm1424, %v1342, 0
        %1509 = vmatpush.xpose.msra.mxu0 0.0
        %1510 = vmatpush.xpose.msra.mxu0 0.0
        %1511 = vmatpush.xpose.msra.mxu0 0.0
        %1512 = vmatpush.xpose.msra.mxu0 0.0
        %1513 = vmatpush.xpose.msra.mxu0 0.0
        %1514 = vmatpush.xpose.msra.mxu0 0.0
        %1515 = vmatpush.xpose.msra.mxu0 0.0
        %1516 = vmatpush.xpose.msra.mxu0 0.0
        %1517 = vmatpush.xpose.msra.mxu0 0.0
        %1518 = vmatpush.xpose.msra.mxu0 0.0
        %1519 = vmatpush.xpose.msra.mxu0 0.0
        %1520 = vmatpush.xpose.msra.mxu0 0.0
        %1521 = vmatpush.xpose.msra.mxu0 0.0
        %1522 = vmatpush.xpose.msra.mxu0 0.0
        %1523 = vmatpush.xpose.msra.mxu0 0.0
        %1524 = vmatpush.xpose.msra.mxu0 %v1507
        %1525 = vmatmul.f32.gmra.mxu0 %v1504
        %v1526 = vpop.f32.mrf.mxu0
        %v1527 = vadd.f32 %v1180, %v1526
        %1528 = vdwg.mxu0
        %v1529 = vsel %vm1424, %v1449, -inf
        %1530 = vmax.xlane.f32.xlu0 %v1529
        %v1531 = vpop.xlane.xlu0 %1530
        %v1532 = vsel %vm1424, %v1475, -inf
        %1533 = vmax.xlane.f32.xlu0 %v1532
        %v1534 = vpop.xlane.xlu0 %1533
        %v1535 = vsel %vm1424, %v1501, -inf
        %1536 = vmax.xlane.f32.xlu0 %v1535
        %v1537 = vpop.xlane.xlu0 %1536
        %v1538 = vsel %vm1424, %v1527, -inf
        %1539 = vmax.xlane.f32.xlu0 %v1538
        %v1540 = vpop.xlane.xlu0 %1539
        %v1541 = vsub.f32 %v1449, %v1531
        %v1542 = vsub.f32 %v1475, %v1534
        %v1543 = vsub.f32 %v1501, %v1537
        %v1544 = vsub.f32 %v1527, %v1540
        %v1545 = vmul.f32 %v1541, 1.442695
        %v1546 = vpow.pop %v1545
        %v1547 = vmul.f32 %v1542, 1.442695
        %v1548 = vpow.pop %v1547
        %v1549 = vmul.f32 %v1543, 1.442695
        %v1550 = vpow.pop %v1549
        %v1551 = vmul.f32 %v1544, 1.442695
        %v1552 = vpow.pop %v1551
        %v1553 = vsel %vm1424, %v1546, 0.0
        %1554 = vadd.xlane.f32.xlu0 %v1553
        %v1555 = vpop.xlane.xlu0 %1554
        %v1556 = vsel %vm1424, %v1548, 0.0
        %1557 = vadd.xlane.f32.xlu0 %v1556
        %v1558 = vpop.xlane.xlu0 %1557
        %v1559 = vsel %vm1424, %v1550, 0.0
        %1560 = vadd.xlane.f32.xlu0 %v1559
        %v1561 = vpop.xlane.xlu0 %1560
        %v1562 = vsel %vm1424, %v1552, 0.0
        %1563 = vadd.xlane.f32.xlu0 %v1562
        %v1564 = vpop.xlane.xlu0 %1563
        %v1565 = vrcp.pop %v1555
        %v1566 = vmul.f32 %v1555, %v1565
        %v1567 = vsub.f32 1.0, %v1566
        %v1568 = vmul.f32 %v1565, %v1567
        %v1569 = vadd.f32 %v1565, %v1568
        %vm1570 = vweird.f32 %v1555
        %vm1571 = vweird.f32 %v1565
        %vm1572 = vmor %vm1570, %vm1571
        %v1573 = vsel %vm1572, %v1565, %v1569
        %v1574 = vand.u32 2147483647, %v1555
        %vm1575 = vcmp.eq.f32.partialorder %v1574, 8.507059e+37
        %v1576 = vand.u32 %v1555, 2147483648
        %v1577 = vor.u32 1.1754944e-38, %v1576
        %v1578 = vsel %vm1575, %v1577, %v1573
        %v1579 = vmul.f32 %v1546, %v1578
        %v1580 = vrcp.pop %v1558
        %v1581 = vmul.f32 %v1558, %v1580
        %v1582 = vsub.f32 1.0, %v1581
        %v1583 = vmul.f32 %v1580, %v1582
        %v1584 = vadd.f32 %v1580, %v1583
        %vm1585 = vweird.f32 %v1558
        %vm1586 = vweird.f32 %v1580
        %vm1587 = vmor %vm1585, %vm1586
        %v1588 = vsel %vm1587, %v1580, %v1584
        %v1589 = vand.u32 2147483647, %v1558
        %vm1590 = vcmp.eq.f32.partialorder %v1589, 8.507059e+37
        %v1591 = vand.u32 %v1558, 2147483648
        %v1592 = vor.u32 1.1754944e-38, %v1591
        %v1593 = vsel %vm1590, %v1592, %v1588
        %v1594 = vmul.f32 %v1548, %v1593
        %v1595 = vrcp.pop %v1561
        %v1596 = vmul.f32 %v1561, %v1595
        %v1597 = vsub.f32 1.0, %v1596
        %v1598 = vmul.f32 %v1595, %v1597
        %v1599 = vadd.f32 %v1595, %v1598
        %vm1600 = vweird.f32 %v1561
        %vm1601 = vweird.f32 %v1595
        %vm1602 = vmor %vm1600, %vm1601
        %v1603 = vsel %vm1602, %v1595, %v1599
        %v1604 = vand.u32 2147483647, %v1561
        %vm1605 = vcmp.eq.f32.partialorder %v1604, 8.507059e+37
        %v1606 = vand.u32 %v1561, 2147483648
        %v1607 = vor.u32 1.1754944e-38, %v1606
        %v1608 = vsel %vm1605, %v1607, %v1603
        %v1609 = vmul.f32 %v1550, %v1608
        %v1610 = vrcp.pop %v1564
        %v1611 = vmul.f32 %v1564, %v1610
        %v1612 = vsub.f32 1.0, %v1611
        %v1613 = vmul.f32 %v1610, %v1612
        %v1614 = vadd.f32 %v1610, %v1613
        %vm1615 = vweird.f32 %v1564
        %vm1616 = vweird.f32 %v1610
        %vm1617 = vmor %vm1615, %vm1616
        %v1618 = vsel %vm1617, %v1610, %v1614
        %v1619 = vand.u32 2147483647, %v1564
        %vm1620 = vcmp.eq.f32.partialorder %v1619, 8.507059e+37
        %v1621 = vand.u32 %v1564, 2147483648
        %v1622 = vor.u32 1.1754944e-38, %v1621
        %v1623 = vsel %vm1620, %v1622, %v1618
        %v1624 = vmul.f32 %v1552, %v1623
        %v1626 = vsel %vm1424, %v1579, 0
        %1628 = vmatpush.msra.mxu0 0.0
        %1629 = vmatpush.msra.mxu0 0.0
        %1630 = vmatpush.msra.mxu0 0.0
        %1631 = vmatpush.msra.mxu0 0.0
        %1632 = vmatpush.msra.mxu0 0.0
        %1633 = vmatpush.msra.mxu0 0.0
        %1634 = vmatpush.msra.mxu0 0.0
        %1635 = vmatpush.msra.mxu0 0.0
        %1636 = vmatpush.msra.mxu0 0.0
        %1637 = vmatpush.msra.mxu0 0.0
        %1638 = vmatpush.msra.mxu0 0.0
        %1639 = vmatpush.msra.mxu0 0.0
        %1640 = vmatpush.msra.mxu0 0.0
        %1641 = vmatpush.msra.mxu0 0.0
        %1642 = vmatpush.msra.mxu0 0.0
        %1643 = vmatpush.msra.mxu0 %v1362
        %1644 = vmatmul.f32.gmra.mxu0 %v1626
        %v1645 = vpop.f32.mrf.mxu0
        %v1646 = vadd.f32 0.0, %v1645
        %1647 = vdwg.mxu0
        %v1649 = vsel %vm1424, %v1594, 0
        %1651 = vmatpush.msra.mxu0 0.0
        %1652 = vmatpush.msra.mxu0 0.0
        %1653 = vmatpush.msra.mxu0 0.0
        %1654 = vmatpush.msra.mxu0 0.0
        %1655 = vmatpush.msra.mxu0 0.0
        %1656 = vmatpush.msra.mxu0 0.0
        %1657 = vmatpush.msra.mxu0 0.0
        %1658 = vmatpush.msra.mxu0 0.0
        %1659 = vmatpush.msra.mxu0 0.0
        %1660 = vmatpush.msra.mxu0 0.0
        %1661 = vmatpush.msra.mxu0 0.0
        %1662 = vmatpush.msra.mxu0 0.0
        %1663 = vmatpush.msra.mxu0 0.0
        %1664 = vmatpush.msra.mxu0 0.0
        %1665 = vmatpush.msra.mxu0 0.0
        %1666 = vmatpush.msra.mxu0 %v1382
        %1667 = vmatmul.f32.gmra.mxu0 %v1649
        %v1668 = vpop.f32.mrf.mxu0
        %v1669 = vadd.f32 0.0, %v1668
        %1670 = vdwg.mxu0
        %v1672 = vsel %vm1424, %v1609, 0
        %1674 = vmatpush.msra.mxu0 0.0
        %1675 = vmatpush.msra.mxu0 0.0
        %1676 = vmatpush.msra.mxu0 0.0
        %1677 = vmatpush.msra.mxu0 0.0
        %1678 = vmatpush.msra.mxu0 0.0
        %1679 = vmatpush.msra.mxu0 0.0
        %1680 = vmatpush.msra.mxu0 0.0
        %1681 = vmatpush.msra.mxu0 0.0
        %1682 = vmatpush.msra.mxu0 0.0
        %1683 = vmatpush.msra.mxu0 0.0
        %1684 = vmatpush.msra.mxu0 0.0
        %1685 = vmatpush.msra.mxu0 0.0
        %1686 = vmatpush.msra.mxu0 0.0
        %1687 = vmatpush.msra.mxu0 0.0
        %1688 = vmatpush.msra.mxu0 0.0
        %1689 = vmatpush.msra.mxu0 %v1402
        %1690 = vmatmul.f32.gmra.mxu0 %v1672
        %v1691 = vpop.f32.mrf.mxu0
        %v1692 = vadd.f32 0.0, %v1691
        %1693 = vdwg.mxu0
        %v1695 = vsel %vm1424, %v1624, 0
        %1697 = vmatpush.msra.mxu0 0.0
        %1698 = vmatpush.msra.mxu0 0.0
        %1699 = vmatpush.msra.mxu0 0.0
        %1700 = vmatpush.msra.mxu0 0.0
        %1701 = vmatpush.msra.mxu0 0.0
        %1702 = vmatpush.msra.mxu0 0.0
        %1703 = vmatpush.msra.mxu0 0.0
        %1704 = vmatpush.msra.mxu0 0.0
        %1705 = vmatpush.msra.mxu0 0.0
        %1706 = vmatpush.msra.mxu0 0.0
        %1707 = vmatpush.msra.mxu0 0.0
        %1708 = vmatpush.msra.mxu0 0.0
        %1709 = vmatpush.msra.mxu0 0.0
        %1710 = vmatpush.msra.mxu0 0.0
        %1711 = vmatpush.msra.mxu0 0.0
        %1712 = vmatpush.msra.mxu0 %v1422
        %1713 = vmatmul.f32.gmra.mxu0 %v1695
        %v1714 = vpop.f32.mrf.mxu0
        %v1715 = vadd.f32 0.0, %v1714
        %1716 = vdwg.mxu0
        %v1718 = vsel %vm1424, %v1646, 0
        %1720 = vmatpush.msra.mxu0 0.0
        %1721 = vmatpush.msra.mxu0 0.0
        %1722 = vmatpush.msra.mxu0 0.0
        %1723 = vmatpush.msra.mxu0 0.0
        %1724 = vmatpush.msra.mxu0 0.0
        %1725 = vmatpush.msra.mxu0 0.0
        %1726 = vmatpush.msra.mxu0 0.0
        %1727 = vmatpush.msra.mxu0 0.0
        %1728 = vmatpush.msra.mxu0 0.0
        %1729 = vmatpush.msra.mxu0 0.0
        %1730 = vmatpush.msra.mxu0 0.0
        %1731 = vmatpush.msra.mxu0 0.0
        %1732 = vmatpush.msra.mxu0 0.0
        %1733 = vmatpush.msra.mxu0 0.0
        %1734 = vmatpush.msra.mxu0 0.0
        %1735 = vmatpush.msra.mxu0 %v1074
        %1736 = vmatmul.f32.gmra.mxu0 %v1718
        %v1737 = vpop.f32.mrf.mxu0
        %v1738 = vadd.f32 0.0, %v1737
        %1739 = vdwg.mxu0
        %v1741 = vsel %vm1424, %v1669, 0
        %1743 = vmatpush.msra.mxu0 0.0
        %1744 = vmatpush.msra.mxu0 0.0
        %1745 = vmatpush.msra.mxu0 0.0
        %1746 = vmatpush.msra.mxu0 0.0
        %1747 = vmatpush.msra.mxu0 0.0
        %1748 = vmatpush.msra.mxu0 0.0
        %1749 = vmatpush.msra.mxu0 0.0
        %1750 = vmatpush.msra.mxu0 0.0
        %1751 = vmatpush.msra.mxu0 0.0
        %1752 = vmatpush.msra.mxu0 0.0
        %1753 = vmatpush.msra.mxu0 0.0
        %1754 = vmatpush.msra.mxu0 0.0
        %1755 = vmatpush.msra.mxu0 0.0
        %1756 = vmatpush.msra.mxu0 0.0
        %1757 = vmatpush.msra.mxu0 0.0
        %1758 = vmatpush.msra.mxu0 %v1075
        %1759 = vmatmul.f32.gmra.mxu0 %v1741
        %v1760 = vpop.f32.mrf.mxu0
        %v1761 = vadd.f32 0.0, %v1760
        %1762 = vdwg.mxu0
        %v1764 = vsel %vm1424, %v1692, 0
        %1766 = vmatpush.msra.mxu0 0.0
        %1767 = vmatpush.msra.mxu0 0.0
        %1768 = vmatpush.msra.mxu0 0.0
        %1769 = vmatpush.msra.mxu0 0.0
        %1770 = vmatpush.msra.mxu0 0.0
        %1771 = vmatpush.msra.mxu0 0.0
        %1772 = vmatpush.msra.mxu0 0.0
        %1773 = vmatpush.msra.mxu0 0.0
        %1774 = vmatpush.msra.mxu0 0.0
        %1775 = vmatpush.msra.mxu0 0.0
        %1776 = vmatpush.msra.mxu0 0.0
        %1777 = vmatpush.msra.mxu0 0.0
        %1778 = vmatpush.msra.mxu0 0.0
        %1779 = vmatpush.msra.mxu0 0.0
        %1780 = vmatpush.msra.mxu0 0.0
        %1781 = vmatpush.msra.mxu0 %v1076
        %1782 = vmatmul.f32.gmra.mxu0 %v1764
        %v1783 = vpop.f32.mrf.mxu0
        %v1784 = vadd.f32 0.0, %v1783
        %1785 = vdwg.mxu0
        %v1787 = vsel %vm1424, %v1715, 0
        %1789 = vmatpush.msra.mxu0 0.0
        %1790 = vmatpush.msra.mxu0 0.0
        %1791 = vmatpush.msra.mxu0 0.0
        %1792 = vmatpush.msra.mxu0 0.0
        %1793 = vmatpush.msra.mxu0 0.0
        %1794 = vmatpush.msra.mxu0 0.0
        %1795 = vmatpush.msra.mxu0 0.0
        %1796 = vmatpush.msra.mxu0 0.0
        %1797 = vmatpush.msra.mxu0 0.0
        %1798 = vmatpush.msra.mxu0 0.0
        %1799 = vmatpush.msra.mxu0 0.0
        %1800 = vmatpush.msra.mxu0 0.0
        %1801 = vmatpush.msra.mxu0 0.0
        %1802 = vmatpush.msra.mxu0 0.0
        %1803 = vmatpush.msra.mxu0 0.0
        %1804 = vmatpush.msra.mxu0 %v1077
        %1805 = vmatmul.f32.gmra.mxu0 %v1787
        %v1806 = vpop.f32.mrf.mxu0
        %v1807 = vadd.f32 0.0, %v1806
        %1808 = vdwg.mxu0
        %v1809 = vsel %vm1148, %v1738, 0.0
        %v1810 = vsel %vm1148, %v1761, 0.0
        %v1811 = vadd.f32 %v1809, %v1810
        %v1812 = vsel %vm1148, %v1784, 0.0
        %v1813 = vadd.f32 %v1811, %v1812
        %v1814 = vsel %vm1148, %v1807, 0.0
        %v1815 = vadd.f32 %v1813, %v1814
        %1816 = vst.msk [vmem:[%s1005] sm:$0xff] %vm1424, %v1579
        %1817 = vst.msk [vmem:[%s1005 + $0x8] sm:$0xff] %vm1424, %v1594
        %1818 = vst.msk [vmem:[%s1005 + $0x10] sm:$0xff] %vm1424, %v1609
        %1819 = vst.msk [vmem:[%s1005 + $0x18] sm:$0xff] %vm1424, %v1624
        %v1820 = vadd.f32 %v1146, %v1815
        %v1821 = vmul.f32 %v1820, %v1820
        %v1822 = vsel %vm1148, %v1821, 0.0
        %1823 = vadd.xlane.f32.xlu0 %v1822
        %v1824 = vpop.xlane.xlu0 %1823
        %v1825 = vmul.f32 %v1824, %v1158
        %v1826 = vadd.f32 %v1825, 1e-06
        %v1827 = vrsqrt.pop %v1826
        %v1828 = vmul.f32 %v1827, %v1826
        %v1829 = vmul.f32 %v1828, %v1827
        %v1830 = vmul.f32 0.5, %v1829
        %v1831 = vsub.f32 1.5, %v1830
        %v1832 = vmul.f32 %v1827, %v1831
        %vm1833 = vweird.f32 %v1826
        %vm1834 = vweird.f32 %v1827
        %vm1835 = vmor %vm1833, %vm1834
        %v1836 = vsel %vm1835, %v1827, %v1832
        %v1837 = vmul.f32 %v1820, %v1836
        %v1839 = vperm.slane %v1024, 0
        %v1841 = vmul.f32 %v1837, %v1839
        %v1842 = vld [vmem:[%s1] sm:$0xff]
        %v1843 = vld [vmem:[%s3] sm:$0x1]
        %v1845 = vsel %vm1148, %v1841, 0
        %1847 = vmatpush.msra.mxu0 0.0
        %1848 = vmatpush.msra.mxu0 0.0
        %1849 = vmatpush.msra.mxu0 0.0
        %1850 = vmatpush.msra.mxu0 0.0
        %1851 = vmatpush.msra.mxu0 0.0
        %1852 = vmatpush.msra.mxu0 0.0
        %1853 = vmatpush.msra.mxu0 0.0
        %1854 = vmatpush.msra.mxu0 0.0
        %1855 = vmatpush.msra.mxu0 0.0
        %1856 = vmatpush.msra.mxu0 0.0
        %1857 = vmatpush.msra.mxu0 0.0
        %1858 = vmatpush.msra.mxu0 0.0
        %1859 = vmatpush.msra.mxu0 %v1081
        %1860 = vmatpush.msra.mxu0 %v1080
        %1861 = vmatpush.msra.mxu0 %v1079
        %1862 = vmatpush.msra.mxu0 %v1078
        %1863 = vmatmul.f32.gmra.mxu0 %v1845
        %v1864 = vpop.f32.mrf.mxu0
        %v1865 = vadd.f32 0.0, %v1864
        %1866 = vdwg.mxu0
        %1867 = vmatpush.msra.mxu0 0.0
        %1868 = vmatpush.msra.mxu0 0.0
        %1869 = vmatpush.msra.mxu0 0.0
        %1870 = vmatpush.msra.mxu0 0.0
        %1871 = vmatpush.msra.mxu0 0.0
        %1872 = vmatpush.msra.mxu0 0.0
        %1873 = vmatpush.msra.mxu0 0.0
        %1874 = vmatpush.msra.mxu0 0.0
        %1875 = vmatpush.msra.mxu0 0.0
        %1876 = vmatpush.msra.mxu0 0.0
        %1877 = vmatpush.msra.mxu0 0.0
        %1878 = vmatpush.msra.mxu0 0.0
        %1879 = vmatpush.msra.mxu0 %v1085
        %1880 = vmatpush.msra.mxu0 %v1084
        %1881 = vmatpush.msra.mxu0 %v1083
        %1882 = vmatpush.msra.mxu0 %v1082
        %1883 = vmatmul.f32.gmra.mxu0 %v1845
        %v1884 = vpop.f32.mrf.mxu0
        %v1885 = vadd.f32 0.0, %v1884
        %1886 = vdwg.mxu0
        %1887 = vmatpush.msra.mxu0 0.0
        %1888 = vmatpush.msra.mxu0 0.0
        %1889 = vmatpush.msra.mxu0 0.0
        %1890 = vmatpush.msra.mxu0 0.0
        %1891 = vmatpush.msra.mxu0 0.0
        %1892 = vmatpush.msra.mxu0 0.0
        %1893 = vmatpush.msra.mxu0 0.0
        %1894 = vmatpush.msra.mxu0 0.0
        %1895 = vmatpush.msra.mxu0 0.0
        %1896 = vmatpush.msra.mxu0 0.0
        %1897 = vmatpush.msra.mxu0 0.0
        %1898 = vmatpush.msra.mxu0 0.0
        %1899 = vmatpush.msra.mxu0 %v1089
        %1900 = vmatpush.msra.mxu0 %v1088
        %1901 = vmatpush.msra.mxu0 %v1087
        %1902 = vmatpush.msra.mxu0 %v1086
        %1903 = vmatmul.f32.gmra.mxu0 %v1845
        %v1904 = vpop.f32.mrf.mxu0
        %v1905 = vadd.f32 0.0, %v1904
        %1906 = vdwg.mxu0
        %1907 = vmatpush.msra.mxu0 0.0
        %1908 = vmatpush.msra.mxu0 0.0
        %1909 = vmatpush.msra.mxu0 0.0
        %1910 = vmatpush.msra.mxu0 0.0
        %1911 = vmatpush.msra.mxu0 0.0
        %1912 = vmatpush.msra.mxu0 0.0
        %1913 = vmatpush.msra.mxu0 0.0
        %1914 = vmatpush.msra.mxu0 0.0
        %1915 = vmatpush.msra.mxu0 0.0
        %1916 = vmatpush.msra.mxu0 0.0
        %1917 = vmatpush.msra.mxu0 0.0
        %1918 = vmatpush.msra.mxu0 0.0
        %1919 = vmatpush.msra.mxu0 %v1093
        %1920 = vmatpush.msra.mxu0 %v1092
        %1921 = vmatpush.msra.mxu0 %v1091
        %1922 = vmatpush.msra.mxu0 %v1090
        %1923 = vmatmul.f32.gmra.mxu0 %v1845
        %v1924 = vpop.f32.mrf.mxu0
        %v1925 = vadd.f32 0.0, %v1924
        %1926 = vdwg.mxu0
        %v1928 = vsel %vm1148, %v1842, 0
        %1930 = vmatpush.msra.mxu0 0.0
        %1931 = vmatpush.msra.mxu0 0.0
        %1932 = vmatpush.msra.mxu0 0.0
        %1933 = vmatpush.msra.mxu0 0.0
        %1934 = vmatpush.msra.mxu0 0.0
        %1935 = vmatpush.msra.mxu0 0.0
        %1936 = vmatpush.msra.mxu0 0.0
        %1937 = vmatpush.msra.mxu0 0.0
        %1938 = vmatpush.msra.mxu0 0.0
        %1939 = vmatpush.msra.mxu0 0.0
        %1940 = vmatpush.msra.mxu0 0.0
        %1941 = vmatpush.msra.mxu0 0.0
        %1942 = vmatpush.msra.mxu0 %v1097
        %1943 = vmatpush.msra.mxu0 %v1096
        %1944 = vmatpush.msra.mxu0 %v1095
        %1945 = vmatpush.msra.mxu0 %v1094
        %1946 = vmatmul.f32.gmra.mxu0 %v1928
        %v1947 = vpop.f32.mrf.mxu0
        %v1948 = vadd.f32 0.0, %v1947
        %1949 = vdwg.mxu0
        %1950 = vmatpush.msra.mxu0 0.0
        %1951 = vmatpush.msra.mxu0 0.0
        %1952 = vmatpush.msra.mxu0 0.0
        %1953 = vmatpush.msra.mxu0 0.0
        %1954 = vmatpush.msra.mxu0 0.0
        %1955 = vmatpush.msra.mxu0 0.0
        %1956 = vmatpush.msra.mxu0 0.0
        %1957 = vmatpush.msra.mxu0 0.0
        %1958 = vmatpush.msra.mxu0 0.0
        %1959 = vmatpush.msra.mxu0 0.0
        %1960 = vmatpush.msra.mxu0 0.0
        %1961 = vmatpush.msra.mxu0 0.0
        %1962 = vmatpush.msra.mxu0 %v1101
        %1963 = vmatpush.msra.mxu0 %v1100
        %1964 = vmatpush.msra.mxu0 %v1099
        %1965 = vmatpush.msra.mxu0 %v1098
        %1966 = vmatmul.f32.gmra.mxu0 %v1928
        %v1967 = vpop.f32.mrf.mxu0
        %v1968 = vadd.f32 0.0, %v1967
        %1969 = vdwg.mxu0
        %1970 = vmatpush.msra.mxu0 0.0
        %1971 = vmatpush.msra.mxu0 0.0
        %1972 = vmatpush.msra.mxu0 0.0
        %1973 = vmatpush.msra.mxu0 0.0
        %1974 = vmatpush.msra.mxu0 0.0
        %1975 = vmatpush.msra.mxu0 0.0
        %1976 = vmatpush.msra.mxu0 0.0
        %1977 = vmatpush.msra.mxu0 0.0
        %1978 = vmatpush.msra.mxu0 0.0
        %1979 = vmatpush.msra.mxu0 0.0
        %1980 = vmatpush.msra.mxu0 0.0
        %1981 = vmatpush.msra.mxu0 0.0
        %1982 = vmatpush.msra.mxu0 %v1105
        %1983 = vmatpush.msra.mxu0 %v1104
        %1984 = vmatpush.msra.mxu0 %v1103
        %1985 = vmatpush.msra.mxu0 %v1102
        %1986 = vmatmul.f32.gmra.mxu0 %v1928
        %v1987 = vpop.f32.mrf.mxu0
        %v1988 = vadd.f32 0.0, %v1987
        %1989 = vdwg.mxu0
        %1990 = vmatpush.msra.mxu0 0.0
        %1991 = vmatpush.msra.mxu0 0.0
        %1992 = vmatpush.msra.mxu0 0.0
        %1993 = vmatpush.msra.mxu0 0.0
        %1994 = vmatpush.msra.mxu0 0.0
        %1995 = vmatpush.msra.mxu0 0.0
        %1996 = vmatpush.msra.mxu0 0.0
        %1997 = vmatpush.msra.mxu0 0.0
        %1998 = vmatpush.msra.mxu0 0.0
        %1999 = vmatpush.msra.mxu0 0.0
        %2000 = vmatpush.msra.mxu0 0.0
        %2001 = vmatpush.msra.mxu0 0.0
        %2002 = vmatpush.msra.mxu0 %v1109
        %2003 = vmatpush.msra.mxu0 %v1108
        %2004 = vmatpush.msra.mxu0 %v1107
        %2005 = vmatpush.msra.mxu0 %v1106
        %2006 = vmatmul.f32.gmra.mxu0 %v1928
        %v2007 = vpop.f32.mrf.mxu0
        %v2008 = vadd.f32 0.0, %v2007
        %2009 = vdwg.mxu0
        %2010 = vmatpush.msra.mxu0 0.0
        %2011 = vmatpush.msra.mxu0 0.0
        %2012 = vmatpush.msra.mxu0 0.0
        %2013 = vmatpush.msra.mxu0 0.0
        %2014 = vmatpush.msra.mxu0 0.0
        %2015 = vmatpush.msra.mxu0 0.0
        %2016 = vmatpush.msra.mxu0 0.0
        %2017 = vmatpush.msra.mxu0 0.0
        %2018 = vmatpush.msra.mxu0 0.0
        %2019 = vmatpush.msra.mxu0 0.0
        %2020 = vmatpush.msra.mxu0 0.0
        %2021 = vmatpush.msra.mxu0 0.0
        %2022 = vmatpush.msra.mxu0 %v1113
        %2023 = vmatpush.msra.mxu0 %v1112
        %2024 = vmatpush.msra.mxu0 %v1111
        %2025 = vmatpush.msra.mxu0 %v1110
        %2026 = vmatmul.f32.gmra.mxu0 %v1928
        %v2027 = vpop.f32.mrf.mxu0
        %v2028 = vadd.f32 0.0, %v2027
        %2029 = vdwg.mxu0
        %2030 = vmatpush.msra.mxu0 0.0
        %2031 = vmatpush.msra.mxu0 0.0
        %2032 = vmatpush.msra.mxu0 0.0
        %2033 = vmatpush.msra.mxu0 0.0
        %2034 = vmatpush.msra.mxu0 0.0
        %2035 = vmatpush.msra.mxu0 0.0
        %2036 = vmatpush.msra.mxu0 0.0
        %2037 = vmatpush.msra.mxu0 0.0
        %2038 = vmatpush.msra.mxu0 0.0
        %2039 = vmatpush.msra.mxu0 0.0
        %2040 = vmatpush.msra.mxu0 0.0
        %2041 = vmatpush.msra.mxu0 0.0
        %2042 = vmatpush.msra.mxu0 %v1117
        %2043 = vmatpush.msra.mxu0 %v1116
        %2044 = vmatpush.msra.mxu0 %v1115
        %2045 = vmatpush.msra.mxu0 %v1114
        %2046 = vmatmul.f32.gmra.mxu0 %v1928
        %v2047 = vpop.f32.mrf.mxu0
        %v2048 = vadd.f32 0.0, %v2047
        %2049 = vdwg.mxu0
        %2050 = vmatpush.msra.mxu0 0.0
        %2051 = vmatpush.msra.mxu0 0.0
        %2052 = vmatpush.msra.mxu0 0.0
        %2053 = vmatpush.msra.mxu0 0.0
        %2054 = vmatpush.msra.mxu0 0.0
        %2055 = vmatpush.msra.mxu0 0.0
        %2056 = vmatpush.msra.mxu0 0.0
        %2057 = vmatpush.msra.mxu0 0.0
        %2058 = vmatpush.msra.mxu0 0.0
        %2059 = vmatpush.msra.mxu0 0.0
        %2060 = vmatpush.msra.mxu0 0.0
        %2061 = vmatpush.msra.mxu0 0.0
        %2062 = vmatpush.msra.mxu0 %v1121
        %2063 = vmatpush.msra.mxu0 %v1120
        %2064 = vmatpush.msra.mxu0 %v1119
        %2065 = vmatpush.msra.mxu0 %v1118
        %2066 = vmatmul.f32.gmra.mxu0 %v1928
        %v2067 = vpop.f32.mrf.mxu0
        %v2068 = vadd.f32 0.0, %v2067
        %2069 = vdwg.mxu0
        %2070 = vmatpush.msra.mxu0 0.0
        %2071 = vmatpush.msra.mxu0 0.0
        %2072 = vmatpush.msra.mxu0 0.0
        %2073 = vmatpush.msra.mxu0 0.0
        %2074 = vmatpush.msra.mxu0 0.0
        %2075 = vmatpush.msra.mxu0 0.0
        %2076 = vmatpush.msra.mxu0 0.0
        %2077 = vmatpush.msra.mxu0 0.0
        %2078 = vmatpush.msra.mxu0 0.0
        %2079 = vmatpush.msra.mxu0 0.0
        %2080 = vmatpush.msra.mxu0 0.0
        %2081 = vmatpush.msra.mxu0 0.0
        %2082 = vmatpush.msra.mxu0 %v1125
        %2083 = vmatpush.msra.mxu0 %v1124
        %2084 = vmatpush.msra.mxu0 %v1123
        %2085 = vmatpush.msra.mxu0 %v1122
        %2086 = vmatmul.f32.gmra.mxu0 %v1928
        %v2087 = vpop.f32.mrf.mxu0
        %v2088 = vadd.f32 0.0, %v2087
        %2089 = vdwg.mxu0
        %v2091 = vperm.slane %v1843, 0
        %v2094 = vsel %vm1424, %v1865, 0
        %v2097 = vsel %vm1424, %v1948, 0
        %2099 = vmatpush.xpose.msra.mxu0 0.0
        %2100 = vmatpush.xpose.msra.mxu0 0.0
        %2101 = vmatpush.xpose.msra.mxu0 0.0
        %2102 = vmatpush.xpose.msra.mxu0 0.0
        %2103 = vmatpush.xpose.msra.mxu0 0.0
        %2104 = vmatpush.xpose.msra.mxu0 0.0
        %2105 = vmatpush.xpose.msra.mxu0 0.0
        %2106 = vmatpush.xpose.msra.mxu0 0.0
        %2107 = vmatpush.xpose.msra.mxu0 0.0
        %2108 = vmatpush.xpose.msra.mxu0 0.0
        %2109 = vmatpush.xpose.msra.mxu0 0.0
        %2110 = vmatpush.xpose.msra.mxu0 0.0
        %2111 = vmatpush.xpose.msra.mxu0 0.0
        %2112 = vmatpush.xpose.msra.mxu0 0.0
        %2113 = vmatpush.xpose.msra.mxu0 0.0
        %2114 = vmatpush.xpose.msra.mxu0 %v2097
        %2115 = vmatmul.f32.gmra.mxu0 %v2094
        %v2116 = vpop.f32.mrf.mxu0
        %v2117 = vadd.f32 %v2091, %v2116
        %2118 = vdwg.mxu0
        %v2120 = vsel %vm1424, %v1885, 0
        %v2123 = vsel %vm1424, %v1968, 0
        %2125 = vmatpush.xpose.msra.mxu0 0.0
        %2126 = vmatpush.xpose.msra.mxu0 0.0
        %2127 = vmatpush.xpose.msra.mxu0 0.0
        %2128 = vmatpush.xpose.msra.mxu0 0.0
        %2129 = vmatpush.xpose.msra.mxu0 0.0
        %2130 = vmatpush.xpose.msra.mxu0 0.0
        %2131 = vmatpush.xpose.msra.mxu0 0.0
        %2132 = vmatpush.xpose.msra.mxu0 0.0
        %2133 = vmatpush.xpose.msra.mxu0 0.0
        %2134 = vmatpush.xpose.msra.mxu0 0.0
        %2135 = vmatpush.xpose.msra.mxu0 0.0
        %2136 = vmatpush.xpose.msra.mxu0 0.0
        %2137 = vmatpush.xpose.msra.mxu0 0.0
        %2138 = vmatpush.xpose.msra.mxu0 0.0
        %2139 = vmatpush.xpose.msra.mxu0 0.0
        %2140 = vmatpush.xpose.msra.mxu0 %v2123
        %2141 = vmatmul.f32.gmra.mxu0 %v2120
        %v2142 = vpop.f32.mrf.mxu0
        %v2143 = vadd.f32 %v2091, %v2142
        %2144 = vdwg.mxu0
        %v2146 = vsel %vm1424, %v1905, 0
        %v2149 = vsel %vm1424, %v1988, 0
        %2151 = vmatpush.xpose.msra.mxu0 0.0
        %2152 = vmatpush.xpose.msra.mxu0 0.0
        %2153 = vmatpush.xpose.msra.mxu0 0.0
        %2154 = vmatpush.xpose.msra.mxu0 0.0
        %2155 = vmatpush.xpose.msra.mxu0 0.0
        %2156 = vmatpush.xpose.msra.mxu0 0.0
        %2157 = vmatpush.xpose.msra.mxu0 0.0
        %2158 = vmatpush.xpose.msra.mxu0 0.0
        %2159 = vmatpush.xpose.msra.mxu0 0.0
        %2160 = vmatpush.xpose.msra.mxu0 0.0
        %2161 = vmatpush.xpose.msra.mxu0 0.0
        %2162 = vmatpush.xpose.msra.mxu0 0.0
        %2163 = vmatpush.xpose.msra.mxu0 0.0
        %2164 = vmatpush.xpose.msra.mxu0 0.0
        %2165 = vmatpush.xpose.msra.mxu0 0.0
        %2166 = vmatpush.xpose.msra.mxu0 %v2149
        %2167 = vmatmul.f32.gmra.mxu0 %v2146
        %v2168 = vpop.f32.mrf.mxu0
        %v2169 = vadd.f32 %v2091, %v2168
        %2170 = vdwg.mxu0
        %v2172 = vsel %vm1424, %v1925, 0
        %v2175 = vsel %vm1424, %v2008, 0
        %2177 = vmatpush.xpose.msra.mxu0 0.0
        %2178 = vmatpush.xpose.msra.mxu0 0.0
        %2179 = vmatpush.xpose.msra.mxu0 0.0
        %2180 = vmatpush.xpose.msra.mxu0 0.0
        %2181 = vmatpush.xpose.msra.mxu0 0.0
        %2182 = vmatpush.xpose.msra.mxu0 0.0
        %2183 = vmatpush.xpose.msra.mxu0 0.0
        %2184 = vmatpush.xpose.msra.mxu0 0.0
        %2185 = vmatpush.xpose.msra.mxu0 0.0
        %2186 = vmatpush.xpose.msra.mxu0 0.0
        %2187 = vmatpush.xpose.msra.mxu0 0.0
        %2188 = vmatpush.xpose.msra.mxu0 0.0
        %2189 = vmatpush.xpose.msra.mxu0 0.0
        %2190 = vmatpush.xpose.msra.mxu0 0.0
        %2191 = vmatpush.xpose.msra.mxu0 0.0
        %2192 = vmatpush.xpose.msra.mxu0 %v2175
        %2193 = vmatmul.f32.gmra.mxu0 %v2172
        %v2194 = vpop.f32.mrf.mxu0
        %v2195 = vadd.f32 %v2091, %v2194
        %2196 = vdwg.mxu0
        %v2197 = vsel %vm1424, %v2117, -inf
        %2198 = vmax.xlane.f32.xlu0 %v2197
        %v2199 = vpop.xlane.xlu0 %2198
        %v2200 = vsel %vm1424, %v2143, -inf
        %2201 = vmax.xlane.f32.xlu0 %v2200
        %v2202 = vpop.xlane.xlu0 %2201
        %v2203 = vsel %vm1424, %v2169, -inf
        %2204 = vmax.xlane.f32.xlu0 %v2203
        %v2205 = vpop.xlane.xlu0 %2204
        %v2206 = vsel %vm1424, %v2195, -inf
        %2207 = vmax.xlane.f32.xlu0 %v2206
        %v2208 = vpop.xlane.xlu0 %2207
        %v2209 = vsub.f32 %v2117, %v2199
        %v2210 = vsub.f32 %v2143, %v2202
        %v2211 = vsub.f32 %v2169, %v2205
        %v2212 = vsub.f32 %v2195, %v2208
        %v2213 = vmul.f32 %v2209, 1.442695
        %v2214 = vpow.pop %v2213
        %v2215 = vmul.f32 %v2210, 1.442695
        %v2216 = vpow.pop %v2215
        %v2217 = vmul.f32 %v2211, 1.442695
        %v2218 = vpow.pop %v2217
        %v2219 = vmul.f32 %v2212, 1.442695
        %v2220 = vpow.pop %v2219
        %v2221 = vsel %vm1424, %v2214, 0.0
        %2222 = vadd.xlane.f32.xlu0 %v2221
        %v2223 = vpop.xlane.xlu0 %2222
        %v2224 = vsel %vm1424, %v2216, 0.0
        %2225 = vadd.xlane.f32.xlu0 %v2224
        %v2226 = vpop.xlane.xlu0 %2225
        %v2227 = vsel %vm1424, %v2218, 0.0
        %2228 = vadd.xlane.f32.xlu0 %v2227
        %v2229 = vpop.xlane.xlu0 %2228
        %v2230 = vsel %vm1424, %v2220, 0.0
        %2231 = vadd.xlane.f32.xlu0 %v2230
        %v2232 = vpop.xlane.xlu0 %2231
        %v2233 = vrcp.pop %v2223
        %v2234 = vmul.f32 %v2223, %v2233
        %v2235 = vsub.f32 1.0, %v2234
        %v2236 = vmul.f32 %v2233, %v2235
        %v2237 = vadd.f32 %v2233, %v2236
        %vm2238 = vweird.f32 %v2223
        %vm2239 = vweird.f32 %v2233
        %vm2240 = vmor %vm2238, %vm2239
        %v2241 = vsel %vm2240, %v2233, %v2237
        %v2242 = vand.u32 2147483647, %v2223
        %vm2243 = vcmp.eq.f32.partialorder %v2242, 8.507059e+37
        %v2244 = vand.u32 %v2223, 2147483648
        %v2245 = vor.u32 1.1754944e-38, %v2244
        %v2246 = vsel %vm2243, %v2245, %v2241
        %v2247 = vmul.f32 %v2214, %v2246
        %v2248 = vrcp.pop %v2226
        %v2249 = vmul.f32 %v2226, %v2248
        %v2250 = vsub.f32 1.0, %v2249
        %v2251 = vmul.f32 %v2248, %v2250
        %v2252 = vadd.f32 %v2248, %v2251
        %vm2253 = vweird.f32 %v2226
        %vm2254 = vweird.f32 %v2248
        %vm2255 = vmor %vm2253, %vm2254
        %v2256 = vsel %vm2255, %v2248, %v2252
        %v2257 = vand.u32 2147483647, %v2226
        %vm2258 = vcmp.eq.f32.partialorder %v2257, 8.507059e+37
        %v2259 = vand.u32 %v2226, 2147483648
        %v2260 = vor.u32 1.1754944e-38, %v2259
        %v2261 = vsel %vm2258, %v2260, %v2256
        %v2262 = vmul.f32 %v2216, %v2261
        %v2263 = vrcp.pop %v2229
        %v2264 = vmul.f32 %v2229, %v2263
        %v2265 = vsub.f32 1.0, %v2264
        %v2266 = vmul.f32 %v2263, %v2265
        %v2267 = vadd.f32 %v2263, %v2266
        %vm2268 = vweird.f32 %v2229
        %vm2269 = vweird.f32 %v2263
        %vm2270 = vmor %vm2268, %vm2269
        %v2271 = vsel %vm2270, %v2263, %v2267
        %v2272 = vand.u32 2147483647, %v2229
        %vm2273 = vcmp.eq.f32.partialorder %v2272, 8.507059e+37
        %v2274 = vand.u32 %v2229, 2147483648
        %v2275 = vor.u32 1.1754944e-38, %v2274
        %v2276 = vsel %vm2273, %v2275, %v2271
        %v2277 = vmul.f32 %v2218, %v2276
        %v2278 = vrcp.pop %v2232
        %v2279 = vmul.f32 %v2232, %v2278
        %v2280 = vsub.f32 1.0, %v2279
        %v2281 = vmul.f32 %v2278, %v2280
        %v2282 = vadd.f32 %v2278, %v2281
        %vm2283 = vweird.f32 %v2232
        %vm2284 = vweird.f32 %v2278
        %vm2285 = vmor %vm2283, %vm2284
        %v2286 = vsel %vm2285, %v2278, %v2282
        %v2287 = vand.u32 2147483647, %v2232
        %vm2288 = vcmp.eq.f32.partialorder %v2287, 8.507059e+37
        %v2289 = vand.u32 %v2232, 2147483648
        %v2290 = vor.u32 1.1754944e-38, %v2289
        %v2291 = vsel %vm2288, %v2290, %v2286
        %v2292 = vmul.f32 %v2220, %v2291
        %v2294 = vsel %vm1424, %v2247, 0
        %2296 = vmatpush.msra.mxu0 0.0
        %2297 = vmatpush.msra.mxu0 0.0
        %2298 = vmatpush.msra.mxu0 0.0
        %2299 = vmatpush.msra.mxu0 0.0
        %2300 = vmatpush.msra.mxu0 0.0
        %2301 = vmatpush.msra.mxu0 0.0
        %2302 = vmatpush.msra.mxu0 0.0
        %2303 = vmatpush.msra.mxu0 0.0
        %2304 = vmatpush.msra.mxu0 0.0
        %2305 = vmatpush.msra.mxu0 0.0
        %2306 = vmatpush.msra.mxu0 0.0
        %2307 = vmatpush.msra.mxu0 0.0
        %2308 = vmatpush.msra.mxu0 0.0
        %2309 = vmatpush.msra.mxu0 0.0
        %2310 = vmatpush.msra.mxu0 0.0
        %2311 = vmatpush.msra.mxu0 %v2028
        %2312 = vmatmul.f32.gmra.mxu0 %v2294
        %v2313 = vpop.f32.mrf.mxu0
        %v2314 = vadd.f32 0.0, %v2313
        %2315 = vdwg.mxu0
        %v2317 = vsel %vm1424, %v2262, 0
        %2319 = vmatpush.msra.mxu0 0.0
        %2320 = vmatpush.msra.mxu0 0.0
        %2321 = vmatpush.msra.mxu0 0.0
        %2322 = vmatpush.msra.mxu0 0.0
        %2323 = vmatpush.msra.mxu0 0.0
        %2324 = vmatpush.msra.mxu0 0.0
        %2325 = vmatpush.msra.mxu0 0.0
        %2326 = vmatpush.msra.mxu0 0.0
        %2327 = vmatpush.msra.mxu0 0.0
        %2328 = vmatpush.msra.mxu0 0.0
        %2329 = vmatpush.msra.mxu0 0.0
        %2330 = vmatpush.msra.mxu0 0.0
        %2331 = vmatpush.msra.mxu0 0.0
        %2332 = vmatpush.msra.mxu0 0.0
        %2333 = vmatpush.msra.mxu0 0.0
        %2334 = vmatpush.msra.mxu0 %v2048
        %2335 = vmatmul.f32.gmra.mxu0 %v2317
        %v2336 = vpop.f32.mrf.mxu0
        %v2337 = vadd.f32 0.0, %v2336
        %2338 = vdwg.mxu0
        %v2340 = vsel %vm1424, %v2277, 0
        %2342 = vmatpush.msra.mxu0 0.0
        %2343 = vmatpush.msra.mxu0 0.0
        %2344 = vmatpush.msra.mxu0 0.0
        %2345 = vmatpush.msra.mxu0 0.0
        %2346 = vmatpush.msra.mxu0 0.0
        %2347 = vmatpush.msra.mxu0 0.0
        %2348 = vmatpush.msra.mxu0 0.0
        %2349 = vmatpush.msra.mxu0 0.0
        %2350 = vmatpush.msra.mxu0 0.0
        %2351 = vmatpush.msra.mxu0 0.0
        %2352 = vmatpush.msra.mxu0 0.0
        %2353 = vmatpush.msra.mxu0 0.0
        %2354 = vmatpush.msra.mxu0 0.0
        %2355 = vmatpush.msra.mxu0 0.0
        %2356 = vmatpush.msra.mxu0 0.0
        %2357 = vmatpush.msra.mxu0 %v2068
        %2358 = vmatmul.f32.gmra.mxu0 %v2340
        %v2359 = vpop.f32.mrf.mxu0
        %v2360 = vadd.f32 0.0, %v2359
        %2361 = vdwg.mxu0
        %v2363 = vsel %vm1424, %v2292, 0
        %2365 = vmatpush.msra.mxu0 0.0
        %2366 = vmatpush.msra.mxu0 0.0
        %2367 = vmatpush.msra.mxu0 0.0
        %2368 = vmatpush.msra.mxu0 0.0
        %2369 = vmatpush.msra.mxu0 0.0
        %2370 = vmatpush.msra.mxu0 0.0
        %2371 = vmatpush.msra.mxu0 0.0
        %2372 = vmatpush.msra.mxu0 0.0
        %2373 = vmatpush.msra.mxu0 0.0
        %2374 = vmatpush.msra.mxu0 0.0
        %2375 = vmatpush.msra.mxu0 0.0
        %2376 = vmatpush.msra.mxu0 0.0
        %2377 = vmatpush.msra.mxu0 0.0
        %2378 = vmatpush.msra.mxu0 0.0
        %2379 = vmatpush.msra.mxu0 0.0
        %2380 = vmatpush.msra.mxu0 %v2088
        %2381 = vmatmul.f32.gmra.mxu0 %v2363
        %v2382 = vpop.f32.mrf.mxu0
        %v2383 = vadd.f32 0.0, %v2382
        %2384 = vdwg.mxu0
        %v2386 = vsel %vm1424, %v2314, 0
        %2388 = vmatpush.msra.mxu0 0.0
        %2389 = vmatpush.msra.mxu0 0.0
        %2390 = vmatpush.msra.mxu0 0.0
        %2391 = vmatpush.msra.mxu0 0.0
        %2392 = vmatpush.msra.mxu0 0.0
        %2393 = vmatpush.msra.mxu0 0.0
        %2394 = vmatpush.msra.mxu0 0.0
        %2395 = vmatpush.msra.mxu0 0.0
        %2396 = vmatpush.msra.mxu0 0.0
        %2397 = vmatpush.msra.mxu0 0.0
        %2398 = vmatpush.msra.mxu0 0.0
        %2399 = vmatpush.msra.mxu0 0.0
        %2400 = vmatpush.msra.mxu0 0.0
        %2401 = vmatpush.msra.mxu0 0.0
        %2402 = vmatpush.msra.mxu0 0.0
        %2403 = vmatpush.msra.mxu0 %v1126
        %2404 = vmatmul.f32.gmra.mxu0 %v2386
        %v2405 = vpop.f32.mrf.mxu0
        %v2406 = vadd.f32 0.0, %v2405
        %2407 = vdwg.mxu0
        %v2409 = vsel %vm1424, %v2337, 0
        %2411 = vmatpush.msra.mxu0 0.0
        %2412 = vmatpush.msra.mxu0 0.0
        %2413 = vmatpush.msra.mxu0 0.0
        %2414 = vmatpush.msra.mxu0 0.0
        %2415 = vmatpush.msra.mxu0 0.0
        %2416 = vmatpush.msra.mxu0 0.0
        %2417 = vmatpush.msra.mxu0 0.0
        %2418 = vmatpush.msra.mxu0 0.0
        %2419 = vmatpush.msra.mxu0 0.0
        %2420 = vmatpush.msra.mxu0 0.0
        %2421 = vmatpush.msra.mxu0 0.0
        %2422 = vmatpush.msra.mxu0 0.0
        %2423 = vmatpush.msra.mxu0 0.0
        %2424 = vmatpush.msra.mxu0 0.0
        %2425 = vmatpush.msra.mxu0 0.0
        %2426 = vmatpush.msra.mxu0 %v1127
        %2427 = vmatmul.f32.gmra.mxu0 %v2409
        %v2428 = vpop.f32.mrf.mxu0
        %v2429 = vadd.f32 0.0, %v2428
        %2430 = vdwg.mxu0
        %v2432 = vsel %vm1424, %v2360, 0
        %2434 = vmatpush.msra.mxu0 0.0
        %2435 = vmatpush.msra.mxu0 0.0
        %2436 = vmatpush.msra.mxu0 0.0
        %2437 = vmatpush.msra.mxu0 0.0
        %2438 = vmatpush.msra.mxu0 0.0
        %2439 = vmatpush.msra.mxu0 0.0
        %2440 = vmatpush.msra.mxu0 0.0
        %2441 = vmatpush.msra.mxu0 0.0
        %2442 = vmatpush.msra.mxu0 0.0
        %2443 = vmatpush.msra.mxu0 0.0
        %2444 = vmatpush.msra.mxu0 0.0
        %2445 = vmatpush.msra.mxu0 0.0
        %2446 = vmatpush.msra.mxu0 0.0
        %2447 = vmatpush.msra.mxu0 0.0
        %2448 = vmatpush.msra.mxu0 0.0
        %2449 = vmatpush.msra.mxu0 %v1128
        %2450 = vmatmul.f32.gmra.mxu0 %v2432
        %v2451 = vpop.f32.mrf.mxu0
        %v2452 = vadd.f32 0.0, %v2451
        %2453 = vdwg.mxu0
        %v2455 = vsel %vm1424, %v2383, 0
        %2457 = vmatpush.msra.mxu0 0.0
        %2458 = vmatpush.msra.mxu0 0.0
        %2459 = vmatpush.msra.mxu0 0.0
        %2460 = vmatpush.msra.mxu0 0.0
        %2461 = vmatpush.msra.mxu0 0.0
        %2462 = vmatpush.msra.mxu0 0.0
        %2463 = vmatpush.msra.mxu0 0.0
        %2464 = vmatpush.msra.mxu0 0.0
        %2465 = vmatpush.msra.mxu0 0.0
        %2466 = vmatpush.msra.mxu0 0.0
        %2467 = vmatpush.msra.mxu0 0.0
        %2468 = vmatpush.msra.mxu0 0.0
        %2469 = vmatpush.msra.mxu0 0.0
        %2470 = vmatpush.msra.mxu0 0.0
        %2471 = vmatpush.msra.mxu0 0.0
        %2472 = vmatpush.msra.mxu0 %v1129
        %2473 = vmatmul.f32.gmra.mxu0 %v2455
        %v2474 = vpop.f32.mrf.mxu0
        %v2475 = vadd.f32 0.0, %v2474
        %2476 = vdwg.mxu0
        %v2477 = vsel %vm1148, %v2406, 0.0
        %v2478 = vsel %vm1148, %v2429, 0.0
        %v2479 = vadd.f32 %v2477, %v2478
        %v2480 = vsel %vm1148, %v2452, 0.0
        %v2481 = vadd.f32 %v2479, %v2480
        %v2482 = vsel %vm1148, %v2475, 0.0
        %v2483 = vadd.f32 %v2481, %v2482
        %2484 = vst.msk [vmem:[%s1012] sm:$0xff] %vm1424, %v2247
        %2485 = vst.msk [vmem:[%s1012 + $0x8] sm:$0xff] %vm1424, %v2262
        %2486 = vst.msk [vmem:[%s1012 + $0x10] sm:$0xff] %vm1424, %v2277
        %2487 = vst.msk [vmem:[%s1012 + $0x18] sm:$0xff] %vm1424, %v2292
        %v2488 = vadd.f32 %v1820, %v2483
        %v2489 = vmul.f32 %v2488, %v2488
        %v2490 = vsel %vm1148, %v2489, 0.0
        %2491 = vadd.xlane.f32.xlu0 %v2490
        %v2492 = vpop.xlane.xlu0 %2491
        %v2493 = vmul.f32 %v2492, %v1158
        %v2494 = vadd.f32 %v2493, 1e-06
        %v2495 = vrsqrt.pop %v2494
        %v2496 = vmul.f32 %v2495, %v2494
        %v2497 = vmul.f32 %v2496, %v2495
        %v2498 = vmul.f32 0.5, %v2497
        %v2499 = vsub.f32 1.5, %v2498
        %v2500 = vmul.f32 %v2495, %v2499
        %vm2501 = vweird.f32 %v2494
        %vm2502 = vweird.f32 %v2495
        %vm2503 = vmor %vm2501, %vm2502
        %v2504 = vsel %vm2503, %v2495, %v2500
        %v2505 = vmul.f32 %v2488, %v2504
        %v2507 = vperm.slane %v1025, 0
        %v2509 = vmul.f32 %v2505, %v2507
        %v2511 = vsel %vm1148, %v2509, 0
        %2513 = vmatpush.msra.mxu0 0.0
        %2514 = vmatpush.msra.mxu0 0.0
        %2515 = vmatpush.msra.mxu0 0.0
        %2516 = vmatpush.msra.mxu0 0.0
        %2517 = vmatpush.msra.mxu0 0.0
        %2518 = vmatpush.msra.mxu0 0.0
        %2519 = vmatpush.msra.mxu0 0.0
        %2520 = vmatpush.msra.mxu0 0.0
        %2521 = vmatpush.msra.mxu0 0.0
        %2522 = vmatpush.msra.mxu0 0.0
        %2523 = vmatpush.msra.mxu0 0.0
        %2524 = vmatpush.msra.mxu0 0.0
        %2525 = vmatpush.msra.mxu0 %v1133
        %2526 = vmatpush.msra.mxu0 %v1132
        %2527 = vmatpush.msra.mxu0 %v1131
        %2528 = vmatpush.msra.mxu0 %v1130
        %2529 = vmatmul.f32.gmra.mxu0 %v2511
        %v2530 = vpop.f32.mrf.mxu0
        %v2531 = vadd.f32 0.0, %v2530
        %2532 = vdwg.mxu0
        %v2533 = vmax.f32 %v2531, 0.0
        %vm2534 = vcmask 523264
        %v2536 = vsel %vm2534, %v2533, 0
        %2538 = vmatpush.msra.mxu0 0.0
        %2539 = vmatpush.msra.mxu0 0.0
        %2540 = vmatpush.msra.mxu0 0.0
        %2541 = vmatpush.msra.mxu0 0.0
        %2542 = vmatpush.msra.mxu0 0.0
        %2543 = vmatpush.msra.mxu0 0.0
        %2544 = vmatpush.msra.mxu0 0.0
        %2545 = vmatpush.msra.mxu0 0.0
        %2546 = vmatpush.msra.mxu0 %v1141
        %2547 = vmatpush.msra.mxu0 %v1140
        %2548 = vmatpush.msra.mxu0 %v1139
        %2549 = vmatpush.msra.mxu0 %v1138
        %2550 = vmatpush.msra.mxu0 %v1137
        %2551 = vmatpush.msra.mxu0 %v1136
        %2552 = vmatpush.msra.mxu0 %v1135
        %2553 = vmatpush.msra.mxu0 %v1134
        %2554 = vmatmul.f32.gmra.mxu0 %v2536
        %v2555 = vpop.f32.mrf.mxu0
        %v2556 = vadd.f32 0.0, %v2555
        %2557 = vdwg.mxu0
        %v2558 = vadd.f32 %v2488, %v2556
        %2559 = vst.msk [vmem:[#allocation2] sm:$0xff] %vm1148, %v2558
        %s2560 = scalar_lea.vmem [#allocation2], 8
        %v2561 = vld [vmem:[%s2560] sm:$0xff]
        %v2562 = vmul.f32 %v2561, %v2561
        %v2563 = vsel %vm1148, %v2562, 0.0
        %2564 = vadd.xlane.f32.xlu0 %v2563
        %v2565 = vpop.xlane.xlu0 %2564
        %v2566 = vmul.f32 %v2565, %v1158
        %v2567 = vadd.f32 %v2566, 1e-06
        %v2568 = vrsqrt.pop %v2567
        %v2569 = vmul.f32 %v2568, %v2567
        %v2570 = vmul.f32 %v2569, %v2568
        %v2571 = vmul.f32 0.5, %v2570
        %v2572 = vsub.f32 1.5, %v2571
        %v2573 = vmul.f32 %v2568, %v2572
        %vm2574 = vweird.f32 %v2567
        %vm2575 = vweird.f32 %v2568
        %vm2576 = vmor %vm2574, %vm2575
        %v2577 = vsel %vm2576, %v2568, %v2573
        %v2578 = vmul.f32 %v2561, %v2577
        %v2579 = vmul.f32 %v2578, %v1173
        %s2580 = scalar_lea.vmem %s2, 8
        %v2581 = vld [vmem:[%s2580] sm:$0xff]
        %v2582 = vadd.f32 %v1142, %v2581
        %v2583 = vadd.f32 %v1143, %v2581
        %v2584 = vadd.f32 %v1144, %v2581
        %v2585 = vadd.f32 %v1145, %v2581
        %v2587 = vsel %vm1148, %v2579, 0
        %2589 = vmatpush.msra.mxu0 0.0
        %2590 = vmatpush.msra.mxu0 0.0
        %2591 = vmatpush.msra.mxu0 0.0
        %2592 = vmatpush.msra.mxu0 0.0
        %2593 = vmatpush.msra.mxu0 0.0
        %2594 = vmatpush.msra.mxu0 0.0
        %2595 = vmatpush.msra.mxu0 0.0
        %2596 = vmatpush.msra.mxu0 0.0
        %2597 = vmatpush.msra.mxu0 0.0
        %2598 = vmatpush.msra.mxu0 0.0
        %2599 = vmatpush.msra.mxu0 0.0
        %2600 = vmatpush.msra.mxu0 0.0
        %2601 = vmatpush.msra.mxu0 %v1029
        %2602 = vmatpush.msra.mxu0 %v1028
        %2603 = vmatpush.msra.mxu0 %v1027
        %2604 = vmatpush.msra.mxu0 %v1026
        %2605 = vmatmul.f32.gmra.mxu0 %v2587
        %v2606 = vpop.f32.mrf.mxu0
        %v2607 = vadd.f32 0.0, %v2606
        %2608 = vdwg.mxu0
        %2609 = vmatpush.msra.mxu0 0.0
        %2610 = vmatpush.msra.mxu0 0.0
        %2611 = vmatpush.msra.mxu0 0.0
        %2612 = vmatpush.msra.mxu0 0.0
        %2613 = vmatpush.msra.mxu0 0.0
        %2614 = vmatpush.msra.mxu0 0.0
        %2615 = vmatpush.msra.mxu0 0.0
        %2616 = vmatpush.msra.mxu0 0.0
        %2617 = vmatpush.msra.mxu0 0.0
        %2618 = vmatpush.msra.mxu0 0.0
        %2619 = vmatpush.msra.mxu0 0.0
        %2620 = vmatpush.msra.mxu0 0.0
        %2621 = vmatpush.msra.mxu0 %v1033
        %2622 = vmatpush.msra.mxu0 %v1032
        %2623 = vmatpush.msra.mxu0 %v1031
        %2624 = vmatpush.msra.mxu0 %v1030
        %2625 = vmatmul.f32.gmra.mxu0 %v2587
        %v2626 = vpop.f32.mrf.mxu0
        %v2627 = vadd.f32 0.0, %v2626
        %2628 = vdwg.mxu0
        %2629 = vmatpush.msra.mxu0 0.0
        %2630 = vmatpush.msra.mxu0 0.0
        %2631 = vmatpush.msra.mxu0 0.0
        %2632 = vmatpush.msra.mxu0 0.0
        %2633 = vmatpush.msra.mxu0 0.0
        %2634 = vmatpush.msra.mxu0 0.0
        %2635 = vmatpush.msra.mxu0 0.0
        %2636 = vmatpush.msra.mxu0 0.0
        %2637 = vmatpush.msra.mxu0 0.0
        %2638 = vmatpush.msra.mxu0 0.0
        %2639 = vmatpush.msra.mxu0 0.0
        %2640 = vmatpush.msra.mxu0 0.0
        %2641 = vmatpush.msra.mxu0 %v1037
        %2642 = vmatpush.msra.mxu0 %v1036
        %2643 = vmatpush.msra.mxu0 %v1035
        %2644 = vmatpush.msra.mxu0 %v1034
        %2645 = vmatmul.f32.gmra.mxu0 %v2587
        %v2646 = vpop.f32.mrf.mxu0
        %v2647 = vadd.f32 0.0, %v2646
        %2648 = vdwg.mxu0
        %2649 = vmatpush.msra.mxu0 0.0
        %2650 = vmatpush.msra.mxu0 0.0
        %2651 = vmatpush.msra.mxu0 0.0
        %2652 = vmatpush.msra.mxu0 0.0
        %2653 = vmatpush.msra.mxu0 0.0
        %2654 = vmatpush.msra.mxu0 0.0
        %2655 = vmatpush.msra.mxu0 0.0
        %2656 = vmatpush.msra.mxu0 0.0
        %2657 = vmatpush.msra.mxu0 0.0
        %2658 = vmatpush.msra.mxu0 0.0
        %2659 = vmatpush.msra.mxu0 0.0
        %2660 = vmatpush.msra.mxu0 0.0
        %2661 = vmatpush.msra.mxu0 %v1041
        %2662 = vmatpush.msra.mxu0 %v1040
        %2663 = vmatpush.msra.mxu0 %v1039
        %2664 = vmatpush.msra.mxu0 %v1038
        %2665 = vmatmul.f32.gmra.mxu0 %v2587
        %v2666 = vpop.f32.mrf.mxu0
        %v2667 = vadd.f32 0.0, %v2666
        %2668 = vdwg.mxu0
        %2669 = vmatpush.msra.mxu0 0.0
        %2670 = vmatpush.msra.mxu0 0.0
        %2671 = vmatpush.msra.mxu0 0.0
        %2672 = vmatpush.msra.mxu0 0.0
        %2673 = vmatpush.msra.mxu0 0.0
        %2674 = vmatpush.msra.mxu0 0.0
        %2675 = vmatpush.msra.mxu0 0.0
        %2676 = vmatpush.msra.mxu0 0.0
        %2677 = vmatpush.msra.mxu0 0.0
        %2678 = vmatpush.msra.mxu0 0.0
        %2679 = vmatpush.msra.mxu0 0.0
        %2680 = vmatpush.msra.mxu0 0.0
        %2681 = vmatpush.msra.mxu0 %v1045
        %2682 = vmatpush.msra.mxu0 %v1044
        %2683 = vmatpush.msra.mxu0 %v1043
        %2684 = vmatpush.msra.mxu0 %v1042
        %2685 = vmatmul.f32.gmra.mxu0 %v2587
        %v2686 = vpop.f32.mrf.mxu0
        %v2687 = vadd.f32 0.0, %v2686
        %2688 = vdwg.mxu0
        %2689 = vmatpush.msra.mxu0 0.0
        %2690 = vmatpush.msra.mxu0 0.0
        %2691 = vmatpush.msra.mxu0 0.0
        %2692 = vmatpush.msra.mxu0 0.0
        %2693 = vmatpush.msra.mxu0 0.0
        %2694 = vmatpush.msra.mxu0 0.0
        %2695 = vmatpush.msra.mxu0 0.0
        %2696 = vmatpush.msra.mxu0 0.0
        %2697 = vmatpush.msra.mxu0 0.0
        %2698 = vmatpush.msra.mxu0 0.0
        %2699 = vmatpush.msra.mxu0 0.0
        %2700 = vmatpush.msra.mxu0 0.0
        %2701 = vmatpush.msra.mxu0 %v1049
        %2702 = vmatpush.msra.mxu0 %v1048
        %2703 = vmatpush.msra.mxu0 %v1047
        %2704 = vmatpush.msra.mxu0 %v1046
        %2705 = vmatmul.f32.gmra.mxu0 %v2587
        %v2706 = vpop.f32.mrf.mxu0
        %v2707 = vadd.f32 0.0, %v2706
        %2708 = vdwg.mxu0
        %2709 = vmatpush.msra.mxu0 0.0
        %2710 = vmatpush.msra.mxu0 0.0
        %2711 = vmatpush.msra.mxu0 0.0
        %2712 = vmatpush.msra.mxu0 0.0
        %2713 = vmatpush.msra.mxu0 0.0
        %2714 = vmatpush.msra.mxu0 0.0
        %2715 = vmatpush.msra.mxu0 0.0
        %2716 = vmatpush.msra.mxu0 0.0
        %2717 = vmatpush.msra.mxu0 0.0
        %2718 = vmatpush.msra.mxu0 0.0
        %2719 = vmatpush.msra.mxu0 0.0
        %2720 = vmatpush.msra.mxu0 0.0
        %2721 = vmatpush.msra.mxu0 %v1053
        %2722 = vmatpush.msra.mxu0 %v1052
        %2723 = vmatpush.msra.mxu0 %v1051
        %2724 = vmatpush.msra.mxu0 %v1050
        %2725 = vmatmul.f32.gmra.mxu0 %v2587
        %v2726 = vpop.f32.mrf.mxu0
        %v2727 = vadd.f32 0.0, %v2726
        %2728 = vdwg.mxu0
        %2729 = vmatpush.msra.mxu0 0.0
        %2730 = vmatpush.msra.mxu0 0.0
        %2731 = vmatpush.msra.mxu0 0.0
        %2732 = vmatpush.msra.mxu0 0.0
        %2733 = vmatpush.msra.mxu0 0.0
        %2734 = vmatpush.msra.mxu0 0.0
        %2735 = vmatpush.msra.mxu0 0.0
        %2736 = vmatpush.msra.mxu0 0.0
        %2737 = vmatpush.msra.mxu0 0.0
        %2738 = vmatpush.msra.mxu0 0.0
        %2739 = vmatpush.msra.mxu0 0.0
        %2740 = vmatpush.msra.mxu0 0.0
        %2741 = vmatpush.msra.mxu0 %v1057
        %2742 = vmatpush.msra.mxu0 %v1056
        %2743 = vmatpush.msra.mxu0 %v1055
        %2744 = vmatpush.msra.mxu0 %v1054
        %2745 = vmatmul.f32.gmra.mxu0 %v2587
        %v2746 = vpop.f32.mrf.mxu0
        %v2747 = vadd.f32 0.0, %v2746
        %2748 = vdwg.mxu0
        %2749 = vmatpush.msra.mxu0 0.0
        %2750 = vmatpush.msra.mxu0 0.0
        %2751 = vmatpush.msra.mxu0 0.0
        %2752 = vmatpush.msra.mxu0 0.0
        %2753 = vmatpush.msra.mxu0 0.0
        %2754 = vmatpush.msra.mxu0 0.0
        %2755 = vmatpush.msra.mxu0 0.0
        %2756 = vmatpush.msra.mxu0 0.0
        %2757 = vmatpush.msra.mxu0 0.0
        %2758 = vmatpush.msra.mxu0 0.0
        %2759 = vmatpush.msra.mxu0 0.0
        %2760 = vmatpush.msra.mxu0 0.0
        %2761 = vmatpush.msra.mxu0 %v1061
        %2762 = vmatpush.msra.mxu0 %v1060
        %2763 = vmatpush.msra.mxu0 %v1059
        %2764 = vmatpush.msra.mxu0 %v1058
        %2765 = vmatmul.f32.gmra.mxu0 %v2587
        %v2766 = vpop.f32.mrf.mxu0
        %v2767 = vadd.f32 0.0, %v2766
        %2768 = vdwg.mxu0
        %2769 = vmatpush.msra.mxu0 0.0
        %2770 = vmatpush.msra.mxu0 0.0
        %2771 = vmatpush.msra.mxu0 0.0
        %2772 = vmatpush.msra.mxu0 0.0
        %2773 = vmatpush.msra.mxu0 0.0
        %2774 = vmatpush.msra.mxu0 0.0
        %2775 = vmatpush.msra.mxu0 0.0
        %2776 = vmatpush.msra.mxu0 0.0
        %2777 = vmatpush.msra.mxu0 0.0
        %2778 = vmatpush.msra.mxu0 0.0
        %2779 = vmatpush.msra.mxu0 0.0
        %2780 = vmatpush.msra.mxu0 0.0
        %2781 = vmatpush.msra.mxu0 %v1065
        %2782 = vmatpush.msra.mxu0 %v1064
        %2783 = vmatpush.msra.mxu0 %v1063
        %2784 = vmatpush.msra.mxu0 %v1062
        %2785 = vmatmul.f32.gmra.mxu0 %v2587
        %v2786 = vpop.f32.mrf.mxu0
        %v2787 = vadd.f32 0.0, %v2786
        %2788 = vdwg.mxu0
        %2789 = vmatpush.msra.mxu0 0.0
        %2790 = vmatpush.msra.mxu0 0.0
        %2791 = vmatpush.msra.mxu0 0.0
        %2792 = vmatpush.msra.mxu0 0.0
        %2793 = vmatpush.msra.mxu0 0.0
        %2794 = vmatpush.msra.mxu0 0.0
        %2795 = vmatpush.msra.mxu0 0.0
        %2796 = vmatpush.msra.mxu0 0.0
        %2797 = vmatpush.msra.mxu0 0.0
        %2798 = vmatpush.msra.mxu0 0.0
        %2799 = vmatpush.msra.mxu0 0.0
        %2800 = vmatpush.msra.mxu0 0.0
        %2801 = vmatpush.msra.mxu0 %v1069
        %2802 = vmatpush.msra.mxu0 %v1068
        %2803 = vmatpush.msra.mxu0 %v1067
        %2804 = vmatpush.msra.mxu0 %v1066
        %2805 = vmatmul.f32.gmra.mxu0 %v2587
        %v2806 = vpop.f32.mrf.mxu0
        %v2807 = vadd.f32 0.0, %v2806
        %2808 = vdwg.mxu0
        %2809 = vmatpush.msra.mxu0 0.0
        %2810 = vmatpush.msra.mxu0 0.0
        %2811 = vmatpush.msra.mxu0 0.0
        %2812 = vmatpush.msra.mxu0 0.0
        %2813 = vmatpush.msra.mxu0 0.0
        %2814 = vmatpush.msra.mxu0 0.0
        %2815 = vmatpush.msra.mxu0 0.0
        %2816 = vmatpush.msra.mxu0 0.0
        %2817 = vmatpush.msra.mxu0 0.0
        %2818 = vmatpush.msra.mxu0 0.0
        %2819 = vmatpush.msra.mxu0 0.0
        %2820 = vmatpush.msra.mxu0 0.0
        %2821 = vmatpush.msra.mxu0 %v1073
        %2822 = vmatpush.msra.mxu0 %v1072
        %2823 = vmatpush.msra.mxu0 %v1071
        %2824 = vmatpush.msra.mxu0 %v1070
        %2825 = vmatmul.f32.gmra.mxu0 %v2587
        %v2826 = vpop.f32.mrf.mxu0
        %v2827 = vadd.f32 0.0, %v2826
        %2828 = vdwg.mxu0
        %v2830 = vsel %vm1424, %v2607, 0
        %v2833 = vsel %vm1424, %v2687, 0
        %2835 = vmatpush.xpose.msra.mxu0 0.0
        %2836 = vmatpush.xpose.msra.mxu0 0.0
        %2837 = vmatpush.xpose.msra.mxu0 0.0
        %2838 = vmatpush.xpose.msra.mxu0 0.0
        %2839 = vmatpush.xpose.msra.mxu0 0.0
        %2840 = vmatpush.xpose.msra.mxu0 0.0
        %2841 = vmatpush.xpose.msra.mxu0 0.0
        %2842 = vmatpush.xpose.msra.mxu0 0.0
        %2843 = vmatpush.xpose.msra.mxu0 0.0
        %2844 = vmatpush.xpose.msra.mxu0 0.0
        %2845 = vmatpush.xpose.msra.mxu0 0.0
        %2846 = vmatpush.xpose.msra.mxu0 0.0
        %2847 = vmatpush.xpose.msra.mxu0 0.0
        %2848 = vmatpush.xpose.msra.mxu0 0.0
        %2849 = vmatpush.xpose.msra.mxu0 0.0
        %2850 = vmatpush.xpose.msra.mxu0 %v2833
        %2851 = vmatmul.f32.gmra.mxu0 %v2830
        %v2852 = vpop.f32.mrf.mxu0
        %v2853 = vadd.f32 %v2582, %v2852
        %2854 = vdwg.mxu0
        %v2856 = vsel %vm1424, %v2627, 0
        %v2859 = vsel %vm1424, %v2707, 0
        %2861 = vmatpush.xpose.msra.mxu0 0.0
        %2862 = vmatpush.xpose.msra.mxu0 0.0
        %2863 = vmatpush.xpose.msra.mxu0 0.0
        %2864 = vmatpush.xpose.msra.mxu0 0.0
        %2865 = vmatpush.xpose.msra.mxu0 0.0
        %2866 = vmatpush.xpose.msra.mxu0 0.0
        %2867 = vmatpush.xpose.msra.mxu0 0.0
        %2868 = vmatpush.xpose.msra.mxu0 0.0
        %2869 = vmatpush.xpose.msra.mxu0 0.0
        %2870 = vmatpush.xpose.msra.mxu0 0.0
        %2871 = vmatpush.xpose.msra.mxu0 0.0
        %2872 = vmatpush.xpose.msra.mxu0 0.0
        %2873 = vmatpush.xpose.msra.mxu0 0.0
        %2874 = vmatpush.xpose.msra.mxu0 0.0
        %2875 = vmatpush.xpose.msra.mxu0 0.0
        %2876 = vmatpush.xpose.msra.mxu0 %v2859
        %2877 = vmatmul.f32.gmra.mxu0 %v2856
        %v2878 = vpop.f32.mrf.mxu0
        %v2879 = vadd.f32 %v2583, %v2878
        %2880 = vdwg.mxu0
        %v2882 = vsel %vm1424, %v2647, 0
        %v2885 = vsel %vm1424, %v2727, 0
        %2887 = vmatpush.xpose.msra.mxu0 0.0
        %2888 = vmatpush.xpose.msra.mxu0 0.0
        %2889 = vmatpush.xpose.msra.mxu0 0.0
        %2890 = vmatpush.xpose.msra.mxu0 0.0
        %2891 = vmatpush.xpose.msra.mxu0 0.0
        %2892 = vmatpush.xpose.msra.mxu0 0.0
        %2893 = vmatpush.xpose.msra.mxu0 0.0
        %2894 = vmatpush.xpose.msra.mxu0 0.0
        %2895 = vmatpush.xpose.msra.mxu0 0.0
        %2896 = vmatpush.xpose.msra.mxu0 0.0
        %2897 = vmatpush.xpose.msra.mxu0 0.0
        %2898 = vmatpush.xpose.msra.mxu0 0.0
        %2899 = vmatpush.xpose.msra.mxu0 0.0
        %2900 = vmatpush.xpose.msra.mxu0 0.0
        %2901 = vmatpush.xpose.msra.mxu0 0.0
        %2902 = vmatpush.xpose.msra.mxu0 %v2885
        %2903 = vmatmul.f32.gmra.mxu0 %v2882
        %v2904 = vpop.f32.mrf.mxu0
        %v2905 = vadd.f32 %v2584, %v2904
        %2906 = vdwg.mxu0
        %v2908 = vsel %vm1424, %v2667, 0
        %v2911 = vsel %vm1424, %v2747, 0
        %2913 = vmatpush.xpose.msra.mxu0 0.0
        %2914 = vmatpush.xpose.msra.mxu0 0.0
        %2915 = vmatpush.xpose.msra.mxu0 0.0
        %2916 = vmatpush.xpose.msra.mxu0 0.0
        %2917 = vmatpush.xpose.msra.mxu0 0.0
        %2918 = vmatpush.xpose.msra.mxu0 0.0
        %2919 = vmatpush.xpose.msra.mxu0 0.0
        %2920 = vmatpush.xpose.msra.mxu0 0.0
        %2921 = vmatpush.xpose.msra.mxu0 0.0
        %2922 = vmatpush.xpose.msra.mxu0 0.0
        %2923 = vmatpush.xpose.msra.mxu0 0.0
        %2924 = vmatpush.xpose.msra.mxu0 0.0
        %2925 = vmatpush.xpose.msra.mxu0 0.0
        %2926 = vmatpush.xpose.msra.mxu0 0.0
        %2927 = vmatpush.xpose.msra.mxu0 0.0
        %2928 = vmatpush.xpose.msra.mxu0 %v2911
        %2929 = vmatmul.f32.gmra.mxu0 %v2908
        %v2930 = vpop.f32.mrf.mxu0
        %v2931 = vadd.f32 %v2585, %v2930
        %2932 = vdwg.mxu0
        %v2933 = vsel %vm1424, %v2853, -inf
        %2934 = vmax.xlane.f32.xlu0 %v2933
        %v2935 = vpop.xlane.xlu0 %2934
        %v2936 = vsel %vm1424, %v2879, -inf
        %2937 = vmax.xlane.f32.xlu0 %v2936
        %v2938 = vpop.xlane.xlu0 %2937
        %v2939 = vsel %vm1424, %v2905, -inf
        %2940 = vmax.xlane.f32.xlu0 %v2939
        %v2941 = vpop.xlane.xlu0 %2940
        %v2942 = vsel %vm1424, %v2931, -inf
        %2943 = vmax.xlane.f32.xlu0 %v2942
        %v2944 = vpop.xlane.xlu0 %2943
        %v2945 = vsub.f32 %v2853, %v2935
        %v2946 = vsub.f32 %v2879, %v2938
        %v2947 = vsub.f32 %v2905, %v2941
        %v2948 = vsub.f32 %v2931, %v2944
        %v2949 = vmul.f32 %v2945, 1.442695
        %v2950 = vpow.pop %v2949
        %v2951 = vmul.f32 %v2946, 1.442695
        %v2952 = vpow.pop %v2951
        %v2953 = vmul.f32 %v2947, 1.442695
        %v2954 = vpow.pop %v2953
        %v2955 = vmul.f32 %v2948, 1.442695
        %v2956 = vpow.pop %v2955
        %v2957 = vsel %vm1424, %v2950, 0.0
        %2958 = vadd.xlane.f32.xlu0 %v2957
        %v2959 = vpop.xlane.xlu0 %2958
        %v2960 = vsel %vm1424, %v2952, 0.0
        %2961 = vadd.xlane.f32.xlu0 %v2960
        %v2962 = vpop.xlane.xlu0 %2961
        %v2963 = vsel %vm1424, %v2954, 0.0
        %2964 = vadd.xlane.f32.xlu0 %v2963
        %v2965 = vpop.xlane.xlu0 %2964
        %v2966 = vsel %vm1424, %v2956, 0.0
        %2967 = vadd.xlane.f32.xlu0 %v2966
        %v2968 = vpop.xlane.xlu0 %2967
        %v2969 = vrcp.pop %v2959
        %v2970 = vmul.f32 %v2959, %v2969
        %v2971 = vsub.f32 1.0, %v2970
        %v2972 = vmul.f32 %v2969, %v2971
        %v2973 = vadd.f32 %v2969, %v2972
        %vm2974 = vweird.f32 %v2959
        %vm2975 = vweird.f32 %v2969
        %vm2976 = vmor %vm2974, %vm2975
        %v2977 = vsel %vm2976, %v2969, %v2973
        %v2978 = vand.u32 2147483647, %v2959
        %vm2979 = vcmp.eq.f32.partialorder %v2978, 8.507059e+37
        %v2980 = vand.u32 %v2959, 2147483648
        %v2981 = vor.u32 1.1754944e-38, %v2980
        %v2982 = vsel %vm2979, %v2981, %v2977
        %v2983 = vmul.f32 %v2950, %v2982
        %v2984 = vrcp.pop %v2962
        %v2985 = vmul.f32 %v2962, %v2984
        %v2986 = vsub.f32 1.0, %v2985
        %v2987 = vmul.f32 %v2984, %v2986
        %v2988 = vadd.f32 %v2984, %v2987
        %vm2989 = vweird.f32 %v2962
        %vm2990 = vweird.f32 %v2984
        %vm2991 = vmor %vm2989, %vm2990
        %v2992 = vsel %vm2991, %v2984, %v2988
        %v2993 = vand.u32 2147483647, %v2962
        %vm2994 = vcmp.eq.f32.partialorder %v2993, 8.507059e+37
        %v2995 = vand.u32 %v2962, 2147483648
        %v2996 = vor.u32 1.1754944e-38, %v2995
        %v2997 = vsel %vm2994, %v2996, %v2992
        %v2998 = vmul.f32 %v2952, %v2997
        %v2999 = vrcp.pop %v2965
        %v3000 = vmul.f32 %v2965, %v2999
        %v3001 = vsub.f32 1.0, %v3000
        %v3002 = vmul.f32 %v2999, %v3001
        %v3003 = vadd.f32 %v2999, %v3002
        %vm3004 = vweird.f32 %v2965
        %vm3005 = vweird.f32 %v2999
        %vm3006 = vmor %vm3004, %vm3005
        %v3007 = vsel %vm3006, %v2999, %v3003
        %v3008 = vand.u32 2147483647, %v2965
        %vm3009 = vcmp.eq.f32.partialorder %v3008, 8.507059e+37
        %v3010 = vand.u32 %v2965, 2147483648
        %v3011 = vor.u32 1.1754944e-38, %v3010
        %v3012 = vsel %vm3009, %v3011, %v3007
        %v3013 = vmul.f32 %v2954, %v3012
        %v3014 = vrcp.pop %v2968
        %v3015 = vmul.f32 %v2968, %v3014
        %v3016 = vsub.f32 1.0, %v3015
        %v3017 = vmul.f32 %v3014, %v3016
        %v3018 = vadd.f32 %v3014, %v3017
        %vm3019 = vweird.f32 %v2968
        %vm3020 = vweird.f32 %v3014
        %vm3021 = vmor %vm3019, %vm3020
        %v3022 = vsel %vm3021, %v3014, %v3018
        %v3023 = vand.u32 2147483647, %v2968
        %vm3024 = vcmp.eq.f32.partialorder %v3023, 8.507059e+37
        %v3025 = vand.u32 %v2968, 2147483648
        %v3026 = vor.u32 1.1754944e-38, %v3025
        %v3027 = vsel %vm3024, %v3026, %v3022
        %v3028 = vmul.f32 %v2956, %v3027
        %v3030 = vsel %vm1424, %v2983, 0
        %3032 = vmatpush.msra.mxu0 0.0
        %3033 = vmatpush.msra.mxu0 0.0
        %3034 = vmatpush.msra.mxu0 0.0
        %3035 = vmatpush.msra.mxu0 0.0
        %3036 = vmatpush.msra.mxu0 0.0
        %3037 = vmatpush.msra.mxu0 0.0
        %3038 = vmatpush.msra.mxu0 0.0
        %3039 = vmatpush.msra.mxu0 0.0
        %3040 = vmatpush.msra.mxu0 0.0
        %3041 = vmatpush.msra.mxu0 0.0
        %3042 = vmatpush.msra.mxu0 0.0
        %3043 = vmatpush.msra.mxu0 0.0
        %3044 = vmatpush.msra.mxu0 0.0
        %3045 = vmatpush.msra.mxu0 0.0
        %3046 = vmatpush.msra.mxu0 0.0
        %3047 = vmatpush.msra.mxu0 %v2767
        %3048 = vmatmul.f32.gmra.mxu0 %v3030
        %v3049 = vpop.f32.mrf.mxu0
        %v3050 = vadd.f32 0.0, %v3049
        %3051 = vdwg.mxu0
        %v3053 = vsel %vm1424, %v2998, 0
        %3055 = vmatpush.msra.mxu0 0.0
        %3056 = vmatpush.msra.mxu0 0.0
        %3057 = vmatpush.msra.mxu0 0.0
        %3058 = vmatpush.msra.mxu0 0.0
        %3059 = vmatpush.msra.mxu0 0.0
        %3060 = vmatpush.msra.mxu0 0.0
        %3061 = vmatpush.msra.mxu0 0.0
        %3062 = vmatpush.msra.mxu0 0.0
        %3063 = vmatpush.msra.mxu0 0.0
        %3064 = vmatpush.msra.mxu0 0.0
        %3065 = vmatpush.msra.mxu0 0.0
        %3066 = vmatpush.msra.mxu0 0.0
        %3067 = vmatpush.msra.mxu0 0.0
        %3068 = vmatpush.msra.mxu0 0.0
        %3069 = vmatpush.msra.mxu0 0.0
        %3070 = vmatpush.msra.mxu0 %v2787
        %3071 = vmatmul.f32.gmra.mxu0 %v3053
        %v3072 = vpop.f32.mrf.mxu0
        %v3073 = vadd.f32 0.0, %v3072
        %3074 = vdwg.mxu0
        %v3076 = vsel %vm1424, %v3013, 0
        %3078 = vmatpush.msra.mxu0 0.0
        %3079 = vmatpush.msra.mxu0 0.0
        %3080 = vmatpush.msra.mxu0 0.0
        %3081 = vmatpush.msra.mxu0 0.0
        %3082 = vmatpush.msra.mxu0 0.0
        %3083 = vmatpush.msra.mxu0 0.0
        %3084 = vmatpush.msra.mxu0 0.0
        %3085 = vmatpush.msra.mxu0 0.0
        %3086 = vmatpush.msra.mxu0 0.0
        %3087 = vmatpush.msra.mxu0 0.0
        %3088 = vmatpush.msra.mxu0 0.0
        %3089 = vmatpush.msra.mxu0 0.0
        %3090 = vmatpush.msra.mxu0 0.0
        %3091 = vmatpush.msra.mxu0 0.0
        %3092 = vmatpush.msra.mxu0 0.0
        %3093 = vmatpush.msra.mxu0 %v2807
        %3094 = vmatmul.f32.gmra.mxu0 %v3076
        %v3095 = vpop.f32.mrf.mxu0
        %v3096 = vadd.f32 0.0, %v3095
        %3097 = vdwg.mxu0
        %v3099 = vsel %vm1424, %v3028, 0
        %3101 = vmatpush.msra.mxu0 0.0
        %3102 = vmatpush.msra.mxu0 0.0
        %3103 = vmatpush.msra.mxu0 0.0
        %3104 = vmatpush.msra.mxu0 0.0
        %3105 = vmatpush.msra.mxu0 0.0
        %3106 = vmatpush.msra.mxu0 0.0
        %3107 = vmatpush.msra.mxu0 0.0
        %3108 = vmatpush.msra.mxu0 0.0
        %3109 = vmatpush.msra.mxu0 0.0
        %3110 = vmatpush.msra.mxu0 0.0
        %3111 = vmatpush.msra.mxu0 0.0
        %3112 = vmatpush.msra.mxu0 0.0
        %3113 = vmatpush.msra.mxu0 0.0
        %3114 = vmatpush.msra.mxu0 0.0
        %3115 = vmatpush.msra.mxu0 0.0
        %3116 = vmatpush.msra.mxu0 %v2827
        %3117 = vmatmul.f32.gmra.mxu0 %v3099
        %v3118 = vpop.f32.mrf.mxu0
        %v3119 = vadd.f32 0.0, %v3118
        %3120 = vdwg.mxu0
        %v3122 = vsel %vm1424, %v3050, 0
        %3124 = vmatpush.msra.mxu0 0.0
        %3125 = vmatpush.msra.mxu0 0.0
        %3126 = vmatpush.msra.mxu0 0.0
        %3127 = vmatpush.msra.mxu0 0.0
        %3128 = vmatpush.msra.mxu0 0.0
        %3129 = vmatpush.msra.mxu0 0.0
        %3130 = vmatpush.msra.mxu0 0.0
        %3131 = vmatpush.msra.mxu0 0.0
        %3132 = vmatpush.msra.mxu0 0.0
        %3133 = vmatpush.msra.mxu0 0.0
        %3134 = vmatpush.msra.mxu0 0.0
        %3135 = vmatpush.msra.mxu0 0.0
        %3136 = vmatpush.msra.mxu0 0.0
        %3137 = vmatpush.msra.mxu0 0.0
        %3138 = vmatpush.msra.mxu0 0.0
        %3139 = vmatpush.msra.mxu0 %v1074
        %3140 = vmatmul.f32.gmra.mxu0 %v3122
        %v3141 = vpop.f32.mrf.mxu0
        %v3142 = vadd.f32 0.0, %v3141
        %3143 = vdwg.mxu0
        %v3145 = vsel %vm1424, %v3073, 0
        %3147 = vmatpush.msra.mxu0 0.0
        %3148 = vmatpush.msra.mxu0 0.0
        %3149 = vmatpush.msra.mxu0 0.0
        %3150 = vmatpush.msra.mxu0 0.0
        %3151 = vmatpush.msra.mxu0 0.0
        %3152 = vmatpush.msra.mxu0 0.0
        %3153 = vmatpush.msra.mxu0 0.0
        %3154 = vmatpush.msra.mxu0 0.0
        %3155 = vmatpush.msra.mxu0 0.0
        %3156 = vmatpush.msra.mxu0 0.0
        %3157 = vmatpush.msra.mxu0 0.0
        %3158 = vmatpush.msra.mxu0 0.0
        %3159 = vmatpush.msra.mxu0 0.0
        %3160 = vmatpush.msra.mxu0 0.0
        %3161 = vmatpush.msra.mxu0 0.0
        %3162 = vmatpush.msra.mxu0 %v1075
        %3163 = vmatmul.f32.gmra.mxu0 %v3145
        %v3164 = vpop.f32.mrf.mxu0
        %v3165 = vadd.f32 0.0, %v3164
        %3166 = vdwg.mxu0
        %v3168 = vsel %vm1424, %v3096, 0
        %3170 = vmatpush.msra.mxu0 0.0
        %3171 = vmatpush.msra.mxu0 0.0
        %3172 = vmatpush.msra.mxu0 0.0
        %3173 = vmatpush.msra.mxu0 0.0
        %3174 = vmatpush.msra.mxu0 0.0
        %3175 = vmatpush.msra.mxu0 0.0
        %3176 = vmatpush.msra.mxu0 0.0
        %3177 = vmatpush.msra.mxu0 0.0
        %3178 = vmatpush.msra.mxu0 0.0
        %3179 = vmatpush.msra.mxu0 0.0
        %3180 = vmatpush.msra.mxu0 0.0
        %3181 = vmatpush.msra.mxu0 0.0
        %3182 = vmatpush.msra.mxu0 0.0
        %3183 = vmatpush.msra.mxu0 0.0
        %3184 = vmatpush.msra.mxu0 0.0
        %3185 = vmatpush.msra.mxu0 %v1076
        %3186 = vmatmul.f32.gmra.mxu0 %v3168
        %v3187 = vpop.f32.mrf.mxu0
        %v3188 = vadd.f32 0.0, %v3187
        %3189 = vdwg.mxu0
        %v3191 = vsel %vm1424, %v3119, 0
        %3193 = vmatpush.msra.mxu0 0.0
        %3194 = vmatpush.msra.mxu0 0.0
        %3195 = vmatpush.msra.mxu0 0.0
        %3196 = vmatpush.msra.mxu0 0.0
        %3197 = vmatpush.msra.mxu0 0.0
        %3198 = vmatpush.msra.mxu0 0.0
        %3199 = vmatpush.msra.mxu0 0.0
        %3200 = vmatpush.msra.mxu0 0.0
        %3201 = vmatpush.msra.mxu0 0.0
        %3202 = vmatpush.msra.mxu0 0.0
        %3203 = vmatpush.msra.mxu0 0.0
        %3204 = vmatpush.msra.mxu0 0.0
        %3205 = vmatpush.msra.mxu0 0.0
        %3206 = vmatpush.msra.mxu0 0.0
        %3207 = vmatpush.msra.mxu0 0.0
        %3208 = vmatpush.msra.mxu0 %v1077
        %3209 = vmatmul.f32.gmra.mxu0 %v3191
        %v3210 = vpop.f32.mrf.mxu0
        %v3211 = vadd.f32 0.0, %v3210
        %3212 = vdwg.mxu0
        %v3213 = vsel %vm1148, %v3142, 0.0
        %v3214 = vsel %vm1148, %v3165, 0.0
        %v3215 = vadd.f32 %v3213, %v3214
        %v3216 = vsel %vm1148, %v3188, 0.0
        %v3217 = vadd.f32 %v3215, %v3216
        %v3218 = vsel %vm1148, %v3211, 0.0
        %v3219 = vadd.f32 %v3217, %v3218
        %s3220 = scalar_lea.vmem %s1005, 32
        %3221 = vst.msk [vmem:[%s3220] sm:$0xff] %vm1424, %v2983
        %3222 = vst.msk [vmem:[%s3220 + $0x8] sm:$0xff] %vm1424, %v2998
        %3223 = vst.msk [vmem:[%s3220 + $0x10] sm:$0xff] %vm1424, %v3013
        %3224 = vst.msk [vmem:[%s3220 + $0x18] sm:$0xff] %vm1424, %v3028
        %v3225 = vadd.f32 %v2561, %v3219
        %v3226 = vmul.f32 %v3225, %v3225
        %v3227 = vsel %vm1148, %v3226, 0.0
        %3228 = vadd.xlane.f32.xlu0 %v3227
        %v3229 = vpop.xlane.xlu0 %3228
        %v3230 = vmul.f32 %v3229, %v1158
        %v3231 = vadd.f32 %v3230, 1e-06
        %v3232 = vrsqrt.pop %v3231
        %v3233 = vmul.f32 %v3232, %v3231
        %v3234 = vmul.f32 %v3233, %v3232
        %v3235 = vmul.f32 0.5, %v3234
        %v3236 = vsub.f32 1.5, %v3235
        %v3237 = vmul.f32 %v3232, %v3236
        %vm3238 = vweird.f32 %v3231
        %vm3239 = vweird.f32 %v3232
        %vm3240 = vmor %vm3238, %vm3239
        %v3241 = vsel %vm3240, %v3232, %v3237
        %v3242 = vmul.f32 %v3225, %v3241
        %v3243 = vmul.f32 %v3242, %v1839
        %s3244 = scalar_lea.vmem %s1, 8
        %v3245 = vld [vmem:[%s3244] sm:$0xff]
        %s3246 = scalar_lea.vmem %s3, 1
        %v3247 = vld [vmem:[%s3246] sm:$0x1]
        %v3249 = vsel %vm1148, %v3243, 0
        %3251 = vmatpush.msra.mxu0 0.0
        %3252 = vmatpush.msra.mxu0 0.0
        %3253 = vmatpush.msra.mxu0 0.0
        %3254 = vmatpush.msra.mxu0 0.0
        %3255 = vmatpush.msra.mxu0 0.0
        %3256 = vmatpush.msra.mxu0 0.0
        %3257 = vmatpush.msra.mxu0 0.0
        %3258 = vmatpush.msra.mxu0 0.0
        %3259 = vmatpush.msra.mxu0 0.0
        %3260 = vmatpush.msra.mxu0 0.0
        %3261 = vmatpush.msra.mxu0 0.0
        %3262 = vmatpush.msra.mxu0 0.0
        %3263 = vmatpush.msra.mxu0 %v1081
        %3264 = vmatpush.msra.mxu0 %v1080
        %3265 = vmatpush.msra.mxu0 %v1079
        %3266 = vmatpush.msra.mxu0 %v1078
        %3267 = vmatmul.f32.gmra.mxu0 %v3249
        %v3268 = vpop.f32.mrf.mxu0
        %v3269 = vadd.f32 0.0, %v3268
        %3270 = vdwg.mxu0
        %3271 = vmatpush.msra.mxu0 0.0
        %3272 = vmatpush.msra.mxu0 0.0
        %3273 = vmatpush.msra.mxu0 0.0
        %3274 = vmatpush.msra.mxu0 0.0
        %3275 = vmatpush.msra.mxu0 0.0
        %3276 = vmatpush.msra.mxu0 0.0
        %3277 = vmatpush.msra.mxu0 0.0
        %3278 = vmatpush.msra.mxu0 0.0
        %3279 = vmatpush.msra.mxu0 0.0
        %3280 = vmatpush.msra.mxu0 0.0
        %3281 = vmatpush.msra.mxu0 0.0
        %3282 = vmatpush.msra.mxu0 0.0
        %3283 = vmatpush.msra.mxu0 %v1085
        %3284 = vmatpush.msra.mxu0 %v1084
        %3285 = vmatpush.msra.mxu0 %v1083
        %3286 = vmatpush.msra.mxu0 %v1082
        %3287 = vmatmul.f32.gmra.mxu0 %v3249
        %v3288 = vpop.f32.mrf.mxu0
        %v3289 = vadd.f32 0.0, %v3288
        %3290 = vdwg.mxu0
        %3291 = vmatpush.msra.mxu0 0.0
        %3292 = vmatpush.msra.mxu0 0.0
        %3293 = vmatpush.msra.mxu0 0.0
        %3294 = vmatpush.msra.mxu0 0.0
        %3295 = vmatpush.msra.mxu0 0.0
        %3296 = vmatpush.msra.mxu0 0.0
        %3297 = vmatpush.msra.mxu0 0.0
        %3298 = vmatpush.msra.mxu0 0.0
        %3299 = vmatpush.msra.mxu0 0.0
        %3300 = vmatpush.msra.mxu0 0.0
        %3301 = vmatpush.msra.mxu0 0.0
        %3302 = vmatpush.msra.mxu0 0.0
        %3303 = vmatpush.msra.mxu0 %v1089
        %3304 = vmatpush.msra.mxu0 %v1088
        %3305 = vmatpush.msra.mxu0 %v1087
        %3306 = vmatpush.msra.mxu0 %v1086
        %3307 = vmatmul.f32.gmra.mxu0 %v3249
        %v3308 = vpop.f32.mrf.mxu0
        %v3309 = vadd.f32 0.0, %v3308
        %3310 = vdwg.mxu0
        %3311 = vmatpush.msra.mxu0 0.0
        %3312 = vmatpush.msra.mxu0 0.0
        %3313 = vmatpush.msra.mxu0 0.0
        %3314 = vmatpush.msra.mxu0 0.0
        %3315 = vmatpush.msra.mxu0 0.0
        %3316 = vmatpush.msra.mxu0 0.0
        %3317 = vmatpush.msra.mxu0 0.0
        %3318 = vmatpush.msra.mxu0 0.0
        %3319 = vmatpush.msra.mxu0 0.0
        %3320 = vmatpush.msra.mxu0 0.0
        %3321 = vmatpush.msra.mxu0 0.0
        %3322 = vmatpush.msra.mxu0 0.0
        %3323 = vmatpush.msra.mxu0 %v1093
        %3324 = vmatpush.msra.mxu0 %v1092
        %3325 = vmatpush.msra.mxu0 %v1091
        %3326 = vmatpush.msra.mxu0 %v1090
        %3327 = vmatmul.f32.gmra.mxu0 %v3249
        %v3328 = vpop.f32.mrf.mxu0
        %v3329 = vadd.f32 0.0, %v3328
        %3330 = vdwg.mxu0
        %v3332 = vsel %vm1148, %v3245, 0
        %3334 = vmatpush.msra.mxu0 0.0
        %3335 = vmatpush.msra.mxu0 0.0
        %3336 = vmatpush.msra.mxu0 0.0
        %3337 = vmatpush.msra.mxu0 0.0
        %3338 = vmatpush.msra.mxu0 0.0
        %3339 = vmatpush.msra.mxu0 0.0
        %3340 = vmatpush.msra.mxu0 0.0
        %3341 = vmatpush.msra.mxu0 0.0
        %3342 = vmatpush.msra.mxu0 0.0
        %3343 = vmatpush.msra.mxu0 0.0
        %3344 = vmatpush.msra.mxu0 0.0
        %3345 = vmatpush.msra.mxu0 0.0
        %3346 = vmatpush.msra.mxu0 %v1097
        %3347 = vmatpush.msra.mxu0 %v1096
        %3348 = vmatpush.msra.mxu0 %v1095
        %3349 = vmatpush.msra.mxu0 %v1094
        %3350 = vmatmul.f32.gmra.mxu0 %v3332
        %v3351 = vpop.f32.mrf.mxu0
        %v3352 = vadd.f32 0.0, %v3351
        %3353 = vdwg.mxu0
        %3354 = vmatpush.msra.mxu0 0.0
        %3355 = vmatpush.msra.mxu0 0.0
        %3356 = vmatpush.msra.mxu0 0.0
        %3357 = vmatpush.msra.mxu0 0.0
        %3358 = vmatpush.msra.mxu0 0.0
        %3359 = vmatpush.msra.mxu0 0.0
        %3360 = vmatpush.msra.mxu0 0.0
        %3361 = vmatpush.msra.mxu0 0.0
        %3362 = vmatpush.msra.mxu0 0.0
        %3363 = vmatpush.msra.mxu0 0.0
        %3364 = vmatpush.msra.mxu0 0.0
        %3365 = vmatpush.msra.mxu0 0.0
        %3366 = vmatpush.msra.mxu0 %v1101
        %3367 = vmatpush.msra.mxu0 %v1100
        %3368 = vmatpush.msra.mxu0 %v1099
        %3369 = vmatpush.msra.mxu0 %v1098
        %3370 = vmatmul.f32.gmra.mxu0 %v3332
        %v3371 = vpop.f32.mrf.mxu0
        %v3372 = vadd.f32 0.0, %v3371
        %3373 = vdwg.mxu0
        %3374 = vmatpush.msra.mxu0 0.0
        %3375 = vmatpush.msra.mxu0 0.0
        %3376 = vmatpush.msra.mxu0 0.0
        %3377 = vmatpush.msra.mxu0 0.0
        %3378 = vmatpush.msra.mxu0 0.0
        %3379 = vmatpush.msra.mxu0 0.0
        %3380 = vmatpush.msra.mxu0 0.0
        %3381 = vmatpush.msra.mxu0 0.0
        %3382 = vmatpush.msra.mxu0 0.0
        %3383 = vmatpush.msra.mxu0 0.0
        %3384 = vmatpush.msra.mxu0 0.0
        %3385 = vmatpush.msra.mxu0 0.0
        %3386 = vmatpush.msra.mxu0 %v1105
        %3387 = vmatpush.msra.mxu0 %v1104
        %3388 = vmatpush.msra.mxu0 %v1103
        %3389 = vmatpush.msra.mxu0 %v1102
        %3390 = vmatmul.f32.gmra.mxu0 %v3332
        %v3391 = vpop.f32.mrf.mxu0
        %v3392 = vadd.f32 0.0, %v3391
        %3393 = vdwg.mxu0
        %3394 = vmatpush.msra.mxu0 0.0
        %3395 = vmatpush.msra.mxu0 0.0
        %3396 = vmatpush.msra.mxu0 0.0
        %3397 = vmatpush.msra.mxu0 0.0
        %3398 = vmatpush.msra.mxu0 0.0
        %3399 = vmatpush.msra.mxu0 0.0
        %3400 = vmatpush.msra.mxu0 0.0
        %3401 = vmatpush.msra.mxu0 0.0
        %3402 = vmatpush.msra.mxu0 0.0
        %3403 = vmatpush.msra.mxu0 0.0
        %3404 = vmatpush.msra.mxu0 0.0
        %3405 = vmatpush.msra.mxu0 0.0
        %3406 = vmatpush.msra.mxu0 %v1109
        %3407 = vmatpush.msra.mxu0 %v1108
        %3408 = vmatpush.msra.mxu0 %v1107
        %3409 = vmatpush.msra.mxu0 %v1106
        %3410 = vmatmul.f32.gmra.mxu0 %v3332
        %v3411 = vpop.f32.mrf.mxu0
        %v3412 = vadd.f32 0.0, %v3411
        %3413 = vdwg.mxu0
        %3414 = vmatpush.msra.mxu0 0.0
        %3415 = vmatpush.msra.mxu0 0.0
        %3416 = vmatpush.msra.mxu0 0.0
        %3417 = vmatpush.msra.mxu0 0.0
        %3418 = vmatpush.msra.mxu0 0.0
        %3419 = vmatpush.msra.mxu0 0.0
        %3420 = vmatpush.msra.mxu0 0.0
        %3421 = vmatpush.msra.mxu0 0.0
        %3422 = vmatpush.msra.mxu0 0.0
        %3423 = vmatpush.msra.mxu0 0.0
        %3424 = vmatpush.msra.mxu0 0.0
        %3425 = vmatpush.msra.mxu0 0.0
        %3426 = vmatpush.msra.mxu0 %v1113
        %3427 = vmatpush.msra.mxu0 %v1112
        %3428 = vmatpush.msra.mxu0 %v1111
        %3429 = vmatpush.msra.mxu0 %v1110
        %3430 = vmatmul.f32.gmra.mxu0 %v3332
        %v3431 = vpop.f32.mrf.mxu0
        %v3432 = vadd.f32 0.0, %v3431
        %3433 = vdwg.mxu0
        %3434 = vmatpush.msra.mxu0 0.0
        %3435 = vmatpush.msra.mxu0 0.0
        %3436 = vmatpush.msra.mxu0 0.0
        %3437 = vmatpush.msra.mxu0 0.0
        %3438 = vmatpush.msra.mxu0 0.0
        %3439 = vmatpush.msra.mxu0 0.0
        %3440 = vmatpush.msra.mxu0 0.0
        %3441 = vmatpush.msra.mxu0 0.0
        %3442 = vmatpush.msra.mxu0 0.0
        %3443 = vmatpush.msra.mxu0 0.0
        %3444 = vmatpush.msra.mxu0 0.0
        %3445 = vmatpush.msra.mxu0 0.0
        %3446 = vmatpush.msra.mxu0 %v1117
        %3447 = vmatpush.msra.mxu0 %v1116
        %3448 = vmatpush.msra.mxu0 %v1115
        %3449 = vmatpush.msra.mxu0 %v1114
        %3450 = vmatmul.f32.gmra.mxu0 %v3332
        %v3451 = vpop.f32.mrf.mxu0
        %v3452 = vadd.f32 0.0, %v3451
        %3453 = vdwg.mxu0
        %3454 = vmatpush.msra.mxu0 0.0
        %3455 = vmatpush.msra.mxu0 0.0
        %3456 = vmatpush.msra.mxu0 0.0
        %3457 = vmatpush.msra.mxu0 0.0
        %3458 = vmatpush.msra.mxu0 0.0
        %3459 = vmatpush.msra.mxu0 0.0
        %3460 = vmatpush.msra.mxu0 0.0
        %3461 = vmatpush.msra.mxu0 0.0
        %3462 = vmatpush.msra.mxu0 0.0
        %3463 = vmatpush.msra.mxu0 0.0
        %3464 = vmatpush.msra.mxu0 0.0
        %3465 = vmatpush.msra.mxu0 0.0
        %3466 = vmatpush.msra.mxu0 %v1121
        %3467 = vmatpush.msra.mxu0 %v1120
        %3468 = vmatpush.msra.mxu0 %v1119
        %3469 = vmatpush.msra.mxu0 %v1118
        %3470 = vmatmul.f32.gmra.mxu0 %v3332
        %v3471 = vpop.f32.mrf.mxu0
        %v3472 = vadd.f32 0.0, %v3471
        %3473 = vdwg.mxu0
        %3474 = vmatpush.msra.mxu0 0.0
        %3475 = vmatpush.msra.mxu0 0.0
        %3476 = vmatpush.msra.mxu0 0.0
        %3477 = vmatpush.msra.mxu0 0.0
        %3478 = vmatpush.msra.mxu0 0.0
        %3479 = vmatpush.msra.mxu0 0.0
        %3480 = vmatpush.msra.mxu0 0.0
        %3481 = vmatpush.msra.mxu0 0.0
        %3482 = vmatpush.msra.mxu0 0.0
        %3483 = vmatpush.msra.mxu0 0.0
        %3484 = vmatpush.msra.mxu0 0.0
        %3485 = vmatpush.msra.mxu0 0.0
        %3486 = vmatpush.msra.mxu0 %v1125
        %3487 = vmatpush.msra.mxu0 %v1124
        %3488 = vmatpush.msra.mxu0 %v1123
        %3489 = vmatpush.msra.mxu0 %v1122
        %3490 = vmatmul.f32.gmra.mxu0 %v3332
        %v3491 = vpop.f32.mrf.mxu0
        %v3492 = vadd.f32 0.0, %v3491
        %3493 = vdwg.mxu0
        %v3495 = vperm.slane %v3247, 0
        %v3498 = vsel %vm1424, %v3269, 0
        %v3501 = vsel %vm1424, %v3352, 0
        %3503 = vmatpush.xpose.msra.mxu0 0.0
        %3504 = vmatpush.xpose.msra.mxu0 0.0
        %3505 = vmatpush.xpose.msra.mxu0 0.0
        %3506 = vmatpush.xpose.msra.mxu0 0.0
        %3507 = vmatpush.xpose.msra.mxu0 0.0
        %3508 = vmatpush.xpose.msra.mxu0 0.0
        %3509 = vmatpush.xpose.msra.mxu0 0.0
        %3510 = vmatpush.xpose.msra.mxu0 0.0
        %3511 = vmatpush.xpose.msra.mxu0 0.0
        %3512 = vmatpush.xpose.msra.mxu0 0.0
        %3513 = vmatpush.xpose.msra.mxu0 0.0
        %3514 = vmatpush.xpose.msra.mxu0 0.0
        %3515 = vmatpush.xpose.msra.mxu0 0.0
        %3516 = vmatpush.xpose.msra.mxu0 0.0
        %3517 = vmatpush.xpose.msra.mxu0 0.0
        %3518 = vmatpush.xpose.msra.mxu0 %v3501
        %3519 = vmatmul.f32.gmra.mxu0 %v3498
        %v3520 = vpop.f32.mrf.mxu0
        %v3521 = vadd.f32 %v3495, %v3520
        %3522 = vdwg.mxu0
        %v3524 = vsel %vm1424, %v3289, 0
        %v3527 = vsel %vm1424, %v3372, 0
        %3529 = vmatpush.xpose.msra.mxu0 0.0
        %3530 = vmatpush.xpose.msra.mxu0 0.0
        %3531 = vmatpush.xpose.msra.mxu0 0.0
        %3532 = vmatpush.xpose.msra.mxu0 0.0
        %3533 = vmatpush.xpose.msra.mxu0 0.0
        %3534 = vmatpush.xpose.msra.mxu0 0.0
        %3535 = vmatpush.xpose.msra.mxu0 0.0
        %3536 = vmatpush.xpose.msra.mxu0 0.0
        %3537 = vmatpush.xpose.msra.mxu0 0.0
        %3538 = vmatpush.xpose.msra.mxu0 0.0
        %3539 = vmatpush.xpose.msra.mxu0 0.0
        %3540 = vmatpush.xpose.msra.mxu0 0.0
        %3541 = vmatpush.xpose.msra.mxu0 0.0
        %3542 = vmatpush.xpose.msra.mxu0 0.0
        %3543 = vmatpush.xpose.msra.mxu0 0.0
        %3544 = vmatpush.xpose.msra.mxu0 %v3527
        %3545 = vmatmul.f32.gmra.mxu0 %v3524
        %v3546 = vpop.f32.mrf.mxu0
        %v3547 = vadd.f32 %v3495, %v3546
        %3548 = vdwg.mxu0
        %v3550 = vsel %vm1424, %v3309, 0
        %v3553 = vsel %vm1424, %v3392, 0
        %3555 = vmatpush.xpose.msra.mxu0 0.0
        %3556 = vmatpush.xpose.msra.mxu0 0.0
        %3557 = vmatpush.xpose.msra.mxu0 0.0
        %3558 = vmatpush.xpose.msra.mxu0 0.0
        %3559 = vmatpush.xpose.msra.mxu0 0.0
        %3560 = vmatpush.xpose.msra.mxu0 0.0
        %3561 = vmatpush.xpose.msra.mxu0 0.0
        %3562 = vmatpush.xpose.msra.mxu0 0.0
        %3563 = vmatpush.xpose.msra.mxu0 0.0
        %3564 = vmatpush.xpose.msra.mxu0 0.0
        %3565 = vmatpush.xpose.msra.mxu0 0.0
        %3566 = vmatpush.xpose.msra.mxu0 0.0
        %3567 = vmatpush.xpose.msra.mxu0 0.0
        %3568 = vmatpush.xpose.msra.mxu0 0.0
        %3569 = vmatpush.xpose.msra.mxu0 0.0
        %3570 = vmatpush.xpose.msra.mxu0 %v3553
        %3571 = vmatmul.f32.gmra.mxu0 %v3550
        %v3572 = vpop.f32.mrf.mxu0
        %v3573 = vadd.f32 %v3495, %v3572
        %3574 = vdwg.mxu0
        %v3576 = vsel %vm1424, %v3329, 0
        %v3579 = vsel %vm1424, %v3412, 0
        %3581 = vmatpush.xpose.msra.mxu0 0.0
        %3582 = vmatpush.xpose.msra.mxu0 0.0
        %3583 = vmatpush.xpose.msra.mxu0 0.0
        %3584 = vmatpush.xpose.msra.mxu0 0.0
        %3585 = vmatpush.xpose.msra.mxu0 0.0
        %3586 = vmatpush.xpose.msra.mxu0 0.0
        %3587 = vmatpush.xpose.msra.mxu0 0.0
        %3588 = vmatpush.xpose.msra.mxu0 0.0
        %3589 = vmatpush.xpose.msra.mxu0 0.0
        %3590 = vmatpush.xpose.msra.mxu0 0.0
        %3591 = vmatpush.xpose.msra.mxu0 0.0
        %3592 = vmatpush.xpose.msra.mxu0 0.0
        %3593 = vmatpush.xpose.msra.mxu0 0.0
        %3594 = vmatpush.xpose.msra.mxu0 0.0
        %3595 = vmatpush.xpose.msra.mxu0 0.0
        %3596 = vmatpush.xpose.msra.mxu0 %v3579
        %3597 = vmatmul.f32.gmra.mxu0 %v3576
        %v3598 = vpop.f32.mrf.mxu0
        %v3599 = vadd.f32 %v3495, %v3598
        %3600 = vdwg.mxu0
        %v3601 = vsel %vm1424, %v3521, -inf
        %3602 = vmax.xlane.f32.xlu0 %v3601
        %v3603 = vpop.xlane.xlu0 %3602
        %v3604 = vsel %vm1424, %v3547, -inf
        %3605 = vmax.xlane.f32.xlu0 %v3604
        %v3606 = vpop.xlane.xlu0 %3605
        %v3607 = vsel %vm1424, %v3573, -inf
        %3608 = vmax.xlane.f32.xlu0 %v3607
        %v3609 = vpop.xlane.xlu0 %3608
        %v3610 = vsel %vm1424, %v3599, -inf
        %3611 = vmax.xlane.f32.xlu0 %v3610
        %v3612 = vpop.xlane.xlu0 %3611
        %v3613 = vsub.f32 %v3521, %v3603
        %v3614 = vsub.f32 %v3547, %v3606
        %v3615 = vsub.f32 %v3573, %v3609
        %v3616 = vsub.f32 %v3599, %v3612
        %v3617 = vmul.f32 %v3613, 1.442695
        %v3618 = vpow.pop %v3617
        %v3619 = vmul.f32 %v3614, 1.442695
        %v3620 = vpow.pop %v3619
        %v3621 = vmul.f32 %v3615, 1.442695
        %v3622 = vpow.pop %v3621
        %v3623 = vmul.f32 %v3616, 1.442695
        %v3624 = vpow.pop %v3623
        %v3625 = vsel %vm1424, %v3618, 0.0
        %3626 = vadd.xlane.f32.xlu0 %v3625
        %v3627 = vpop.xlane.xlu0 %3626
        %v3628 = vsel %vm1424, %v3620, 0.0
        %3629 = vadd.xlane.f32.xlu0 %v3628
        %v3630 = vpop.xlane.xlu0 %3629
        %v3631 = vsel %vm1424, %v3622, 0.0
        %3632 = vadd.xlane.f32.xlu0 %v3631
        %v3633 = vpop.xlane.xlu0 %3632
        %v3634 = vsel %vm1424, %v3624, 0.0
        %3635 = vadd.xlane.f32.xlu0 %v3634
        %v3636 = vpop.xlane.xlu0 %3635
        %v3637 = vrcp.pop %v3627
        %v3638 = vmul.f32 %v3627, %v3637
        %v3639 = vsub.f32 1.0, %v3638
        %v3640 = vmul.f32 %v3637, %v3639
        %v3641 = vadd.f32 %v3637, %v3640
        %vm3642 = vweird.f32 %v3627
        %vm3643 = vweird.f32 %v3637
        %vm3644 = vmor %vm3642, %vm3643
        %v3645 = vsel %vm3644, %v3637, %v3641
        %v3646 = vand.u32 2147483647, %v3627
        %vm3647 = vcmp.eq.f32.partialorder %v3646, 8.507059e+37
        %v3648 = vand.u32 %v3627, 2147483648
        %v3649 = vor.u32 1.1754944e-38, %v3648
        %v3650 = vsel %vm3647, %v3649, %v3645
        %v3651 = vmul.f32 %v3618, %v3650
        %v3652 = vrcp.pop %v3630
        %v3653 = vmul.f32 %v3630, %v3652
        %v3654 = vsub.f32 1.0, %v3653
        %v3655 = vmul.f32 %v3652, %v3654
        %v3656 = vadd.f32 %v3652, %v3655
        %vm3657 = vweird.f32 %v3630
        %vm3658 = vweird.f32 %v3652
        %vm3659 = vmor %vm3657, %vm3658
        %v3660 = vsel %vm3659, %v3652, %v3656
        %v3661 = vand.u32 2147483647, %v3630
        %vm3662 = vcmp.eq.f32.partialorder %v3661, 8.507059e+37
        %v3663 = vand.u32 %v3630, 2147483648
        %v3664 = vor.u32 1.1754944e-38, %v3663
        %v3665 = vsel %vm3662, %v3664, %v3660
        %v3666 = vmul.f32 %v3620, %v3665
        %v3667 = vrcp.pop %v3633
        %v3668 = vmul.f32 %v3633, %v3667
        %v3669 = vsub.f32 1.0, %v3668
        %v3670 = vmul.f32 %v3667, %v3669
        %v3671 = vadd.f32 %v3667, %v3670
        %vm3672 = vweird.f32 %v3633
        %vm3673 = vweird.f32 %v3667
        %vm3674 = vmor %vm3672, %vm3673
        %v3675 = vsel %vm3674, %v3667, %v3671
        %v3676 = vand.u32 2147483647, %v3633
        %vm3677 = vcmp.eq.f32.partialorder %v3676, 8.507059e+37
        %v3678 = vand.u32 %v3633, 2147483648
        %v3679 = vor.u32 1.1754944e-38, %v3678
        %v3680 = vsel %vm3677, %v3679, %v3675
        %v3681 = vmul.f32 %v3622, %v3680
        %v3682 = vrcp.pop %v3636
        %v3683 = vmul.f32 %v3636, %v3682
        %v3684 = vsub.f32 1.0, %v3683
        %v3685 = vmul.f32 %v3682, %v3684
        %v3686 = vadd.f32 %v3682, %v3685
        %vm3687 = vweird.f32 %v3636
        %vm3688 = vweird.f32 %v3682
        %vm3689 = vmor %vm3687, %vm3688
        %v3690 = vsel %vm3689, %v3682, %v3686
        %v3691 = vand.u32 2147483647, %v3636
        %vm3692 = vcmp.eq.f32.partialorder %v3691, 8.507059e+37
        %v3693 = vand.u32 %v3636, 2147483648
        %v3694 = vor.u32 1.1754944e-38, %v3693
        %v3695 = vsel %vm3692, %v3694, %v3690
        %v3696 = vmul.f32 %v3624, %v3695
        %v3698 = vsel %vm1424, %v3651, 0
        %3700 = vmatpush.msra.mxu0 0.0
        %3701 = vmatpush.msra.mxu0 0.0
        %3702 = vmatpush.msra.mxu0 0.0
        %3703 = vmatpush.msra.mxu0 0.0
        %3704 = vmatpush.msra.mxu0 0.0
        %3705 = vmatpush.msra.mxu0 0.0
        %3706 = vmatpush.msra.mxu0 0.0
        %3707 = vmatpush.msra.mxu0 0.0
        %3708 = vmatpush.msra.mxu0 0.0
        %3709 = vmatpush.msra.mxu0 0.0
        %3710 = vmatpush.msra.mxu0 0.0
        %3711 = vmatpush.msra.mxu0 0.0
        %3712 = vmatpush.msra.mxu0 0.0
        %3713 = vmatpush.msra.mxu0 0.0
        %3714 = vmatpush.msra.mxu0 0.0
        %3715 = vmatpush.msra.mxu0 %v3432
        %3716 = vmatmul.f32.gmra.mxu0 %v3698
        %v3717 = vpop.f32.mrf.mxu0
        %v3718 = vadd.f32 0.0, %v3717
        %3719 = vdwg.mxu0
        %v3721 = vsel %vm1424, %v3666, 0
        %3723 = vmatpush.msra.mxu0 0.0
        %3724 = vmatpush.msra.mxu0 0.0
        %3725 = vmatpush.msra.mxu0 0.0
        %3726 = vmatpush.msra.mxu0 0.0
        %3727 = vmatpush.msra.mxu0 0.0
        %3728 = vmatpush.msra.mxu0 0.0
        %3729 = vmatpush.msra.mxu0 0.0
        %3730 = vmatpush.msra.mxu0 0.0
        %3731 = vmatpush.msra.mxu0 0.0
        %3732 = vmatpush.msra.mxu0 0.0
        %3733 = vmatpush.msra.mxu0 0.0
        %3734 = vmatpush.msra.mxu0 0.0
        %3735 = vmatpush.msra.mxu0 0.0
        %3736 = vmatpush.msra.mxu0 0.0
        %3737 = vmatpush.msra.mxu0 0.0
        %3738 = vmatpush.msra.mxu0 %v3452
        %3739 = vmatmul.f32.gmra.mxu0 %v3721
        %v3740 = vpop.f32.mrf.mxu0
        %v3741 = vadd.f32 0.0, %v3740
        %3742 = vdwg.mxu0
        %v3744 = vsel %vm1424, %v3681, 0
        %3746 = vmatpush.msra.mxu0 0.0
        %3747 = vmatpush.msra.mxu0 0.0
        %3748 = vmatpush.msra.mxu0 0.0
        %3749 = vmatpush.msra.mxu0 0.0
        %3750 = vmatpush.msra.mxu0 0.0
        %3751 = vmatpush.msra.mxu0 0.0
        %3752 = vmatpush.msra.mxu0 0.0
        %3753 = vmatpush.msra.mxu0 0.0
        %3754 = vmatpush.msra.mxu0 0.0
        %3755 = vmatpush.msra.mxu0 0.0
        %3756 = vmatpush.msra.mxu0 0.0
        %3757 = vmatpush.msra.mxu0 0.0
        %3758 = vmatpush.msra.mxu0 0.0
        %3759 = vmatpush.msra.mxu0 0.0
        %3760 = vmatpush.msra.mxu0 0.0
        %3761 = vmatpush.msra.mxu0 %v3472
        %3762 = vmatmul.f32.gmra.mxu0 %v3744
        %v3763 = vpop.f32.mrf.mxu0
        %v3764 = vadd.f32 0.0, %v3763
        %3765 = vdwg.mxu0
        %v3767 = vsel %vm1424, %v3696, 0
        %3769 = vmatpush.msra.mxu0 0.0
        %3770 = vmatpush.msra.mxu0 0.0
        %3771 = vmatpush.msra.mxu0 0.0
        %3772 = vmatpush.msra.mxu0 0.0
        %3773 = vmatpush.msra.mxu0 0.0
        %3774 = vmatpush.msra.mxu0 0.0
        %3775 = vmatpush.msra.mxu0 0.0
        %3776 = vmatpush.msra.mxu0 0.0
        %3777 = vmatpush.msra.mxu0 0.0
        %3778 = vmatpush.msra.mxu0 0.0
        %3779 = vmatpush.msra.mxu0 0.0
        %3780 = vmatpush.msra.mxu0 0.0
        %3781 = vmatpush.msra.mxu0 0.0
        %3782 = vmatpush.msra.mxu0 0.0
        %3783 = vmatpush.msra.mxu0 0.0
        %3784 = vmatpush.msra.mxu0 %v3492
        %3785 = vmatmul.f32.gmra.mxu0 %v3767
        %v3786 = vpop.f32.mrf.mxu0
        %v3787 = vadd.f32 0.0, %v3786
        %3788 = vdwg.mxu0
        %v3790 = vsel %vm1424, %v3718, 0
        %3792 = vmatpush.msra.mxu0 0.0
        %3793 = vmatpush.msra.mxu0 0.0
        %3794 = vmatpush.msra.mxu0 0.0
        %3795 = vmatpush.msra.mxu0 0.0
        %3796 = vmatpush.msra.mxu0 0.0
        %3797 = vmatpush.msra.mxu0 0.0
        %3798 = vmatpush.msra.mxu0 0.0
        %3799 = vmatpush.msra.mxu0 0.0
        %3800 = vmatpush.msra.mxu0 0.0
        %3801 = vmatpush.msra.mxu0 0.0
        %3802 = vmatpush.msra.mxu0 0.0
        %3803 = vmatpush.msra.mxu0 0.0
        %3804 = vmatpush.msra.mxu0 0.0
        %3805 = vmatpush.msra.mxu0 0.0
        %3806 = vmatpush.msra.mxu0 0.0
        %3807 = vmatpush.msra.mxu0 %v1126
        %3808 = vmatmul.f32.gmra.mxu0 %v3790
        %v3809 = vpop.f32.mrf.mxu0
        %v3810 = vadd.f32 0.0, %v3809
        %3811 = vdwg.mxu0
        %v3813 = vsel %vm1424, %v3741, 0
        %3815 = vmatpush.msra.mxu0 0.0
        %3816 = vmatpush.msra.mxu0 0.0
        %3817 = vmatpush.msra.mxu0 0.0
        %3818 = vmatpush.msra.mxu0 0.0
        %3819 = vmatpush.msra.mxu0 0.0
        %3820 = vmatpush.msra.mxu0 0.0
        %3821 = vmatpush.msra.mxu0 0.0
        %3822 = vmatpush.msra.mxu0 0.0
        %3823 = vmatpush.msra.mxu0 0.0
        %3824 = vmatpush.msra.mxu0 0.0
        %3825 = vmatpush.msra.mxu0 0.0
        %3826 = vmatpush.msra.mxu0 0.0
        %3827 = vmatpush.msra.mxu0 0.0
        %3828 = vmatpush.msra.mxu0 0.0
        %3829 = vmatpush.msra.mxu0 0.0
        %3830 = vmatpush.msra.mxu0 %v1127
        %3831 = vmatmul.f32.gmra.mxu0 %v3813
        %v3832 = vpop.f32.mrf.mxu0
        %v3833 = vadd.f32 0.0, %v3832
        %3834 = vdwg.mxu0
        %v3836 = vsel %vm1424, %v3764, 0
        %3838 = vmatpush.msra.mxu0 0.0
        %3839 = vmatpush.msra.mxu0 0.0
        %3840 = vmatpush.msra.mxu0 0.0
        %3841 = vmatpush.msra.mxu0 0.0
        %3842 = vmatpush.msra.mxu0 0.0
        %3843 = vmatpush.msra.mxu0 0.0
        %3844 = vmatpush.msra.mxu0 0.0
        %3845 = vmatpush.msra.mxu0 0.0
        %3846 = vmatpush.msra.mxu0 0.0
        %3847 = vmatpush.msra.mxu0 0.0
        %3848 = vmatpush.msra.mxu0 0.0
        %3849 = vmatpush.msra.mxu0 0.0
        %3850 = vmatpush.msra.mxu0 0.0
        %3851 = vmatpush.msra.mxu0 0.0
        %3852 = vmatpush.msra.mxu0 0.0
        %3853 = vmatpush.msra.mxu0 %v1128
        %3854 = vmatmul.f32.gmra.mxu0 %v3836
        %v3855 = vpop.f32.mrf.mxu0
        %v3856 = vadd.f32 0.0, %v3855
        %3857 = vdwg.mxu0
        %v3859 = vsel %vm1424, %v3787, 0
        %3861 = vmatpush.msra.mxu0 0.0
        %3862 = vmatpush.msra.mxu0 0.0
        %3863 = vmatpush.msra.mxu0 0.0
        %3864 = vmatpush.msra.mxu0 0.0
        %3865 = vmatpush.msra.mxu0 0.0
        %3866 = vmatpush.msra.mxu0 0.0
        %3867 = vmatpush.msra.mxu0 0.0
        %3868 = vmatpush.msra.mxu0 0.0
        %3869 = vmatpush.msra.mxu0 0.0
        %3870 = vmatpush.msra.mxu0 0.0
        %3871 = vmatpush.msra.mxu0 0.0
        %3872 = vmatpush.msra.mxu0 0.0
        %3873 = vmatpush.msra.mxu0 0.0
        %3874 = vmatpush.msra.mxu0 0.0
        %3875 = vmatpush.msra.mxu0 0.0
        %3876 = vmatpush.msra.mxu0 %v1129
        %3877 = vmatmul.f32.gmra.mxu0 %v3859
        %v3878 = vpop.f32.mrf.mxu0
        %v3879 = vadd.f32 0.0, %v3878
        %3880 = vdwg.mxu0
        %v3881 = vsel %vm1148, %v3810, 0.0
        %v3882 = vsel %vm1148, %v3833, 0.0
        %v3883 = vadd.f32 %v3881, %v3882
        %v3884 = vsel %vm1148, %v3856, 0.0
        %v3885 = vadd.f32 %v3883, %v3884
        %v3886 = vsel %vm1148, %v3879, 0.0
        %v3887 = vadd.f32 %v3885, %v3886
        %s3888 = scalar_lea.vmem %s1012, 32
        %3889 = vst.msk [vmem:[%s3888] sm:$0xff] %vm1424, %v3651
        %3890 = vst.msk [vmem:[%s3888 + $0x8] sm:$0xff] %vm1424, %v3666
        %3891 = vst.msk [vmem:[%s3888 + $0x10] sm:$0xff] %vm1424, %v3681
        %3892 = vst.msk [vmem:[%s3888 + $0x18] sm:$0xff] %vm1424, %v3696
        %v3893 = vadd.f32 %v3225, %v3887
        %v3894 = vmul.f32 %v3893, %v3893
        %v3895 = vsel %vm1148, %v3894, 0.0
        %3896 = vadd.xlane.f32.xlu0 %v3895
        %v3897 = vpop.xlane.xlu0 %3896
        %v3898 = vmul.f32 %v3897, %v1158
        %v3899 = vadd.f32 %v3898, 1e-06
        %v3900 = vrsqrt.pop %v3899
        %v3901 = vmul.f32 %v3900, %v3899
        %v3902 = vmul.f32 %v3901, %v3900
        %v3903 = vmul.f32 0.5, %v3902
        %v3904 = vsub.f32 1.5, %v3903
        %v3905 = vmul.f32 %v3900, %v3904
        %vm3906 = vweird.f32 %v3899
        %vm3907 = vweird.f32 %v3900
        %vm3908 = vmor %vm3906, %vm3907
        %v3909 = vsel %vm3908, %v3900, %v3905
        %v3910 = vmul.f32 %v3893, %v3909
        %v3911 = vmul.f32 %v3910, %v2507
        %v3913 = vsel %vm1148, %v3911, 0
        %3915 = vmatpush.msra.mxu0 0.0
        %3916 = vmatpush.msra.mxu0 0.0
        %3917 = vmatpush.msra.mxu0 0.0
        %3918 = vmatpush.msra.mxu0 0.0
        %3919 = vmatpush.msra.mxu0 0.0
        %3920 = vmatpush.msra.mxu0 0.0
        %3921 = vmatpush.msra.mxu0 0.0
        %3922 = vmatpush.msra.mxu0 0.0
        %3923 = vmatpush.msra.mxu0 0.0
        %3924 = vmatpush.msra.mxu0 0.0
        %3925 = vmatpush.msra.mxu0 0.0
        %3926 = vmatpush.msra.mxu0 0.0
        %3927 = vmatpush.msra.mxu0 %v1133
        %3928 = vmatpush.msra.mxu0 %v1132
        %3929 = vmatpush.msra.mxu0 %v1131
        %3930 = vmatpush.msra.mxu0 %v1130
        %3931 = vmatmul.f32.gmra.mxu0 %v3913
        %v3932 = vpop.f32.mrf.mxu0
        %v3933 = vadd.f32 0.0, %v3932
        %3934 = vdwg.mxu0
        %v3935 = vmax.f32 %v3933, 0.0
        %v3937 = vsel %vm2534, %v3935, 0
        %3939 = vmatpush.msra.mxu0 0.0
        %3940 = vmatpush.msra.mxu0 0.0
        %3941 = vmatpush.msra.mxu0 0.0
        %3942 = vmatpush.msra.mxu0 0.0
        %3943 = vmatpush.msra.mxu0 0.0
        %3944 = vmatpush.msra.mxu0 0.0
        %3945 = vmatpush.msra.mxu0 0.0
        %3946 = vmatpush.msra.mxu0 0.0
        %3947 = vmatpush.msra.mxu0 %v1141
        %3948 = vmatpush.msra.mxu0 %v1140
        %3949 = vmatpush.msra.mxu0 %v1139
        %3950 = vmatpush.msra.mxu0 %v1138
        %3951 = vmatpush.msra.mxu0 %v1137
        %3952 = vmatpush.msra.mxu0 %v1136
        %3953 = vmatpush.msra.mxu0 %v1135
        %3954 = vmatpush.msra.mxu0 %v1134
        %3955 = vmatmul.f32.gmra.mxu0 %v3937
        %v3956 = vpop.f32.mrf.mxu0
        %v3957 = vadd.f32 0.0, %v3956
        %3958 = vdwg.mxu0
        %v3959 = vadd.f32 %v3893, %v3957
        %3960 = vst.msk [vmem:[%s2560] sm:$0xff] %vm1148, %v3959
        %p3961 = scmp.eq.s32.totalorder %s42, 1
        // Predicated region
        $region117: #{t5_decoder_forward.1} parent=103 // pred_check
          %p3962 = pneg %p3961
        $region118: #{t5_decoder_forward.1} parent=103 // pred_check_branch
          %3964 = sbr.rel (%p3962) target = $region120
        $region119: #{t5_decoder_forward.1} parent=103 // pred_region
          %v3965 = vld [vmem:[%s18] sm:$0x1]
          %v3966 = vld [vmem:[%s19] sm:$0xff]
          %v3967 = vld [vmem:[%s19 + $0x8] sm:$0xff]
          %v3968 = vld [vmem:[%s19 + $0x10] sm:$0xff]
          %v3969 = vld [vmem:[%s19 + $0x18] sm:$0xff]
          %v3970 = vld [vmem:[%s20] sm:$0x1]
          %v3971 = vld [vmem:[#allocation2] sm:$0xff]
          %v3972 = vmul.f32 %v3971, %v3971
          %v3973 = vsel %vm1148, %v3972, 0.0
          %3974 = vadd.xlane.f32.xlu0 %v3973
          %v3975 = vpop.xlane.xlu0 %3974
          %v3976 = vmul.f32 %v3975, %v1158
          %v3977 = vadd.f32 %v3976, 1e-06
          %v3978 = vrsqrt.pop %v3977
          %v3979 = vmul.f32 %v3978, %v3977
          %v3980 = vmul.f32 %v3979, %v3978
          %v3981 = vmul.f32 0.5, %v3980
          %v3982 = vsub.f32 1.5, %v3981
          %v3983 = vmul.f32 %v3978, %v3982
          %vm3984 = vweird.f32 %v3977
          %vm3985 = vweird.f32 %v3978
          %vm3986 = vmor %vm3984, %vm3985
          %v3987 = vsel %vm3986, %v3978, %v3983
          %v3988 = vmul.f32 %v3971, %v3987
          %v3990 = vperm.slane %v3965, 0
          %v3992 = vmul.f32 %v3988, %v3990
          %v3994 = vperm.slane %v3970, 0
          %v3997 = vsel %vm1148, %v3992, 0
          %3999 = vmatpush.msra.mxu0 0.0
          %4000 = vmatpush.msra.mxu0 0.0
          %4001 = vmatpush.msra.mxu0 0.0
          %4002 = vmatpush.msra.mxu0 0.0
          %4003 = vmatpush.msra.mxu0 0.0
          %4004 = vmatpush.msra.mxu0 0.0
          %4005 = vmatpush.msra.mxu0 0.0
          %4006 = vmatpush.msra.mxu0 0.0
          %4007 = vmatpush.msra.mxu0 0.0
          %4008 = vmatpush.msra.mxu0 0.0
          %4009 = vmatpush.msra.mxu0 0.0
          %4010 = vmatpush.msra.mxu0 0.0
          %4011 = vmatpush.msra.mxu0 %v3969
          %4012 = vmatpush.msra.mxu0 %v3968
          %4013 = vmatpush.msra.mxu0 %v3967
          %4014 = vmatpush.msra.mxu0 %v3966
          %4015 = vmatmul.f32.gmra.mxu0 %v3997
          %v4016 = vpop.f32.mrf.mxu0
          %v4017 = vadd.f32 %v3994, %v4016
          %4018 = vdwg.mxu0
          %4019 = vst [vmem:[#allocation8] sm:$0xff] %v4017
          %v4020 = vld [vmem:[%s2560] sm:$0xff]
          %v4021 = vmul.f32 %v4020, %v4020
          %v4022 = vsel %vm1148, %v4021, 0.0
          %4023 = vadd.xlane.f32.xlu0 %v4022
          %v4024 = vpop.xlane.xlu0 %4023
          %v4025 = vmul.f32 %v4024, %v1158
          %v4026 = vadd.f32 %v4025, 1e-06
          %v4027 = vrsqrt.pop %v4026
          %v4028 = vmul.f32 %v4027, %v4026
          %v4029 = vmul.f32 %v4028, %v4027
          %v4030 = vmul.f32 0.5, %v4029
          %v4031 = vsub.f32 1.5, %v4030
          %v4032 = vmul.f32 %v4027, %v4031
          %vm4033 = vweird.f32 %v4026
          %vm4034 = vweird.f32 %v4027
          %vm4035 = vmor %vm4033, %vm4034
          %v4036 = vsel %vm4035, %v4027, %v4032
          %v4037 = vmul.f32 %v4020, %v4036
          %v4038 = vmul.f32 %v4037, %v3990
          %v4040 = vsel %vm1148, %v4038, 0
          %4042 = vmatpush.msra.mxu0 0.0
          %4043 = vmatpush.msra.mxu0 0.0
          %4044 = vmatpush.msra.mxu0 0.0
          %4045 = vmatpush.msra.mxu0 0.0
          %4046 = vmatpush.msra.mxu0 0.0
          %4047 = vmatpush.msra.mxu0 0.0
          %4048 = vmatpush.msra.mxu0 0.0
          %4049 = vmatpush.msra.mxu0 0.0
          %4050 = vmatpush.msra.mxu0 0.0
          %4051 = vmatpush.msra.mxu0 0.0
          %4052 = vmatpush.msra.mxu0 0.0
          %4053 = vmatpush.msra.mxu0 0.0
          %4054 = vmatpush.msra.mxu0 %v3969
          %4055 = vmatpush.msra.mxu0 %v3968
          %4056 = vmatpush.msra.mxu0 %v3967
          %4057 = vmatpush.msra.mxu0 %v3966
          %4058 = vmatmul.f32.gmra.mxu0 %v4040
          %v4059 = vpop.f32.mrf.mxu0
          %v4060 = vadd.f32 %v3994, %v4059
          %4061 = vdwg.mxu0
          %s4062 = scalar_lea.vmem [#allocation8], 8
          %4063 = vst [vmem:[%s4062] sm:$0xff] %v4060
        $region120: #{t5_decoder_forward.1} parent=103 // pred_fallthru
          _
        %s4064 = smul.u32 2, %s42
        %p4065 = scmp.lt.s32.totalorder %s4064, 3
        %s4066 = scalar_select %p4065, %s4064, 3
        %s4067 = smul.addr %s4066, 4
        %s4068 = smul.addr %s4067, 8
        %s4069 = scalar_lea.vmem %s22, %s4068
        %s4070 = smul.u32 2, %s42
        %p4071 = scmp.lt.s32.totalorder %s4070, 3
        %s4072 = scalar_select %p4071, %s4070, 3
        %s4073 = smul.addr %s4072, 4
        %s4074 = smul.addr %s4073, 8
        %s4075 = scalar_lea.vmem %s23, %s4074
        // Predicated region
        $region121: #{t5_decoder_forward.1} parent=103 // pred_check
          %p4076 = pneg %p566
        $region122: #{t5_decoder_forward.1} parent=103 // pred_check_branch
          %4078 = sbr.rel (%p4076) target = $region124
        $region123: #{t5_decoder_forward.1} parent=103 // pred_region
          %4080 = vsyncadd [#allocation5], 0
          %s4081 = sshll.u32 [#allocation8], 4
          %s4082 = int_to_ptr.vmem [resolvable:$true] %s4081
          %s4083 = sshll.u32 %s21, 4
          %s4084 = int_to_ptr.hbm [resolvable:$true] %s4083
          %4089 = dma.vmem_to_hbm [thread:$0]  %s4082, 256, %s4084, [#allocation5], 128, 128, 8
        $region124: #{t5_decoder_forward.1} parent=103 // pred_fallthru
          _
        // Predicated region
        $region125: #{t5_decoder_forward.1} parent=103 // pred_check
          %p4090 = pneg %p592
        $region126: #{t5_decoder_forward.1} parent=103 // pred_check_branch
          %4092 = sbr.rel (%p4090) target = $region128
        $region127: #{t5_decoder_forward.1} parent=103 // pred_region
          %s4093 = smul.u32 2, %s42
        $region128: #{t5_decoder_forward.1} parent=103 // pred_fallthru
          _
        // Predicated region
        $region129: #{t5_decoder_forward.1} parent=103 // pred_check
          %p4094 = pneg %p618
        $region130: #{t5_decoder_forward.1} parent=103 // pred_check_branch
          %4096 = sbr.rel (%p4094) target = $region132
        $region131: #{t5_decoder_forward.1} parent=103 // pred_region
          %s4097 = smul.u32 2, %s42
        $region132: #{t5_decoder_forward.1} parent=103 // pred_fallthru
          _
        // Predicated region
        $region133: #{t5_decoder_forward.1} parent=103 // pred_check
          %p4098 = pneg %p566
        $region134: #{t5_decoder_forward.1} parent=103 // pred_check_branch
          %4100 = sbr.rel (%p4098) target = $region136
        $region135: #{t5_decoder_forward.1} parent=103 // pred_region
          %4102 = dma.done [#allocation5], 256
        $region136: #{t5_decoder_forward.1} parent=103 // pred_fallthru
          _
      $region104: #{t5_decoder_forward.1} parent=5 // pred_fallthru
        _
      %p4103 = scmp.le.s32.totalorder 2, %s37
      // Predicated region
      $region137: #{t5_decoder_forward.1} parent=5 // pred_check
        %p4104 = pneg %p4103
      $region138: #{t5_decoder_forward.1} parent=5 // pred_check_branch
        %4106 = sbr.rel (%p4104) target = $region140
      $region139: #{t5_decoder_forward.1} parent=5 // pred_region
        %s4107 = ssub.s32 %s37, 2
        // Predicated region
        $region141: #{t5_decoder_forward.1} parent=139 // pred_check
          %p4108 = pneg %p598
        $region142: #{t5_decoder_forward.1} parent=139 // pred_check_branch
          %4110 = sbr.rel (%p4108) target = $region144
        $region143: #{t5_decoder_forward.1} parent=139 // pred_region
          %s4111 = smul.u32 2, %s43
          %p4112 = scmp.lt.s32.totalorder %s4111, 3
          %s4113 = scalar_select %p4112, %s4111, 3
          %s4114 = smul.addr %s4113, 4
          %s4115 = smul.addr %s4114, 8
          %s4116 = scalar_lea.vmem %s22, %s4115
        $region144: #{t5_decoder_forward.1} parent=139 // pred_fallthru
          _
        // Predicated region
        $region145: #{t5_decoder_forward.1} parent=139 // pred_check
          %p4117 = pneg %p624
        $region146: #{t5_decoder_forward.1} parent=139 // pred_check_branch
          %4119 = sbr.rel (%p4117) target = $region148
        $region147: #{t5_decoder_forward.1} parent=139 // pred_region
          %s4120 = smul.u32 2, %s43
          %p4121 = scmp.lt.s32.totalorder %s4120, 3
          %s4122 = scalar_select %p4121, %s4120, 3
          %s4123 = smul.addr %s4122, 4
          %s4124 = smul.addr %s4123, 8
          %s4125 = scalar_lea.vmem %s23, %s4124
        $region148: #{t5_decoder_forward.1} parent=139 // pred_fallthru
          _
      $region140: #{t5_decoder_forward.1} parent=5 // pred_fallthru
        _
    $region6: #{t5_decoder_forward.1} parent=1 // loop_footer
      %s41 = sadd.s32 1, %s37
    $region7: #{t5_decoder_forward.1} parent=1 // loop_footer_branch
      %36 = sbr.rel target = $region3
    $region8: #{t5_decoder_forward.1} parent=1 // loop_exit
      _
    %4126 = vsyncpa [#allocation4], 1
    %s4127 = scalar_lea.sflag [#allocation4], 1
    %4128 = vsyncpa %s4127, 1
    %4129 = vsyncpa [#allocation7], 1
    %s4130 = scalar_lea.sflag [#allocation7], 1
    %4131 = vsyncpa %s4130, 1
    %4132 = vsyncpa [#allocation5], 1
    %s4133 = scalar_lea.sflag [#allocation5], 1
    %4134 = vsyncpa %s4133, 1

</llo_original>
